<compile_context>
chip_gen: v6e
topology: v6e:2x2x1
jax: 0.10.0
libtpu: 0.0.40
codegen_flags: <defaults>
</compile_context>

<pallas_src>
import jax
import jax.numpy as jnp
from jax import lax
from jax.experimental import pallas as pl
from jax.experimental.pallas import tpu as pltpu


# Encoder architecture from the PyTorch module: (Cin, Cout) per layer.
LAYERS = ((3, 32), (32, 64), (64, 128), (128, 256))
KSIZE = 4
STRIDE = 2

TM_MAX = 512     # M tile (rows of the patch matrix), multiple of 8
TK_MAX = 512     # K tile (reduction), multiple of 128


def _round_up(x, m):
    return (x + m - 1) // m * m


# ----------------------------------------------------------------------------
# Pallas kernel: K-tiled GEMM with f32 accumulator, fused bias + ReLU epilogue
# ----------------------------------------------------------------------------
def conv_gemm_bias_relu_kernel(p_ref, w_ref, b_ref, o_ref, acc_ref):
    # p_ref: [TM, TK] bf16   w_ref: [TK, N] bf16   b_ref: [1, N] f32
    # o_ref: [TM, N]         acc_ref: [TM, N] f32 scratch
    k = pl.program_id(1)

    @pl.when(k == 0)
    def _init():
        acc_ref[...] = jnp.zeros_like(acc_ref)

    acc_ref[...] += jnp.dot(p_ref[...], w_ref[...],
                            preferred_element_type=jnp.float32)

    @pl.when(k == pl.num_programs(1) - 1)
    def _finalize():
        o_ref[...] = jnp.maximum(acc_ref[...] + b_ref[...],
                                 0.0).astype(o_ref.dtype)


def gemm_bias_relu(patches, w2d, b2d, out_dtype):
    """relu(patches @ w2d + b2d) via a tiled, pipelined Pallas GEMM."""
    M, K = patches.shape
    Kw, N = w2d.shape
    assert K == Kw

    tm = min(TM_MAX, _round_up(M, 8))
    tk = K if K <= TK_MAX else TK_MAX
    assert K % tk == 0
    mp = _round_up(M, tm)
    if mp != M:
        patches = jnp.pad(patches, ((0, mp - M), (0, 0)))

    grid = (mp // tm, K // tk)
    cost = pl.CostEstimate(
        flops=2 * mp * K * N,
        transcendentals=0,
        bytes_accessed=(mp * K + K * N) * 2 + (N + mp * N) * 4)

    out = pl.pallas_call(
        conv_gemm_bias_relu_kernel,
        out_shape=jax.ShapeDtypeStruct((mp, N), out_dtype),
        grid_spec=pltpu.PrefetchScalarGridSpec(
            num_scalar_prefetch=0,
            grid=grid,
            in_specs=[
                pl.BlockSpec((tm, tk), lambda i, k: (i, k)),   # patch tile
                pl.BlockSpec((tk, N), lambda i, k: (k, 0)),    # weight (resident over i)
                pl.BlockSpec((1, N), lambda i, k: (0, 0)),     # bias   (resident)
            ],
            out_specs=pl.BlockSpec((tm, N), lambda i, k: (i, 0)),
            scratch_shapes=[pltpu.VMEM((tm, N), jnp.float32)]),
        compiler_params=pltpu.CompilerParams(
            dimension_semantics=("parallel", "arbitrary"),
            vmem_limit_bytes=32 * 1024 * 1024),
        cost_estimate=cost,
    )(patches, w2d, b2d)

    if mp != M:
        out = out[:M]
    return out


# ----------------------------------------------------------------------------
# im2col patch extraction (XLA; see TODO above) + per-layer wrapper
# ----------------------------------------------------------------------------
def _extract_patches(x):
    """x: NHWC [B,H,W,C] -> (patches [B*Ho*Wo, K*K*C] in (kh,kw,c) order, Ho, Wo)."""
    B, H, W, C = x.shape
    Ho = (H - KSIZE) // STRIDE + 1
    Wo = (W - KSIZE) // STRIDE + 1
    cols = []
    for kh in range(KSIZE):
        for kw in range(KSIZE):
            cols.append(
                x[:, kh:kh + STRIDE * Ho:STRIDE, kw:kw + STRIDE * Wo:STRIDE, :])
    patches = jnp.concatenate(cols, axis=-1)            # [B, Ho, Wo, K*K*C]
    return patches.reshape(B * Ho * Wo, KSIZE * KSIZE * C), Ho, Wo


def conv2d_relu_pallas(x, w2d, b2d, out_dtype):
    """Valid-padded stride-2 Conv2d + ReLU on NHWC input, via one Pallas GEMM."""
    B = x.shape[0]
    cout = w2d.shape[1]
    patches, ho, wo = _extract_patches(x)                # [M, K*K*Cin] (bf16)
    out = gemm_bias_relu(patches, w2d, b2d, out_dtype)   # [M, Cout]
    return out.reshape(B, ho, wo, cout)


# ----------------------------------------------------------------------------
# Parameter handling
# ----------------------------------------------------------------------------
def init_params(key):
    """HWIO conv weights + biases, PyTorch-style U(-1/sqrt(fan_in), +)."""
    params = []
    for cin, cout in LAYERS:
        k_w, k_b, key = jax.random.split(key, 3)
        bound = 1.0 / float(cin * KSIZE * KSIZE) ** 0.5
        w = jax.random.uniform(k_w, (KSIZE, KSIZE, cin, cout), jnp.float32,
                               -bound, bound)
        b = jax.random.uniform(k_b, (cout,), jnp.float32, -bound, bound)
        params.append((w, b))
    return params


def prepare_gemm_params(params):
    """One-time prep: bf16 GEMM-ready [K*K*Cin, Cout] weights, f32 [1, Cout] biases."""
    return [(w.reshape(-1, w.shape[-1]).astype(jnp.bfloat16), b.reshape(1, -1))
            for (w, b) in params]


# ----------------------------------------------------------------------------
# Forward pass (mirrors EncoderModel.forward)
# ----------------------------------------------------------------------------
def encoder_forward(obs_nchw, gemm_params):
    # NCHW (torch layout) -> NHWC so channels land on the lane axis; bf16 feed.
    x = jnp.transpose(obs_nchw, (0, 2, 3, 1)).astype(jnp.bfloat16)
    n = len(gemm_params)
    for idx, (w2d, b2d) in enumerate(gemm_params):
        out_dtype = jnp.float32 if idx == n - 1 else jnp.bfloat16
        x = conv2d_relu_pallas(x, w2d, b2d, out_dtype)
    # einops 'b c h w -> b (c h w)': flatten in NCHW order.
    b, h, w, c = x.shape
    return jnp.transpose(x, (0, 3, 1, 2)).reshape(b, c * h * w)


def encoder_reference(obs_nchw, params):
    """Pure-JAX reference (lax.conv) with the same bf16-in / f32-accumulate math."""
    x = jnp.transpose(obs_nchw, (0, 2, 3, 1)).astype(jnp.bfloat16).astype(jnp.float32)
    n = len(params)
    for idx, (w, bias) in enumerate(params):
        w_q = w.astype(jnp.bfloat16).astype(jnp.float32)
        x = lax.conv_general_dilated(
            x, w_q, window_strides=(STRIDE, STRIDE), padding="VALID",
            dimension_numbers=("NHWC", "HWIO", "NHWC"),
            precision=lax.Precision.HIGHEST)
        x = jnp.maximum(x + bias, 0.0)
        if idx != n - 1:
            x = x.astype(jnp.bfloat16).astype(jnp.float32)
    b, h, w_, c = x.shape
    return jnp.transpose(x, (0, 3, 1, 2)).reshape(b, c * h * w_)


if __name__ == "__main__":
    key = jax.random.PRNGKey(0)
    k_obs, k_params = jax.random.split(key)

    params = init_params(k_params)
    gemm_params = prepare_gemm_params(params)

    # Small shapes consistent with the module: 3-channel 64x64 image, batch 2.
    # (64x64 -> 31 -> 14 -> 6 -> 2 spatial; final embedding 256*2*2 = 1024.)
    batch, height, width = 2, 64, 64
    obs = jax.random.normal(k_obs, (batch, 3, height, width), jnp.float32)

    fwd = jax.jit(encoder_forward)
    out = fwd(obs, gemm_params)
    out = jax.block_until_ready(out)

    ref = encoder_reference(obs, params)
    assert out.shape == (batch, 256 * 2 * 2), out.shape
    assert jnp.allclose(out, ref, atol=5e-3, rtol=5e-3), float(
        jnp.max(jnp.abs(out - ref)))

    print("KERNEL_OK")
</pallas_src>

<mosaic_0001>
module attributes {stable_mosaic.version = 11 : i64} {
  func.func @conv_gemm_bias_relu_kernel(%arg0: i32, %arg1: i32, %arg2: memref<512x48xbf16, #tpu.memory_space<vmem>>, %arg3: memref<48x32xbf16, #tpu.memory_space<vmem>>, %arg4: memref<1x32xf32, #tpu.memory_space<vmem>>, %arg5: memref<512x32xbf16, #tpu.memory_space<vmem>>, %arg6: memref<512x32xf32, #tpu.memory_space<vmem>>) attributes {dimension_semantics = [#tpu.dimension_semantics<parallel>, #tpu.dimension_semantics<arbitrary>], iteration_bounds = array<i64: 4, 1>, scalar_prefetch = 0 : i64, scratch_operands = 1 : i64, tpu.core_type = #tpu.core_type<tc>, window_params = [{transform_indices = @transform_0, window_bounds = array<i64: 512, 48>}, {transform_indices = @transform_1, window_bounds = array<i64: 48, 32>}, {pipeline_mode = #tpu.pipeline_mode<synchronous>, transform_indices = @transform_2, window_bounds = array<i64: 1, 32>}, {transform_indices = @transform_3, window_bounds = array<i64: 512, 32>}]} {
    %c0_i32 = arith.constant 0 : i32
    %0 = arith.cmpi eq, %arg1, %c0_i32 : i32
    %1 = arith.extui %0 : i1 to i32
    %c0_i32_0 = arith.constant 0 : i32
    %2 = arith.cmpi ne, %1, %c0_i32_0 : i32
    scf.if %2 {
      %cst_10 = arith.constant 0.000000e+00 : f32
      %12 = vector.broadcast %cst_10 : f32 to vector<512x32xf32>
      %c0_11 = arith.constant 0 : index
      %c0_12 = arith.constant 0 : index
      %13 = vector.load %arg6[%c0_11, %c0_12] : memref<512x32xf32, #tpu.memory_space<vmem>>, vector<512x32xf32>
      tpu.vector_store %arg6[%c0_11, %c0_12], %12 {strides = array<i32>} : memref<512x32xf32, #tpu.memory_space<vmem>>, vector<512x32xf32>,
    } else {
    }
    %c0 = arith.constant 0 : index
    %c0_1 = arith.constant 0 : index
    %3 = vector.load %arg6[%c0, %c0_1] : memref<512x32xf32, #tpu.memory_space<vmem>>, vector<512x32xf32>
    %c0_2 = arith.constant 0 : index
    %c0_3 = arith.constant 0 : index
    %4 = vector.load %arg2[%c0_2, %c0_3] : memref<512x48xbf16, #tpu.memory_space<vmem>>, vector<512x48xbf16>
    %c0_4 = arith.constant 0 : index
    %c0_5 = arith.constant 0 : index
    %5 = vector.load %arg3[%c0_4, %c0_5] : memref<48x32xbf16, #tpu.memory_space<vmem>>, vector<48x32xbf16>
    %cst = arith.constant dense<0.000000e+00> : vector<512x32xf32>
    %6 = tpu.matmul %4, %5, %cst {dimension_numbers = #tpu.dot_dimension_numbers<[1], [0], [0], [1], [0, 0, 1, 1], [], []>} : vector<512x48xbf16>, vector<48x32xbf16>, vector<512x32xf32> -> vector<512x32xf32>
    %7 = arith.addf %3, %6 : vector<512x32xf32>
    %c0_6 = arith.constant 0 : index
    %c0_7 = arith.constant 0 : index
    %8 = vector.load %arg6[%c0_6, %c0_7] : memref<512x32xf32, #tpu.memory_space<vmem>>, vector<512x32xf32>
    tpu.vector_store %arg6[%c0_6, %c0_7], %7 {strides = array<i32>} : memref<512x32xf32, #tpu.memory_space<vmem>>, vector<512x32xf32>,
    %c0_i32_8 = arith.constant 0 : i32
    %9 = arith.cmpi eq, %arg1, %c0_i32_8 : i32
    %10 = arith.extui %9 : i1 to i32
    %c0_i32_9 = arith.constant 0 : i32
    %11 = arith.cmpi ne, %10, %c0_i32_9 : i32
    scf.if %11 {
      %c0_10 = arith.constant 0 : index
      %c0_11 = arith.constant 0 : index
      %12 = vector.load %arg6[%c0_10, %c0_11] : memref<512x32xf32, #tpu.memory_space<vmem>>, vector<512x32xf32>
      %c0_12 = arith.constant 0 : index
      %c0_13 = arith.constant 0 : index
      %13 = vector.load %arg4[%c0_12, %c0_13] : memref<1x32xf32, #tpu.memory_space<vmem>>, vector<1x32xf32>
      %14 = vector.broadcast %13 : vector<1x32xf32> to vector<512x32xf32>
      %15 = arith.addf %12, %14 : vector<512x32xf32>
      %cst_14 = arith.constant 0.000000e+00 : f32
      %16 = vector.broadcast %cst_14 : f32 to vector<512x32xf32>
      %17 = arith.maximumf %15, %16 : vector<512x32xf32>
      %18 = arith.truncf %17 : vector<512x32xf32> to vector<512x32xbf16>
      %c0_15 = arith.constant 0 : index
      %c0_16 = arith.constant 0 : index
      %19 = vector.load %arg5[%c0_15, %c0_16] : memref<512x32xbf16, #tpu.memory_space<vmem>>, vector<512x32xbf16>
      tpu.vector_store %arg5[%c0_15, %c0_16], %18 {strides = array<i32>} : memref<512x32xbf16, #tpu.memory_space<vmem>>, vector<512x32xbf16>,
    } else {
    }
    return
  }
  func.func @transform_0(%arg0: i32, %arg1: i32) -> (i32, i32) {
    %c0_i32 = arith.constant 0 : i32
    return %arg0, %arg1 : i32, i32
  }
  func.func @transform_1(%arg0: i32, %arg1: i32) -> (i32, i32) {
    %c0_i32 = arith.constant 0 : i32
    %c0_i32_0 = arith.constant 0 : i32
    return %arg1, %c0_i32 : i32, i32
  }
  func.func @transform_2(%arg0: i32, %arg1: i32) -> (i32, i32) {
    %c0_i32 = arith.constant 0 : i32
    %c0_i32_0 = arith.constant 0 : i32
    %c0_i32_1 = arith.constant 0 : i32
    return %c0_i32, %c0_i32_0 : i32, i32
  }
  func.func @transform_3(%arg0: i32, %arg1: i32) -> (i32, i32) {
    %c0_i32 = arith.constant 0 : i32
    %c0_i32_0 = arith.constant 0 : i32
    return %arg0, %c0_i32 : i32, i32
  }
}

module attributes {stable_mosaic.version = 11 : i64} {
  func.func @conv_gemm_bias_relu_kernel(%arg0: i32, %arg1: i32, %arg2: memref<392x512xbf16, #tpu.memory_space<vmem>>, %arg3: memref<512x64xbf16, #tpu.memory_space<vmem>>, %arg4: memref<1x64xf32, #tpu.memory_space<vmem>>, %arg5: memref<392x64xbf16, #tpu.memory_space<vmem>>, %arg6: memref<392x64xf32, #tpu.memory_space<vmem>>) attributes {dimension_semantics = [#tpu.dimension_semantics<parallel>, #tpu.dimension_semantics<arbitrary>], iteration_bounds = array<i64: 1, 1>, scalar_prefetch = 0 : i64, scratch_operands = 1 : i64, tpu.core_type = #tpu.core_type<tc>, window_params = [{transform_indices = @transform_0, window_bounds = array<i64: 392, 512>}, {transform_indices = @transform_1, window_bounds = array<i64: 512, 64>}, {pipeline_mode = #tpu.pipeline_mode<synchronous>, transform_indices = @transform_2, window_bounds = array<i64: 1, 64>}, {transform_indices = @transform_3, window_bounds = array<i64: 392, 64>}]} {
    %c0_i32 = arith.constant 0 : i32
    %0 = arith.cmpi eq, %arg1, %c0_i32 : i32
    %1 = arith.extui %0 : i1 to i32
    %c0_i32_0 = arith.constant 0 : i32
    %2 = arith.cmpi ne, %1, %c0_i32_0 : i32
    scf.if %2 {
      %cst_10 = arith.constant 0.000000e+00 : f32
      %12 = vector.broadcast %cst_10 : f32 to vector<392x64xf32>
      %c0_11 = arith.constant 0 : index
      %c0_12 = arith.constant 0 : index
      %13 = vector.load %arg6[%c0_11, %c0_12] : memref<392x64xf32, #tpu.memory_space<vmem>>, vector<392x64xf32>
      tpu.vector_store %arg6[%c0_11, %c0_12], %12 {strides = array<i32>} : memref<392x64xf32, #tpu.memory_space<vmem>>, vector<392x64xf32>,
    } else {
    }
    %c0 = arith.constant 0 : index
    %c0_1 = arith.constant 0 : index
    %3 = vector.load %arg6[%c0, %c0_1] : memref<392x64xf32, #tpu.memory_space<vmem>>, vector<392x64xf32>
    %c0_2 = arith.constant 0 : index
    %c0_3 = arith.constant 0 : index
    %4 = vector.load %arg2[%c0_2, %c0_3] : memref<392x512xbf16, #tpu.memory_space<vmem>>, vector<392x512xbf16>
    %c0_4 = arith.constant 0 : index
    %c0_5 = arith.constant 0 : index
    %5 = vector.load %arg3[%c0_4, %c0_5] : memref<512x64xbf16, #tpu.memory_space<vmem>>, vector<512x64xbf16>
    %cst = arith.constant dense<0.000000e+00> : vector<392x64xf32>
    %6 = tpu.matmul %4, %5, %cst {dimension_numbers = #tpu.dot_dimension_numbers<[1], [0], [0], [1], [0, 0, 1, 1], [], []>} : vector<392x512xbf16>, vector<512x64xbf16>, vector<392x64xf32> -> vector<392x64xf32>
    %7 = arith.addf %3, %6 : vector<392x64xf32>
    %c0_6 = arith.constant 0 : index
    %c0_7 = arith.constant 0 : index
    %8 = vector.load %arg6[%c0_6, %c0_7] : memref<392x64xf32, #tpu.memory_space<vmem>>, vector<392x64xf32>
    tpu.vector_store %arg6[%c0_6, %c0_7], %7 {strides = array<i32>} : memref<392x64xf32, #tpu.memory_space<vmem>>, vector<392x64xf32>,
    %c0_i32_8 = arith.constant 0 : i32
    %9 = arith.cmpi eq, %arg1, %c0_i32_8 : i32
    %10 = arith.extui %9 : i1 to i32
    %c0_i32_9 = arith.constant 0 : i32
    %11 = arith.cmpi ne, %10, %c0_i32_9 : i32
    scf.if %11 {
      %c0_10 = arith.constant 0 : index
      %c0_11 = arith.constant 0 : index
      %12 = vector.load %arg6[%c0_10, %c0_11] : memref<392x64xf32, #tpu.memory_space<vmem>>, vector<392x64xf32>
      %c0_12 = arith.constant 0 : index
      %c0_13 = arith.constant 0 : index
      %13 = vector.load %arg4[%c0_12, %c0_13] : memref<1x64xf32, #tpu.memory_space<vmem>>, vector<1x64xf32>
      %14 = vector.broadcast %13 : vector<1x64xf32> to vector<392x64xf32>
      %15 = arith.addf %12, %14 : vector<392x64xf32>
      %cst_14 = arith.constant 0.000000e+00 : f32
      %16 = vector.broadcast %cst_14 : f32 to vector<392x64xf32>
      %17 = arith.maximumf %15, %16 : vector<392x64xf32>
      %18 = arith.truncf %17 : vector<392x64xf32> to vector<392x64xbf16>
      %c0_15 = arith.constant 0 : index
      %c0_16 = arith.constant 0 : index
      %19 = vector.load %arg5[%c0_15, %c0_16] : memref<392x64xbf16, #tpu.memory_space<vmem>>, vector<392x64xbf16>
      tpu.vector_store %arg5[%c0_15, %c0_16], %18 {strides = array<i32>} : memref<392x64xbf16, #tpu.memory_space<vmem>>, vector<392x64xbf16>,
    } else {
    }
    return
  }
  func.func @transform_0(%arg0: i32, %arg1: i32) -> (i32, i32) {
    %c0_i32 = arith.constant 0 : i32
    return %arg0, %arg1 : i32, i32
  }
  func.func @transform_1(%arg0: i32, %arg1: i32) -> (i32, i32) {
    %c0_i32 = arith.constant 0 : i32
    %c0_i32_0 = arith.constant 0 : i32
    return %arg1, %c0_i32 : i32, i32
  }
  func.func @transform_2(%arg0: i32, %arg1: i32) -> (i32, i32) {
    %c0_i32 = arith.constant 0 : i32
    %c0_i32_0 = arith.constant 0 : i32
    %c0_i32_1 = arith.constant 0 : i32
    return %c0_i32, %c0_i32_0 : i32, i32
  }
  func.func @transform_3(%arg0: i32, %arg1: i32) -> (i32, i32) {
    %c0_i32 = arith.constant 0 : i32
    %c0_i32_0 = arith.constant 0 : i32
    return %arg0, %c0_i32 : i32, i32
  }
}

module attributes {stable_mosaic.version = 11 : i64} {
  func.func @conv_gemm_bias_relu_kernel(%arg0: i32, %arg1: i32, %arg2: memref<72x512xbf16, #tpu.memory_space<vmem>>, %arg3: memref<512x128xbf16, #tpu.memory_space<vmem>>, %arg4: memref<1x128xf32, #tpu.memory_space<vmem>>, %arg5: memref<72x128xbf16, #tpu.memory_space<vmem>>, %arg6: memref<72x128xf32, #tpu.memory_space<vmem>>) attributes {dimension_semantics = [#tpu.dimension_semantics<parallel>, #tpu.dimension_semantics<arbitrary>], iteration_bounds = array<i64: 1, 2>, scalar_prefetch = 0 : i64, scratch_operands = 1 : i64, tpu.core_type = #tpu.core_type<tc>, window_params = [{transform_indices = @transform_0, window_bounds = array<i64: 72, 512>}, {transform_indices = @transform_1, window_bounds = array<i64: 512, 128>}, {pipeline_mode = #tpu.pipeline_mode<synchronous>, transform_indices = @transform_2, window_bounds = array<i64: 1, 128>}, {transform_indices = @transform_3, window_bounds = array<i64: 72, 128>}]} {
    %c0_i32 = arith.constant 0 : i32
    %0 = arith.cmpi eq, %arg1, %c0_i32 : i32
    %1 = arith.extui %0 : i1 to i32
    %c0_i32_0 = arith.constant 0 : i32
    %2 = arith.cmpi ne, %1, %c0_i32_0 : i32
    scf.if %2 {
      %cst_9 = arith.constant 0.000000e+00 : f32
      %12 = vector.broadcast %cst_9 : f32 to vector<72x128xf32>
      %c0_10 = arith.constant 0 : index
      %c0_11 = arith.constant 0 : index
      %13 = vector.load %arg6[%c0_10, %c0_11] : memref<72x128xf32, #tpu.memory_space<vmem>>, vector<72x128xf32>
      tpu.vector_store %arg6[%c0_10, %c0_11], %12 {strides = array<i32>} : memref<72x128xf32, #tpu.memory_space<vmem>>, vector<72x128xf32>,
    } else {
    }
    %c0 = arith.constant 0 : index
    %c0_1 = arith.constant 0 : index
    %3 = vector.load %arg6[%c0, %c0_1] : memref<72x128xf32, #tpu.memory_space<vmem>>, vector<72x128xf32>
    %c0_2 = arith.constant 0 : index
    %c0_3 = arith.constant 0 : index
    %4 = vector.load %arg2[%c0_2, %c0_3] : memref<72x512xbf16, #tpu.memory_space<vmem>>, vector<72x512xbf16>
    %c0_4 = arith.constant 0 : index
    %c0_5 = arith.constant 0 : index
    %5 = vector.load %arg3[%c0_4, %c0_5] : memref<512x128xbf16, #tpu.memory_space<vmem>>, vector<512x128xbf16>
    %cst = arith.constant dense<0.000000e+00> : vector<72x128xf32>
    %6 = tpu.matmul %4, %5, %cst {dimension_numbers = #tpu.dot_dimension_numbers<[1], [0], [0], [1], [0, 0, 1, 1], [], []>} : vector<72x512xbf16>, vector<512x128xbf16>, vector<72x128xf32> -> vector<72x128xf32>
    %7 = arith.addf %3, %6 : vector<72x128xf32>
    %c0_6 = arith.constant 0 : index
    %c0_7 = arith.constant 0 : index
    %8 = vector.load %arg6[%c0_6, %c0_7] : memref<72x128xf32, #tpu.memory_space<vmem>>, vector<72x128xf32>
    tpu.vector_store %arg6[%c0_6, %c0_7], %7 {strides = array<i32>} : memref<72x128xf32, #tpu.memory_space<vmem>>, vector<72x128xf32>,
    %c1_i32 = arith.constant 1 : i32
    %9 = arith.cmpi eq, %arg1, %c1_i32 : i32
    %10 = arith.extui %9 : i1 to i32
    %c0_i32_8 = arith.constant 0 : i32
    %11 = arith.cmpi ne, %10, %c0_i32_8 : i32
    scf.if %11 {
      %c0_9 = arith.constant 0 : index
      %c0_10 = arith.constant 0 : index
      %12 = vector.load %arg6[%c0_9, %c0_10] : memref<72x128xf32, #tpu.memory_space<vmem>>, vector<72x128xf32>
      %c0_11 = arith.constant 0 : index
      %c0_12 = arith.constant 0 : index
      %13 = vector.load %arg4[%c0_11, %c0_12] : memref<1x128xf32, #tpu.memory_space<vmem>>, vector<1x128xf32>
      %14 = vector.broadcast %13 : vector<1x128xf32> to vector<72x128xf32>
      %15 = arith.addf %12, %14 : vector<72x128xf32>
      %cst_13 = arith.constant 0.000000e+00 : f32
      %16 = vector.broadcast %cst_13 : f32 to vector<72x128xf32>
      %17 = arith.maximumf %15, %16 : vector<72x128xf32>
      %18 = arith.truncf %17 : vector<72x128xf32> to vector<72x128xbf16>
      %c0_14 = arith.constant 0 : index
      %c0_15 = arith.constant 0 : index
      %19 = vector.load %arg5[%c0_14, %c0_15] : memref<72x128xbf16, #tpu.memory_space<vmem>>, vector<72x128xbf16>
      tpu.vector_store %arg5[%c0_14, %c0_15], %18 {strides = array<i32>} : memref<72x128xbf16, #tpu.memory_space<vmem>>, vector<72x128xbf16>,
    } else {
    }
    return
  }
  func.func @transform_0(%arg0: i32, %arg1: i32) -> (i32, i32) {
    %c0_i32 = arith.constant 0 : i32
    return %arg0, %arg1 : i32, i32
  }
  func.func @transform_1(%arg0: i32, %arg1: i32) -> (i32, i32) {
    %c0_i32 = arith.constant 0 : i32
    %c0_i32_0 = arith.constant 0 : i32
    return %arg1, %c0_i32 : i32, i32
  }
  func.func @transform_2(%arg0: i32, %arg1: i32) -> (i32, i32) {
    %c0_i32 = arith.constant 0 : i32
    %c0_i32_0 = arith.constant 0 : i32
    %c0_i32_1 = arith.constant 0 : i32
    return %c0_i32, %c0_i32_0 : i32, i32
  }
  func.func @transform_3(%arg0: i32, %arg1: i32) -> (i32, i32) {
    %c0_i32 = arith.constant 0 : i32
    %c0_i32_0 = arith.constant 0 : i32
    return %arg0, %c0_i32 : i32, i32
  }
}

module attributes {stable_mosaic.version = 11 : i64} {
  func.func @conv_gemm_bias_relu_kernel(%arg0: i32, %arg1: i32, %arg2: memref<8x512xbf16, #tpu.memory_space<vmem>>, %arg3: memref<512x256xbf16, #tpu.memory_space<vmem>>, %arg4: memref<1x256xf32, #tpu.memory_space<vmem>>, %arg5: memref<8x256xf32, #tpu.memory_space<vmem>>, %arg6: memref<8x256xf32, #tpu.memory_space<vmem>>) attributes {dimension_semantics = [#tpu.dimension_semantics<parallel>, #tpu.dimension_semantics<arbitrary>], iteration_bounds = array<i64: 1, 4>, scalar_prefetch = 0 : i64, scratch_operands = 1 : i64, tpu.core_type = #tpu.core_type<tc>, window_params = [{transform_indices = @transform_0, window_bounds = array<i64: 8, 512>}, {transform_indices = @transform_1, window_bounds = array<i64: 512, 256>}, {pipeline_mode = #tpu.pipeline_mode<synchronous>, transform_indices = @transform_2, window_bounds = array<i64: 1, 256>}, {transform_indices = @transform_3, window_bounds = array<i64: 8, 256>}]} {
    %c0_i32 = arith.constant 0 : i32
    %0 = arith.cmpi eq, %arg1, %c0_i32 : i32
    %1 = arith.extui %0 : i1 to i32
    %c0_i32_0 = arith.constant 0 : i32
    %2 = arith.cmpi ne, %1, %c0_i32_0 : i32
    scf.if %2 {
      %cst_9 = arith.constant 0.000000e+00 : f32
      %12 = vector.broadcast %cst_9 : f32 to vector<8x256xf32>
      %c0_10 = arith.constant 0 : index
      %c0_11 = arith.constant 0 : index
      %13 = vector.load %arg6[%c0_10, %c0_11] : memref<8x256xf32, #tpu.memory_space<vmem>>, vector<8x256xf32>
      tpu.vector_store %arg6[%c0_10, %c0_11], %12 {strides = array<i32>} : memref<8x256xf32, #tpu.memory_space<vmem>>, vector<8x256xf32>,
    } else {
    }
    %c0 = arith.constant 0 : index
    %c0_1 = arith.constant 0 : index
    %3 = vector.load %arg6[%c0, %c0_1] : memref<8x256xf32, #tpu.memory_space<vmem>>, vector<8x256xf32>
    %c0_2 = arith.constant 0 : index
    %c0_3 = arith.constant 0 : index
    %4 = vector.load %arg2[%c0_2, %c0_3] : memref<8x512xbf16, #tpu.memory_space<vmem>>, vector<8x512xbf16>
    %c0_4 = arith.constant 0 : index
    %c0_5 = arith.constant 0 : index
    %5 = vector.load %arg3[%c0_4, %c0_5] : memref<512x256xbf16, #tpu.memory_space<vmem>>, vector<512x256xbf16>
    %cst = arith.constant dense<0.000000e+00> : vector<8x256xf32>
    %6 = tpu.matmul %4, %5, %cst {dimension_numbers = #tpu.dot_dimension_numbers<[1], [0], [0], [1], [0, 0, 1, 1], [], []>} : vector<8x512xbf16>, vector<512x256xbf16>, vector<8x256xf32> -> vector<8x256xf32>
    %7 = arith.addf %3, %6 : vector<8x256xf32>
    %c0_6 = arith.constant 0 : index
    %c0_7 = arith.constant 0 : index
    %8 = vector.load %arg6[%c0_6, %c0_7] : memref<8x256xf32, #tpu.memory_space<vmem>>, vector<8x256xf32>
    tpu.vector_store %arg6[%c0_6, %c0_7], %7 {strides = array<i32>} : memref<8x256xf32, #tpu.memory_space<vmem>>, vector<8x256xf32>,
    %c3_i32 = arith.constant 3 : i32
    %9 = arith.cmpi eq, %arg1, %c3_i32 : i32
    %10 = arith.extui %9 : i1 to i32
    %c0_i32_8 = arith.constant 0 : i32
    %11 = arith.cmpi ne, %10, %c0_i32_8 : i32
    scf.if %11 {
      %c0_9 = arith.constant 0 : index
      %c0_10 = arith.constant 0 : index
      %12 = vector.load %arg6[%c0_9, %c0_10] : memref<8x256xf32, #tpu.memory_space<vmem>>, vector<8x256xf32>
      %c0_11 = arith.constant 0 : index
      %c0_12 = arith.constant 0 : index
      %13 = vector.load %arg4[%c0_11, %c0_12] : memref<1x256xf32, #tpu.memory_space<vmem>>, vector<1x256xf32>
      %14 = vector.broadcast %13 : vector<1x256xf32> to vector<8x256xf32>
      %15 = arith.addf %12, %14 : vector<8x256xf32>
      %cst_13 = arith.constant 0.000000e+00 : f32
      %16 = vector.broadcast %cst_13 : f32 to vector<8x256xf32>
      %17 = arith.maximumf %15, %16 : vector<8x256xf32>
      %c0_14 = arith.constant 0 : index
      %c0_15 = arith.constant 0 : index
      %18 = vector.load %arg5[%c0_14, %c0_15] : memref<8x256xf32, #tpu.memory_space<vmem>>, vector<8x256xf32>
      tpu.vector_store %arg5[%c0_14, %c0_15], %17 {strides = array<i32>} : memref<8x256xf32, #tpu.memory_space<vmem>>, vector<8x256xf32>,
    } else {
    }
    return
  }
  func.func @transform_0(%arg0: i32, %arg1: i32) -> (i32, i32) {
    %c0_i32 = arith.constant 0 : i32
    return %arg0, %arg1 : i32, i32
  }
  func.func @transform_1(%arg0: i32, %arg1: i32) -> (i32, i32) {
    %c0_i32 = arith.constant 0 : i32
    %c0_i32_0 = arith.constant 0 : i32
    return %arg1, %c0_i32 : i32, i32
  }
  func.func @transform_2(%arg0: i32, %arg1: i32) -> (i32, i32) {
    %c0_i32 = arith.constant 0 : i32
    %c0_i32_0 = arith.constant 0 : i32
    %c0_i32_1 = arith.constant 0 : i32
    return %c0_i32, %c0_i32_0 : i32, i32
  }
  func.func @transform_3(%arg0: i32, %arg1: i32) -> (i32, i32) {
    %c0_i32 = arith.constant 0 : i32
    %c0_i32_0 = arith.constant 0 : i32
    return %arg0, %c0_i32 : i32, i32
  }
}

</mosaic_0001>

<llo_original>
// kernel: encoder_forward.4
$region0: #{encoder_forward.4}
  #allocation0 [shape = 'u32[]', space=smem, size = 0x4, offset = 0x4, fixed_abs, tag = 'smem constant byte address 0x4 - core index']
  #allocation1 [shape = 'u32[144,128]{1,0:T(1,128)}', space=vmem, size = 0x12000, scoped, tag = 'internal scratch']
  #allocation2 [shape = 'f32[512,32]{1,0:T(8,128)}', space=vmem, size = 0x40000, scoped, tag = 'scratch operand']
  %s0 = inlined_call_operand.vmem [shape: bf16[2048,48], index: 0, kind: input, shape index: {}]
  %s1 = inlined_call_operand.vmem [shape: bf16[48,32], index: 1, kind: input, shape index: {}]
  %s2 = inlined_call_operand.vmem [shape: f32[1,32], index: 2, kind: input, shape index: {}]
  %s3 = inlined_call_operand.vmem [shape: bf16[2048,32], index: 3, kind: output, shape index: {}]
  %s4 = sld [smem:[#allocation0]]
  $region53: #{encoder_forward.4} parent=0
    _
  %s6 = ssub.s32 1, %s4
  %s7 = scalar_select 0, %s6, %s4
  loop: start=0, step=1, limit=6
  $region2: #{encoder_forward.4} parent=0 // loop_pre_header
    _
  $region3: #{encoder_forward.4} parent=0 // loop_header
    %s9 = sphi 0, %s13
    %p10 = scmp.ge.s32.totalorder %s9, 6
    %s16 = sphi 0, %s28
    %s17 = sphi 0, %s24
    %s18 = sphi 0, %s16
    %s19 = sphi 0, %s17
    %s20 = sphi 0, %s18
    %s21 = sphi 0, %s19
    %s33 = sphi 0, %s35
    %s36 = sphi 0, %s33
    %s37 = sphi 0, %s36
    %s53 = sphi 0, %s37
    %s59 = sphi 0, %s61
    %s62 = sphi 0, %s59
    %s63 = sphi 0, %s62
    %s79 = sphi 0, %s63
    %s83 = sphi 0, %s83
    %s85 = sphi 0, %s83
    %s86 = sphi 0, %s85
    %s100 = sphi 0, %s86
    %s106 = sphi 0, %s108
    %s109 = sphi 0, %s106
    %s110 = sphi 0, %s109
    %s126 = sphi 0, %s110
  $region4: #{encoder_forward.4} parent=0 // loop_header_branch
    %12 = sbr.rel (%p10) target = $region8
  $region5: #{encoder_forward.4} parent=0 // loop_body
    %s14 = ssub.s32 %s9, 1
    %s15 = ssub.s32 %s9, 2
    %s22 = sadd.s32 1, %s17
    %p23 = scmp.ge.s32.totalorder %s22, 1
    %s24 = scalar_select %p23, 0, %s22
    %s25 = sadd.s32 1, %s16
    %s26 = scalar_select %p23, %s25, %s16
    %p27 = scmp.ge.s32.totalorder %s26, 4
    %s28 = scalar_select %p27, 0, %s26
    %s29 = ssub.s32 %s16, %s28
    %s30 = ssub.s32 %s17, %s24
    %s31 = sor.u32 %s29, %s30
    %p32 = scmp.eq.s32.totalorder %s31, 0
    %s34 = sadd.s32 %s33, 1
    %s35 = scalar_select %p32, %s33, %s34
    %p38 = pneg %p32
    %p39 = scmp.eq.s32.totalorder %s9, 3
    %p40 = por %p38, %p39
    %p41 = scmp.ne.s32.totalorder %s33, %s36
    %p42 = scmp.eq.s32.totalorder %s9, 0
    %p43 = por %p41, %p42
    %p44 = scmp.ne.s32.totalorder %s33, %s36
    %p45 = scmp.eq.s32.totalorder %s14, 3
    %p46 = por %p44, %p45
    %p47 = scmp.ne.s32.totalorder %s36, %s37
    %p48 = scmp.eq.s32.totalorder %s14, 0
    %p49 = por %p47, %p48
    %p50 = scmp.ne.s32.totalorder %s36, %s37
    %p51 = scmp.eq.s32.totalorder %s15, 3
    %p52 = por %p50, %p51
    %p54 = scmp.ne.s32.totalorder %s37, %s53
    %p55 = scmp.eq.s32.totalorder %s15, 0
    %p56 = por %p54, %p55
    %s57 = ssub.s32 %s17, %s24
    %p58 = scmp.eq.s32.totalorder %s57, 0
    %s60 = sadd.s32 %s59, 1
    %s61 = scalar_select %p58, %s59, %s60
    %p64 = pneg %p58
    %p65 = scmp.eq.s32.totalorder %s9, 3
    %p66 = por %p64, %p65
    %p67 = scmp.ne.s32.totalorder %s59, %s62
    %p68 = scmp.eq.s32.totalorder %s9, 0
    %p69 = por %p67, %p68
    %p70 = scmp.ne.s32.totalorder %s59, %s62
    %p71 = scmp.eq.s32.totalorder %s14, 3
    %p72 = por %p70, %p71
    %p73 = scmp.ne.s32.totalorder %s62, %s63
    %p74 = scmp.eq.s32.totalorder %s14, 0
    %p75 = por %p73, %p74
    %p76 = scmp.ne.s32.totalorder %s62, %s63
    %p77 = scmp.eq.s32.totalorder %s15, 3
    %p78 = por %p76, %p77
    %p80 = scmp.ne.s32.totalorder %s63, %s79
    %p81 = scmp.eq.s32.totalorder %s15, 0
    %p82 = por %p80, %p81
    %s84 = sadd.s32 %s83, 1
    %p87 = scmp.eq.s32.totalorder %s9, 3
    %p88 = scmp.ne.s32.totalorder %s83, %s85
    %p89 = scmp.eq.s32.totalorder %s9, 0
    %p90 = por %p88, %p89
    %p91 = scmp.ne.s32.totalorder %s83, %s85
    %p92 = scmp.eq.s32.totalorder %s14, 3
    %p93 = por %p91, %p92
    %p94 = scmp.ne.s32.totalorder %s85, %s86
    %p95 = scmp.eq.s32.totalorder %s14, 0
    %p96 = por %p94, %p95
    %p97 = scmp.ne.s32.totalorder %s85, %s86
    %p98 = scmp.eq.s32.totalorder %s15, 3
    %p99 = por %p97, %p98
    %p101 = scmp.ne.s32.totalorder %s86, %s100
    %p102 = scmp.eq.s32.totalorder %s15, 0
    %p103 = por %p101, %p102
    %s104 = ssub.s32 %s16, %s28
    %p105 = scmp.eq.s32.totalorder %s104, 0
    %s107 = sadd.s32 %s106, 1
    %s108 = scalar_select %p105, %s106, %s107
    %p111 = pneg %p105
    %p112 = scmp.eq.s32.totalorder %s9, 3
    %p113 = por %p111, %p112
    %p114 = scmp.ne.s32.totalorder %s106, %s109
    %p115 = scmp.eq.s32.totalorder %s9, 0
    %p116 = por %p114, %p115
    %p117 = scmp.ne.s32.totalorder %s106, %s109
    %p118 = scmp.eq.s32.totalorder %s14, 3
    %p119 = por %p117, %p118
    %p120 = scmp.ne.s32.totalorder %s109, %s110
    %p121 = scmp.eq.s32.totalorder %s14, 0
    %p122 = por %p120, %p121
    %p123 = scmp.ne.s32.totalorder %s109, %s110
    %p124 = scmp.eq.s32.totalorder %s15, 3
    %p125 = por %p123, %p124
    %p127 = scmp.ne.s32.totalorder %s110, %s126
    %p128 = scmp.eq.s32.totalorder %s15, 0
    %p129 = por %p127, %p128
    %p130 = scmp.le.s32.totalorder 1, %s9
    %p131 = scmp.lt.s32.totalorder %s9, 5
    %p132 = pnand %p130, %p131
    %p133 = pneg %p132
    // Predicated region
    $region9: #{encoder_forward.4} parent=5 // pred_check
      _
    $region10: #{encoder_forward.4} parent=5 // pred_check_branch
      %135 = sbr.rel (%p132) target = $region12
    $region11: #{encoder_forward.4} parent=5 // pred_region
      %s136 = ssub.s32 %s9, 1
      // Predicated region
      $region13: #{encoder_forward.4} parent=11 // pred_check
        %p137 = pneg %p75
      $region14: #{encoder_forward.4} parent=11 // pred_check_branch
        %139 = sbr.rel (%p137) target = $region16
      $region15: #{encoder_forward.4} parent=11 // pred_region
        %s140 = smul.u32 6, %s19
        %p141 = scmp.lt.s32.totalorder %s140, 5
        %s142 = scalar_select %p141, %s140, 5
        %s143 = smul.addr %s142, 4
        %s144 = scalar_lea.vmem %s1, %s143
        %s145 = smul.u32 6, %s19
      $region16: #{encoder_forward.4} parent=11 // pred_fallthru
        _
      // Predicated region
      $region17: #{encoder_forward.4} parent=11 // pred_check
        %p146 = pneg %p96
      $region18: #{encoder_forward.4} parent=11 // pred_check_branch
        %148 = sbr.rel (%p146) target = $region20
      $region19: #{encoder_forward.4} parent=11 // pred_region
        _
      $region20: #{encoder_forward.4} parent=11 // pred_fallthru
        _
    $region12: #{encoder_forward.4} parent=5 // pred_fallthru
      _
    %p149 = scmp.lt.s32.totalorder %s9, 4
    // Predicated region
    $region21: #{encoder_forward.4} parent=5 // pred_check
      %p150 = pneg %p149
    $region22: #{encoder_forward.4} parent=5 // pred_check_branch
      %152 = sbr.rel (%p150) target = $region24
    $region23: #{encoder_forward.4} parent=5 // pred_region
      // Predicated region
      $region25: #{encoder_forward.4} parent=23 // pred_check
        %p153 = pneg %p43
      $region26: #{encoder_forward.4} parent=23 // pred_check_branch
        %155 = sbr.rel (%p153) target = $region28
      $region27: #{encoder_forward.4} parent=23 // pred_region
        %s156 = smul.u32 64, %s16
        %p157 = scmp.lt.s32.totalorder %s156, 255
        %s158 = scalar_select %p157, %s156, 255
        %p159 = scmp.lt.s32.totalorder %s17, 0
        %s160 = scalar_select %p159, %s17, 0
        %s161 = sadd.s32 %s160, %s158
        %s162 = smul.addr %s161, 4
        %s163 = scalar_lea.vmem %s0, %s162
        %s164 = smul.u32 64, %s16
      $region28: #{encoder_forward.4} parent=23 // pred_fallthru
        _
    $region24: #{encoder_forward.4} parent=5 // pred_fallthru
      _
    %p165 = scmp.le.s32.totalorder 1, %s9
    %p166 = scmp.lt.s32.totalorder %s9, 5
    %p167 = pnand %p165, %p166
    %p168 = pneg %p167
    // Predicated region
    $region29: #{encoder_forward.4} parent=5 // pred_check
      _
    $region30: #{encoder_forward.4} parent=5 // pred_check_branch
      %170 = sbr.rel (%p167) target = $region32
    $region31: #{encoder_forward.4} parent=5 // pred_region
      %s171 = ssub.s32 %s9, 1
      %s172 = smul.u32 64, %s18
      %p173 = scmp.lt.s32.totalorder %s172, 255
      %s174 = scalar_select %p173, %s172, 255
      %p175 = scmp.lt.s32.totalorder %s19, 0
      %s176 = scalar_select %p175, %s19, 0
      %s177 = sadd.s32 %s176, %s174
      %s178 = smul.addr %s177, 4
      %s179 = scalar_lea.vmem %s0, %s178
      %p180 = pneg %p49
      %p181 = pneg %p46
      %s182 = smul.u32 6, %s19
      %p183 = scmp.lt.s32.totalorder %s182, 5
      %s184 = scalar_select %p183, %s182, 5
      %s185 = smul.addr %s184, 4
      %s186 = scalar_lea.vmem %s1, %s185
      %p187 = pneg %p75
      %p188 = pneg %p72
      %p189 = pneg %p96
      %p190 = pneg %p93
      %p191 = pneg %p122
      %p192 = pneg %p119
      %s193 = smul.u32 64, %s18
      %p194 = scmp.lt.s32.totalorder %s193, 255
      %s195 = scalar_select %p194, %s193, 255
      %s196 = smul.addr %s195, 4
      %s197 = scalar_lea.vmem %s3, %s196
      %s198 = smul.u32 64, %s18
      %p199 = scmp.lt.s32.totalorder %s198, 255
      %s200 = scalar_select %p199, %s198, 255
      %p201 = scmp.lt.s32.totalorder %s19, 0
      %s202 = scalar_select %p201, %s19, 0
      %s203 = sadd.s32 %s202, %s200
      %s204 = smul.addr %s203, 4
      %s205 = scalar_lea.vmem %s0, %s204
      %s206 = smul.u32 64, %s18
      %s207 = smul.u32 6, %s19
      %p208 = scmp.lt.s32.totalorder %s207, 5
      %s209 = scalar_select %p208, %s207, 5
      %s210 = smul.addr %s209, 4
      %s211 = scalar_lea.vmem %s1, %s210
      %s212 = smul.u32 6, %s19
      %s213 = smul.u32 64, %s18
      %p214 = scmp.lt.s32.totalorder %s213, 255
      %s215 = scalar_select %p214, %s213, 255
      %s216 = smul.addr %s215, 4
      %s217 = scalar_lea.vmem %s3, %s216
      %s218 = smul.u32 64, %s18
      %p220 = scmp.eq.s32.totalorder %s19, 0
      // Predicated region
      $region33: #{encoder_forward.4} parent=31 // pred_check
        %p221 = pneg %p220
      $region34: #{encoder_forward.4} parent=31 // pred_check_branch
        %223 = sbr.rel (%p221) target = $region36
      $region35: #{encoder_forward.4} parent=31 // pred_region
        %vm224 = vcmask 261120
        %225 = vst.msk [vmem:[#allocation2] sm:$0xff] %vm224, 0.0
        %226 = vst.msk [vmem:[#allocation2 + $0x8] sm:$0xff] %vm224, 0.0
        %227 = vst.msk [vmem:[#allocation2 + $0x10] sm:$0xff] %vm224, 0.0
        %228 = vst.msk [vmem:[#allocation2 + $0x18] sm:$0xff] %vm224, 0.0
        %229 = vst.msk [vmem:[#allocation2 + $0x20] sm:$0xff] %vm224, 0.0
        %230 = vst.msk [vmem:[#allocation2 + $0x28] sm:$0xff] %vm224, 0.0
        %231 = vst.msk [vmem:[#allocation2 + $0x30] sm:$0xff] %vm224, 0.0
        %232 = vst.msk [vmem:[#allocation2 + $0x38] sm:$0xff] %vm224, 0.0
        %233 = vst.msk [vmem:[#allocation2 + $0x40] sm:$0xff] %vm224, 0.0
        %234 = vst.msk [vmem:[#allocation2 + $0x48] sm:$0xff] %vm224, 0.0
        %235 = vst.msk [vmem:[#allocation2 + $0x50] sm:$0xff] %vm224, 0.0
        %236 = vst.msk [vmem:[#allocation2 + $0x58] sm:$0xff] %vm224, 0.0
        %237 = vst.msk [vmem:[#allocation2 + $0x60] sm:$0xff] %vm224, 0.0
        %238 = vst.msk [vmem:[#allocation2 + $0x68] sm:$0xff] %vm224, 0.0
        %239 = vst.msk [vmem:[#allocation2 + $0x70] sm:$0xff] %vm224, 0.0
        %240 = vst.msk [vmem:[#allocation2 + $0x78] sm:$0xff] %vm224, 0.0
        %241 = vst.msk [vmem:[#allocation2 + $0x80] sm:$0xff] %vm224, 0.0
        %242 = vst.msk [vmem:[#allocation2 + $0x88] sm:$0xff] %vm224, 0.0
        %243 = vst.msk [vmem:[#allocation2 + $0x90] sm:$0xff] %vm224, 0.0
        %244 = vst.msk [vmem:[#allocation2 + $0x98] sm:$0xff] %vm224, 0.0
        %245 = vst.msk [vmem:[#allocation2 + $0xa0] sm:$0xff] %vm224, 0.0
        %246 = vst.msk [vmem:[#allocation2 + $0xa8] sm:$0xff] %vm224, 0.0
        %247 = vst.msk [vmem:[#allocation2 + $0xb0] sm:$0xff] %vm224, 0.0
        %248 = vst.msk [vmem:[#allocation2 + $0xb8] sm:$0xff] %vm224, 0.0
        %249 = vst.msk [vmem:[#allocation2 + $0xc0] sm:$0xff] %vm224, 0.0
        %250 = vst.msk [vmem:[#allocation2 + $0xc8] sm:$0xff] %vm224, 0.0
        %251 = vst.msk [vmem:[#allocation2 + $0xd0] sm:$0xff] %vm224, 0.0
        %252 = vst.msk [vmem:[#allocation2 + $0xd8] sm:$0xff] %vm224, 0.0
        %253 = vst.msk [vmem:[#allocation2 + $0xe0] sm:$0xff] %vm224, 0.0
        %254 = vst.msk [vmem:[#allocation2 + $0xe8] sm:$0xff] %vm224, 0.0
        %255 = vst.msk [vmem:[#allocation2 + $0xf0] sm:$0xff] %vm224, 0.0
        %256 = vst.msk [vmem:[#allocation2 + $0xf8] sm:$0xff] %vm224, 0.0
        %257 = vst.msk [vmem:[#allocation2 + $0x100] sm:$0xff] %vm224, 0.0
        %258 = vst.msk [vmem:[#allocation2 + $0x108] sm:$0xff] %vm224, 0.0
        %259 = vst.msk [vmem:[#allocation2 + $0x110] sm:$0xff] %vm224, 0.0
        %260 = vst.msk [vmem:[#allocation2 + $0x118] sm:$0xff] %vm224, 0.0
        %261 = vst.msk [vmem:[#allocation2 + $0x120] sm:$0xff] %vm224, 0.0
        %262 = vst.msk [vmem:[#allocation2 + $0x128] sm:$0xff] %vm224, 0.0
        %263 = vst.msk [vmem:[#allocation2 + $0x130] sm:$0xff] %vm224, 0.0
        %264 = vst.msk [vmem:[#allocation2 + $0x138] sm:$0xff] %vm224, 0.0
        %265 = vst.msk [vmem:[#allocation2 + $0x140] sm:$0xff] %vm224, 0.0
        %266 = vst.msk [vmem:[#allocation2 + $0x148] sm:$0xff] %vm224, 0.0
        %267 = vst.msk [vmem:[#allocation2 + $0x150] sm:$0xff] %vm224, 0.0
        %268 = vst.msk [vmem:[#allocation2 + $0x158] sm:$0xff] %vm224, 0.0
        %269 = vst.msk [vmem:[#allocation2 + $0x160] sm:$0xff] %vm224, 0.0
        %270 = vst.msk [vmem:[#allocation2 + $0x168] sm:$0xff] %vm224, 0.0
        %271 = vst.msk [vmem:[#allocation2 + $0x170] sm:$0xff] %vm224, 0.0
        %272 = vst.msk [vmem:[#allocation2 + $0x178] sm:$0xff] %vm224, 0.0
        %273 = vst.msk [vmem:[#allocation2 + $0x180] sm:$0xff] %vm224, 0.0
        %274 = vst.msk [vmem:[#allocation2 + $0x188] sm:$0xff] %vm224, 0.0
        %275 = vst.msk [vmem:[#allocation2 + $0x190] sm:$0xff] %vm224, 0.0
        %276 = vst.msk [vmem:[#allocation2 + $0x198] sm:$0xff] %vm224, 0.0
        %277 = vst.msk [vmem:[#allocation2 + $0x1a0] sm:$0xff] %vm224, 0.0
        %278 = vst.msk [vmem:[#allocation2 + $0x1a8] sm:$0xff] %vm224, 0.0
        %279 = vst.msk [vmem:[#allocation2 + $0x1b0] sm:$0xff] %vm224, 0.0
        %280 = vst.msk [vmem:[#allocation2 + $0x1b8] sm:$0xff] %vm224, 0.0
        %281 = vst.msk [vmem:[#allocation2 + $0x1c0] sm:$0xff] %vm224, 0.0
        %282 = vst.msk [vmem:[#allocation2 + $0x1c8] sm:$0xff] %vm224, 0.0
        %283 = vst.msk [vmem:[#allocation2 + $0x1d0] sm:$0xff] %vm224, 0.0
        %284 = vst.msk [vmem:[#allocation2 + $0x1d8] sm:$0xff] %vm224, 0.0
        %285 = vst.msk [vmem:[#allocation2 + $0x1e0] sm:$0xff] %vm224, 0.0
        %286 = vst.msk [vmem:[#allocation2 + $0x1e8] sm:$0xff] %vm224, 0.0
        %287 = vst.msk [vmem:[#allocation2 + $0x1f0] sm:$0xff] %vm224, 0.0
        %288 = vst.msk [vmem:[#allocation2 + $0x1f8] sm:$0xff] %vm224, 0.0
      $region36: #{encoder_forward.4} parent=31 // pred_fallthru
        _
      %v289 = vld [vmem:[#allocation2] sm:$0xff]
      %v290 = vld [vmem:[#allocation2 + $0x8] sm:$0xff]
      %v291 = vld [vmem:[#allocation2 + $0x10] sm:$0xff]
      %v292 = vld [vmem:[#allocation2 + $0x18] sm:$0xff]
      %v293 = vld [vmem:[#allocation2 + $0x20] sm:$0xff]
      %v294 = vld [vmem:[#allocation2 + $0x28] sm:$0xff]
      %v295 = vld [vmem:[#allocation2 + $0x30] sm:$0xff]
      %v296 = vld [vmem:[#allocation2 + $0x38] sm:$0xff]
      %v297 = vld [vmem:[#allocation2 + $0x40] sm:$0xff]
      %v298 = vld [vmem:[#allocation2 + $0x48] sm:$0xff]
      %v299 = vld [vmem:[#allocation2 + $0x50] sm:$0xff]
      %v300 = vld [vmem:[#allocation2 + $0x58] sm:$0xff]
      %v301 = vld [vmem:[#allocation2 + $0x60] sm:$0xff]
      %v302 = vld [vmem:[#allocation2 + $0x68] sm:$0xff]
      %v303 = vld [vmem:[#allocation2 + $0x70] sm:$0xff]
      %v304 = vld [vmem:[#allocation2 + $0x78] sm:$0xff]
      %v305 = vld [vmem:[#allocation2 + $0x80] sm:$0xff]
      %v306 = vld [vmem:[#allocation2 + $0x88] sm:$0xff]
      %v307 = vld [vmem:[#allocation2 + $0x90] sm:$0xff]
      %v308 = vld [vmem:[#allocation2 + $0x98] sm:$0xff]
      %v309 = vld [vmem:[#allocation2 + $0xa0] sm:$0xff]
      %v310 = vld [vmem:[#allocation2 + $0xa8] sm:$0xff]
      %v311 = vld [vmem:[#allocation2 + $0xb0] sm:$0xff]
      %v312 = vld [vmem:[#allocation2 + $0xb8] sm:$0xff]
      %v313 = vld [vmem:[#allocation2 + $0xc0] sm:$0xff]
      %v314 = vld [vmem:[#allocation2 + $0xc8] sm:$0xff]
      %v315 = vld [vmem:[#allocation2 + $0xd0] sm:$0xff]
      %v316 = vld [vmem:[#allocation2 + $0xd8] sm:$0xff]
      %v317 = vld [vmem:[#allocation2 + $0xe0] sm:$0xff]
      %v318 = vld [vmem:[#allocation2 + $0xe8] sm:$0xff]
      %v319 = vld [vmem:[#allocation2 + $0xf0] sm:$0xff]
      %v320 = vld [vmem:[#allocation2 + $0xf8] sm:$0xff]
      %v321 = vld [vmem:[#allocation2 + $0x100] sm:$0xff]
      %v322 = vld [vmem:[#allocation2 + $0x108] sm:$0xff]
      %v323 = vld [vmem:[#allocation2 + $0x110] sm:$0xff]
      %v324 = vld [vmem:[#allocation2 + $0x118] sm:$0xff]
      %v325 = vld [vmem:[#allocation2 + $0x120] sm:$0xff]
      %v326 = vld [vmem:[#allocation2 + $0x128] sm:$0xff]
      %v327 = vld [vmem:[#allocation2 + $0x130] sm:$0xff]
      %v328 = vld [vmem:[#allocation2 + $0x138] sm:$0xff]
      %v329 = vld [vmem:[#allocation2 + $0x140] sm:$0xff]
      %v330 = vld [vmem:[#allocation2 + $0x148] sm:$0xff]
      %v331 = vld [vmem:[#allocation2 + $0x150] sm:$0xff]
      %v332 = vld [vmem:[#allocation2 + $0x158] sm:$0xff]
      %v333 = vld [vmem:[#allocation2 + $0x160] sm:$0xff]
      %v334 = vld [vmem:[#allocation2 + $0x168] sm:$0xff]
      %v335 = vld [vmem:[#allocation2 + $0x170] sm:$0xff]
      %v336 = vld [vmem:[#allocation2 + $0x178] sm:$0xff]
      %v337 = vld [vmem:[#allocation2 + $0x180] sm:$0xff]
      %v338 = vld [vmem:[#allocation2 + $0x188] sm:$0xff]
      %v339 = vld [vmem:[#allocation2 + $0x190] sm:$0xff]
      %v340 = vld [vmem:[#allocation2 + $0x198] sm:$0xff]
      %v341 = vld [vmem:[#allocation2 + $0x1a0] sm:$0xff]
      %v342 = vld [vmem:[#allocation2 + $0x1a8] sm:$0xff]
      %v343 = vld [vmem:[#allocation2 + $0x1b0] sm:$0xff]
      %v344 = vld [vmem:[#allocation2 + $0x1b8] sm:$0xff]
      %v345 = vld [vmem:[#allocation2 + $0x1c0] sm:$0xff]
      %v346 = vld [vmem:[#allocation2 + $0x1c8] sm:$0xff]
      %v347 = vld [vmem:[#allocation2 + $0x1d0] sm:$0xff]
      %v348 = vld [vmem:[#allocation2 + $0x1d8] sm:$0xff]
      %v349 = vld [vmem:[#allocation2 + $0x1e0] sm:$0xff]
      %v350 = vld [vmem:[#allocation2 + $0x1e8] sm:$0xff]
      %v351 = vld [vmem:[#allocation2 + $0x1f0] sm:$0xff]
      %v352 = vld [vmem:[#allocation2 + $0x1f8] sm:$0xff]
      %v353 = vld [vmem:[%s205] sm:$0xf]
      %v354 = vld [vmem:[%s205 + $0x4] sm:$0xf]
      %v355 = vld [vmem:[%s205 + $0x8] sm:$0xf]
      %v356 = vld [vmem:[%s205 + $0xc] sm:$0xf]
      %v357 = vld [vmem:[%s205 + $0x10] sm:$0xf]
      %v358 = vld [vmem:[%s205 + $0x14] sm:$0xf]
      %v359 = vld [vmem:[%s205 + $0x18] sm:$0xf]
      %v360 = vld [vmem:[%s205 + $0x1c] sm:$0xf]
      %v361 = vld [vmem:[%s205 + $0x20] sm:$0xf]
      %v362 = vld [vmem:[%s205 + $0x24] sm:$0xf]
      %v363 = vld [vmem:[%s205 + $0x28] sm:$0xf]
      %v364 = vld [vmem:[%s205 + $0x2c] sm:$0xf]
      %v365 = vld [vmem:[%s205 + $0x30] sm:$0xf]
      %v366 = vld [vmem:[%s205 + $0x34] sm:$0xf]
      %v367 = vld [vmem:[%s205 + $0x38] sm:$0xf]
      %v368 = vld [vmem:[%s205 + $0x3c] sm:$0xf]
      %v369 = vld [vmem:[%s205 + $0x40] sm:$0xf]
      %v370 = vld [vmem:[%s205 + $0x44] sm:$0xf]
      %v371 = vld [vmem:[%s205 + $0x48] sm:$0xf]
      %v372 = vld [vmem:[%s205 + $0x4c] sm:$0xf]
      %v373 = vld [vmem:[%s205 + $0x50] sm:$0xf]
      %v374 = vld [vmem:[%s205 + $0x54] sm:$0xf]
      %v375 = vld [vmem:[%s205 + $0x58] sm:$0xf]
      %v376 = vld [vmem:[%s205 + $0x5c] sm:$0xf]
      %v377 = vld [vmem:[%s205 + $0x60] sm:$0xf]
      %v378 = vld [vmem:[%s205 + $0x64] sm:$0xf]
      %v379 = vld [vmem:[%s205 + $0x68] sm:$0xf]
      %v380 = vld [vmem:[%s205 + $0x6c] sm:$0xf]
      %v381 = vld [vmem:[%s205 + $0x70] sm:$0xf]
      %v382 = vld [vmem:[%s205 + $0x74] sm:$0xf]
      %v383 = vld [vmem:[%s205 + $0x78] sm:$0xf]
      %v384 = vld [vmem:[%s205 + $0x7c] sm:$0xf]
      %v385 = vld [vmem:[%s205 + $0x80] sm:$0xf]
      %v386 = vld [vmem:[%s205 + $0x84] sm:$0xf]
      %v387 = vld [vmem:[%s205 + $0x88] sm:$0xf]
      %v388 = vld [vmem:[%s205 + $0x8c] sm:$0xf]
      %v389 = vld [vmem:[%s205 + $0x90] sm:$0xf]
      %v390 = vld [vmem:[%s205 + $0x94] sm:$0xf]
      %v391 = vld [vmem:[%s205 + $0x98] sm:$0xf]
      %v392 = vld [vmem:[%s205 + $0x9c] sm:$0xf]
      %v393 = vld [vmem:[%s205 + $0xa0] sm:$0xf]
      %v394 = vld [vmem:[%s205 + $0xa4] sm:$0xf]
      %v395 = vld [vmem:[%s205 + $0xa8] sm:$0xf]
      %v396 = vld [vmem:[%s205 + $0xac] sm:$0xf]
      %v397 = vld [vmem:[%s205 + $0xb0] sm:$0xf]
      %v398 = vld [vmem:[%s205 + $0xb4] sm:$0xf]
      %v399 = vld [vmem:[%s205 + $0xb8] sm:$0xf]
      %v400 = vld [vmem:[%s205 + $0xbc] sm:$0xf]
      %v401 = vld [vmem:[%s205 + $0xc0] sm:$0xf]
      %v402 = vld [vmem:[%s205 + $0xc4] sm:$0xf]
      %v403 = vld [vmem:[%s205 + $0xc8] sm:$0xf]
      %v404 = vld [vmem:[%s205 + $0xcc] sm:$0xf]
      %v405 = vld [vmem:[%s205 + $0xd0] sm:$0xf]
      %v406 = vld [vmem:[%s205 + $0xd4] sm:$0xf]
      %v407 = vld [vmem:[%s205 + $0xd8] sm:$0xf]
      %v408 = vld [vmem:[%s205 + $0xdc] sm:$0xf]
      %v409 = vld [vmem:[%s205 + $0xe0] sm:$0xf]
      %v410 = vld [vmem:[%s205 + $0xe4] sm:$0xf]
      %v411 = vld [vmem:[%s205 + $0xe8] sm:$0xf]
      %v412 = vld [vmem:[%s205 + $0xec] sm:$0xf]
      %v413 = vld [vmem:[%s205 + $0xf0] sm:$0xf]
      %v414 = vld [vmem:[%s205 + $0xf4] sm:$0xf]
      %v415 = vld [vmem:[%s205 + $0xf8] sm:$0xf]
      %v416 = vld [vmem:[%s205 + $0xfc] sm:$0xf]
      %v417 = vld [vmem:[%s211] sm:$0xf]
      %v418 = vld [vmem:[%s211 + $0x4] sm:$0xf]
      %v419 = vld [vmem:[%s211 + $0x8] sm:$0xf]
      %v420 = vld [vmem:[%s211 + $0xc] sm:$0xf]
      %v421 = vld [vmem:[%s211 + $0x10] sm:$0xf]
      %v422 = vld [vmem:[%s211 + $0x14] sm:$0xf]
      %v487 = vunpack.c.l.b16 %v353
      %v488 = vunpack.c.l.b16 %v354
      %v489 = vunpack.c.l.b16 %v355
      %v490 = vunpack.c.l.b16 %v356
      %v491 = vunpack.c.l.b16 %v357
      %v492 = vunpack.c.l.b16 %v358
      %v493 = vunpack.c.l.b16 %v359
      %v494 = vunpack.c.l.b16 %v360
      %v495 = vunpack.c.l.b16 %v361
      %v496 = vunpack.c.l.b16 %v362
      %v497 = vunpack.c.l.b16 %v363
      %v498 = vunpack.c.l.b16 %v364
      %v499 = vunpack.c.l.b16 %v365
      %v500 = vunpack.c.l.b16 %v366
      %v501 = vunpack.c.l.b16 %v367
      %v502 = vunpack.c.l.b16 %v368
      %v503 = vunpack.c.l.b16 %v369
      %v504 = vunpack.c.l.b16 %v370
      %v505 = vunpack.c.l.b16 %v371
      %v506 = vunpack.c.l.b16 %v372
      %v507 = vunpack.c.l.b16 %v373
      %v508 = vunpack.c.l.b16 %v374
      %v509 = vunpack.c.l.b16 %v375
      %v510 = vunpack.c.l.b16 %v376
      %v511 = vunpack.c.l.b16 %v377
      %v512 = vunpack.c.l.b16 %v378
      %v513 = vunpack.c.l.b16 %v379
      %v514 = vunpack.c.l.b16 %v380
      %v515 = vunpack.c.l.b16 %v381
      %v516 = vunpack.c.l.b16 %v382
      %v517 = vunpack.c.l.b16 %v383
      %v518 = vunpack.c.l.b16 %v384
      %v519 = vunpack.c.l.b16 %v385
      %v520 = vunpack.c.l.b16 %v386
      %v521 = vunpack.c.l.b16 %v387
      %v522 = vunpack.c.l.b16 %v388
      %v523 = vunpack.c.l.b16 %v389
      %v524 = vunpack.c.l.b16 %v390
      %v525 = vunpack.c.l.b16 %v391
      %v526 = vunpack.c.l.b16 %v392
      %v527 = vunpack.c.l.b16 %v393
      %v528 = vunpack.c.l.b16 %v394
      %v529 = vunpack.c.l.b16 %v395
      %v530 = vunpack.c.l.b16 %v396
      %v531 = vunpack.c.l.b16 %v397
      %v532 = vunpack.c.l.b16 %v398
      %v533 = vunpack.c.l.b16 %v399
      %v534 = vunpack.c.l.b16 %v400
      %v535 = vunpack.c.l.b16 %v401
      %v536 = vunpack.c.l.b16 %v402
      %v537 = vunpack.c.l.b16 %v403
      %v538 = vunpack.c.l.b16 %v404
      %v539 = vunpack.c.l.b16 %v405
      %v540 = vunpack.c.l.b16 %v406
      %v541 = vunpack.c.l.b16 %v407
      %v542 = vunpack.c.l.b16 %v408
      %v543 = vunpack.c.l.b16 %v409
      %v544 = vunpack.c.l.b16 %v410
      %v545 = vunpack.c.l.b16 %v411
      %v546 = vunpack.c.l.b16 %v412
      %v547 = vunpack.c.l.b16 %v413
      %v548 = vunpack.c.l.b16 %v414
      %v549 = vunpack.c.l.b16 %v415
      %v550 = vunpack.c.l.b16 %v416
      %v551 = vpack.c.b16 %v488, %v487
      %v552 = vpack.c.b16 %v490, %v489
      %v553 = vpack.c.b16 %v492, %v491
      %v554 = vpack.c.b16 %v494, %v493
      %v555 = vpack.c.b16 %v496, %v495
      %v556 = vpack.c.b16 %v498, %v497
      %v557 = vpack.c.b16 %v500, %v499
      %v558 = vpack.c.b16 %v502, %v501
      %v559 = vpack.c.b16 %v504, %v503
      %v560 = vpack.c.b16 %v506, %v505
      %v561 = vpack.c.b16 %v508, %v507
      %v562 = vpack.c.b16 %v510, %v509
      %v563 = vpack.c.b16 %v512, %v511
      %v564 = vpack.c.b16 %v514, %v513
      %v565 = vpack.c.b16 %v516, %v515
      %v566 = vpack.c.b16 %v518, %v517
      %v567 = vpack.c.b16 %v520, %v519
      %v568 = vpack.c.b16 %v522, %v521
      %v569 = vpack.c.b16 %v524, %v523
      %v570 = vpack.c.b16 %v526, %v525
      %v571 = vpack.c.b16 %v528, %v527
      %v572 = vpack.c.b16 %v530, %v529
      %v573 = vpack.c.b16 %v532, %v531
      %v574 = vpack.c.b16 %v534, %v533
      %v575 = vpack.c.b16 %v536, %v535
      %v576 = vpack.c.b16 %v538, %v537
      %v577 = vpack.c.b16 %v540, %v539
      %v578 = vpack.c.b16 %v542, %v541
      %v579 = vpack.c.b16 %v544, %v543
      %v580 = vpack.c.b16 %v546, %v545
      %v581 = vpack.c.b16 %v548, %v547
      %v582 = vpack.c.b16 %v550, %v549
      %v589 = vunpack.c.l.b16 %v417
      %v590 = vunpack.c.l.b16 %v418
      %v591 = vunpack.c.l.b16 %v419
      %v592 = vunpack.c.l.b16 %v420
      %v593 = vunpack.c.l.b16 %v421
      %v594 = vunpack.c.l.b16 %v422
      %v595 = vpack.c.b16 %v590, %v589
      %v596 = vpack.c.b16 %v592, %v591
      %v597 = vpack.c.b16 %v594, %v593
      %vm601 = vcmask 392192
      %v603 = vsel %vm601, %v551, 0
      %v606 = vsel %vm601, %v552, 0
      %v609 = vsel %vm601, %v553, 0
      %v612 = vsel %vm601, %v554, 0
      %v615 = vsel %vm601, %v555, 0
      %v618 = vsel %vm601, %v556, 0
      %v621 = vsel %vm601, %v557, 0
      %v624 = vsel %vm601, %v558, 0
      %v627 = vsel %vm601, %v559, 0
      %v630 = vsel %vm601, %v560, 0
      %v633 = vsel %vm601, %v561, 0
      %v636 = vsel %vm601, %v562, 0
      %v639 = vsel %vm601, %v563, 0
      %v642 = vsel %vm601, %v564, 0
      %v645 = vsel %vm601, %v565, 0
      %v648 = vsel %vm601, %v566, 0
      %v651 = vsel %vm601, %v567, 0
      %v654 = vsel %vm601, %v568, 0
      %v657 = vsel %vm601, %v569, 0
      %v660 = vsel %vm601, %v570, 0
      %v663 = vsel %vm601, %v571, 0
      %v666 = vsel %vm601, %v572, 0
      %v669 = vsel %vm601, %v573, 0
      %v672 = vsel %vm601, %v574, 0
      %v675 = vsel %vm601, %v575, 0
      %v678 = vsel %vm601, %v576, 0
      %v681 = vsel %vm601, %v577, 0
      %v684 = vsel %vm601, %v578, 0
      %v687 = vsel %vm601, %v579, 0
      %v690 = vsel %vm601, %v580, 0
      %v693 = vsel %vm601, %v581, 0
      %v696 = vsel %vm601, %v582, 0
      %698 = vmatprep.subr.bf16.mxu0 0
      %699 = vmatpush1.bf16.msra.mxu0 0
      %700 = vmatprep.subr.bf16.mxu0 0
      %701 = vmatpush1.bf16.msra.mxu0 0
      %702 = vmatprep.subr.bf16.mxu0 0
      %703 = vmatpush1.bf16.msra.mxu0 0
      %704 = vmatprep.subr.bf16.mxu0 0
      %705 = vmatpush1.bf16.msra.mxu0 0
      %706 = vmatprep.subr.bf16.mxu0 0
      %707 = vmatpush1.bf16.msra.mxu0 0
      %708 = vmatprep.subr.bf16.mxu0 0
      %709 = vmatpush1.bf16.msra.mxu0 %v597
      %710 = vmatprep.subr.bf16.mxu0 0
      %711 = vmatpush1.bf16.msra.mxu0 %v596
      %712 = vmatprep.subr.bf16.mxu0 0
      %713 = vmatpush1.bf16.msra.mxu0 %v595
      %714 = vmatprep.subr.bf16.mxu0 0
      %715 = vmatpush2.bf16.msra.mxu0 0
      %716 = vmatprep.subr.bf16.mxu0 0
      %717 = vmatpush2.bf16.msra.mxu0 0
      %718 = vmatprep.subr.bf16.mxu0 0
      %719 = vmatpush2.bf16.msra.mxu0 0
      %720 = vmatprep.subr.bf16.mxu0 0
      %721 = vmatpush2.bf16.msra.mxu0 0
      %722 = vmatprep.subr.bf16.mxu0 0
      %723 = vmatpush2.bf16.msra.mxu0 0
      %724 = vmatprep.subr.bf16.mxu0 0
      %725 = vmatpush2.bf16.msra.mxu0 0
      %726 = vmatprep.subr.bf16.mxu0 0
      %727 = vmatpush2.bf16.msra.mxu0 0
      %728 = vmatprep.subr.bf16.mxu0 0
      %729 = vmatpush2.bf16.msra.mxu0 0
      %730 = vmatprep.mubr.bf16.mxu0 0
      %731 = vmatmul.mubr.bf16.gmra.mxu0 %v603
      %v732 = vpop.f32.mrf.mxu0
      %v733 = vadd.f32 0.0, %v732
      %v734 = vpop.f32.mrf.mxu0
      %v735 = vpop.f32.mrf.mxu0
      %v736 = vadd.f32 0.0, %v735
      %v737 = vpop.f32.mrf.mxu0
      %738 = vmatprep.mubr.bf16.mxu0 0
      %739 = vmatmul.mubr.bf16.gmra.mxu0 %v606
      %v740 = vpop.f32.mrf.mxu0
      %v741 = vadd.f32 0.0, %v740
      %v742 = vpop.f32.mrf.mxu0
      %v743 = vpop.f32.mrf.mxu0
      %v744 = vadd.f32 0.0, %v743
      %v745 = vpop.f32.mrf.mxu0
      %746 = vmatprep.mubr.bf16.mxu0 0
      %747 = vmatmul.mubr.bf16.gmra.mxu0 %v609
      %v748 = vpop.f32.mrf.mxu0
      %v749 = vadd.f32 0.0, %v748
      %v750 = vpop.f32.mrf.mxu0
      %v751 = vpop.f32.mrf.mxu0
      %v752 = vadd.f32 0.0, %v751
      %v753 = vpop.f32.mrf.mxu0
      %754 = vmatprep.mubr.bf16.mxu0 0
      %755 = vmatmul.mubr.bf16.gmra.mxu0 %v612
      %v756 = vpop.f32.mrf.mxu0
      %v757 = vadd.f32 0.0, %v756
      %v758 = vpop.f32.mrf.mxu0
      %v759 = vpop.f32.mrf.mxu0
      %v760 = vadd.f32 0.0, %v759
      %v761 = vpop.f32.mrf.mxu0
      %762 = vmatprep.mubr.bf16.mxu0 0
      %763 = vmatmul.mubr.bf16.gmra.mxu0 %v615
      %v764 = vpop.f32.mrf.mxu0
      %v765 = vadd.f32 0.0, %v764
      %v766 = vpop.f32.mrf.mxu0
      %v767 = vpop.f32.mrf.mxu0
      %v768 = vadd.f32 0.0, %v767
      %v769 = vpop.f32.mrf.mxu0
      %770 = vmatprep.mubr.bf16.mxu0 0
      %771 = vmatmul.mubr.bf16.gmra.mxu0 %v618
      %v772 = vpop.f32.mrf.mxu0
      %v773 = vadd.f32 0.0, %v772
      %v774 = vpop.f32.mrf.mxu0
      %v775 = vpop.f32.mrf.mxu0
      %v776 = vadd.f32 0.0, %v775
      %v777 = vpop.f32.mrf.mxu0
      %778 = vmatprep.mubr.bf16.mxu0 0
      %779 = vmatmul.mubr.bf16.gmra.mxu0 %v621
      %v780 = vpop.f32.mrf.mxu0
      %v781 = vadd.f32 0.0, %v780
      %v782 = vpop.f32.mrf.mxu0
      %v783 = vpop.f32.mrf.mxu0
      %v784 = vadd.f32 0.0, %v783
      %v785 = vpop.f32.mrf.mxu0
      %786 = vmatprep.mubr.bf16.mxu0 0
      %787 = vmatmul.mubr.bf16.gmra.mxu0 %v624
      %v788 = vpop.f32.mrf.mxu0
      %v789 = vadd.f32 0.0, %v788
      %v790 = vpop.f32.mrf.mxu0
      %v791 = vpop.f32.mrf.mxu0
      %v792 = vadd.f32 0.0, %v791
      %v793 = vpop.f32.mrf.mxu0
      %794 = vmatprep.mubr.bf16.mxu0 0
      %795 = vmatmul.mubr.bf16.gmra.mxu0 %v627
      %v796 = vpop.f32.mrf.mxu0
      %v797 = vadd.f32 0.0, %v796
      %v798 = vpop.f32.mrf.mxu0
      %v799 = vpop.f32.mrf.mxu0
      %v800 = vadd.f32 0.0, %v799
      %v801 = vpop.f32.mrf.mxu0
      %802 = vmatprep.mubr.bf16.mxu0 0
      %803 = vmatmul.mubr.bf16.gmra.mxu0 %v630
      %v804 = vpop.f32.mrf.mxu0
      %v805 = vadd.f32 0.0, %v804
      %v806 = vpop.f32.mrf.mxu0
      %v807 = vpop.f32.mrf.mxu0
      %v808 = vadd.f32 0.0, %v807
      %v809 = vpop.f32.mrf.mxu0
      %810 = vmatprep.mubr.bf16.mxu0 0
      %811 = vmatmul.mubr.bf16.gmra.mxu0 %v633
      %v812 = vpop.f32.mrf.mxu0
      %v813 = vadd.f32 0.0, %v812
      %v814 = vpop.f32.mrf.mxu0
      %v815 = vpop.f32.mrf.mxu0
      %v816 = vadd.f32 0.0, %v815
      %v817 = vpop.f32.mrf.mxu0
      %818 = vmatprep.mubr.bf16.mxu0 0
      %819 = vmatmul.mubr.bf16.gmra.mxu0 %v636
      %v820 = vpop.f32.mrf.mxu0
      %v821 = vadd.f32 0.0, %v820
      %v822 = vpop.f32.mrf.mxu0
      %v823 = vpop.f32.mrf.mxu0
      %v824 = vadd.f32 0.0, %v823
      %v825 = vpop.f32.mrf.mxu0
      %826 = vmatprep.mubr.bf16.mxu0 0
      %827 = vmatmul.mubr.bf16.gmra.mxu0 %v639
      %v828 = vpop.f32.mrf.mxu0
      %v829 = vadd.f32 0.0, %v828
      %v830 = vpop.f32.mrf.mxu0
      %v831 = vpop.f32.mrf.mxu0
      %v832 = vadd.f32 0.0, %v831
      %v833 = vpop.f32.mrf.mxu0
      %834 = vmatprep.mubr.bf16.mxu0 0
      %835 = vmatmul.mubr.bf16.gmra.mxu0 %v642
      %v836 = vpop.f32.mrf.mxu0
      %v837 = vadd.f32 0.0, %v836
      %v838 = vpop.f32.mrf.mxu0
      %v839 = vpop.f32.mrf.mxu0
      %v840 = vadd.f32 0.0, %v839
      %v841 = vpop.f32.mrf.mxu0
      %842 = vmatprep.mubr.bf16.mxu0 0
      %843 = vmatmul.mubr.bf16.gmra.mxu0 %v645
      %v844 = vpop.f32.mrf.mxu0
      %v845 = vadd.f32 0.0, %v844
      %v846 = vpop.f32.mrf.mxu0
      %v847 = vpop.f32.mrf.mxu0
      %v848 = vadd.f32 0.0, %v847
      %v849 = vpop.f32.mrf.mxu0
      %850 = vmatprep.mubr.bf16.mxu0 0
      %851 = vmatmul.mubr.bf16.gmra.mxu0 %v648
      %v852 = vpop.f32.mrf.mxu0
      %v853 = vadd.f32 0.0, %v852
      %v854 = vpop.f32.mrf.mxu0
      %v855 = vpop.f32.mrf.mxu0
      %v856 = vadd.f32 0.0, %v855
      %v857 = vpop.f32.mrf.mxu0
      %858 = vmatprep.mubr.bf16.mxu0 0
      %859 = vmatmul.mubr.bf16.gmra.mxu0 %v651
      %v860 = vpop.f32.mrf.mxu0
      %v861 = vadd.f32 0.0, %v860
      %v862 = vpop.f32.mrf.mxu0
      %v863 = vpop.f32.mrf.mxu0
      %v864 = vadd.f32 0.0, %v863
      %v865 = vpop.f32.mrf.mxu0
      %866 = vmatprep.mubr.bf16.mxu0 0
      %867 = vmatmul.mubr.bf16.gmra.mxu0 %v654
      %v868 = vpop.f32.mrf.mxu0
      %v869 = vadd.f32 0.0, %v868
      %v870 = vpop.f32.mrf.mxu0
      %v871 = vpop.f32.mrf.mxu0
      %v872 = vadd.f32 0.0, %v871
      %v873 = vpop.f32.mrf.mxu0
      %874 = vmatprep.mubr.bf16.mxu0 0
      %875 = vmatmul.mubr.bf16.gmra.mxu0 %v657
      %v876 = vpop.f32.mrf.mxu0
      %v877 = vadd.f32 0.0, %v876
      %v878 = vpop.f32.mrf.mxu0
      %v879 = vpop.f32.mrf.mxu0
      %v880 = vadd.f32 0.0, %v879
      %v881 = vpop.f32.mrf.mxu0
      %882 = vmatprep.mubr.bf16.mxu0 0
      %883 = vmatmul.mubr.bf16.gmra.mxu0 %v660
      %v884 = vpop.f32.mrf.mxu0
      %v885 = vadd.f32 0.0, %v884
      %v886 = vpop.f32.mrf.mxu0
      %v887 = vpop.f32.mrf.mxu0
      %v888 = vadd.f32 0.0, %v887
      %v889 = vpop.f32.mrf.mxu0
      %890 = vmatprep.mubr.bf16.mxu0 0
      %891 = vmatmul.mubr.bf16.gmra.mxu0 %v663
      %v892 = vpop.f32.mrf.mxu0
      %v893 = vadd.f32 0.0, %v892
      %v894 = vpop.f32.mrf.mxu0
      %v895 = vpop.f32.mrf.mxu0
      %v896 = vadd.f32 0.0, %v895
      %v897 = vpop.f32.mrf.mxu0
      %898 = vmatprep.mubr.bf16.mxu0 0
      %899 = vmatmul.mubr.bf16.gmra.mxu0 %v666
      %v900 = vpop.f32.mrf.mxu0
      %v901 = vadd.f32 0.0, %v900
      %v902 = vpop.f32.mrf.mxu0
      %v903 = vpop.f32.mrf.mxu0
      %v904 = vadd.f32 0.0, %v903
      %v905 = vpop.f32.mrf.mxu0
      %906 = vmatprep.mubr.bf16.mxu0 0
      %907 = vmatmul.mubr.bf16.gmra.mxu0 %v669
      %v908 = vpop.f32.mrf.mxu0
      %v909 = vadd.f32 0.0, %v908
      %v910 = vpop.f32.mrf.mxu0
      %v911 = vpop.f32.mrf.mxu0
      %v912 = vadd.f32 0.0, %v911
      %v913 = vpop.f32.mrf.mxu0
      %914 = vmatprep.mubr.bf16.mxu0 0
      %915 = vmatmul.mubr.bf16.gmra.mxu0 %v672
      %v916 = vpop.f32.mrf.mxu0
      %v917 = vadd.f32 0.0, %v916
      %v918 = vpop.f32.mrf.mxu0
      %v919 = vpop.f32.mrf.mxu0
      %v920 = vadd.f32 0.0, %v919
      %v921 = vpop.f32.mrf.mxu0
      %922 = vmatprep.mubr.bf16.mxu0 0
      %923 = vmatmul.mubr.bf16.gmra.mxu0 %v675
      %v924 = vpop.f32.mrf.mxu0
      %v925 = vadd.f32 0.0, %v924
      %v926 = vpop.f32.mrf.mxu0
      %v927 = vpop.f32.mrf.mxu0
      %v928 = vadd.f32 0.0, %v927
      %v929 = vpop.f32.mrf.mxu0
      %930 = vmatprep.mubr.bf16.mxu0 0
      %931 = vmatmul.mubr.bf16.gmra.mxu0 %v678
      %v932 = vpop.f32.mrf.mxu0
      %v933 = vadd.f32 0.0, %v932
      %v934 = vpop.f32.mrf.mxu0
      %v935 = vpop.f32.mrf.mxu0
      %v936 = vadd.f32 0.0, %v935
      %v937 = vpop.f32.mrf.mxu0
      %938 = vmatprep.mubr.bf16.mxu0 0
      %939 = vmatmul.mubr.bf16.gmra.mxu0 %v681
      %v940 = vpop.f32.mrf.mxu0
      %v941 = vadd.f32 0.0, %v940
      %v942 = vpop.f32.mrf.mxu0
      %v943 = vpop.f32.mrf.mxu0
      %v944 = vadd.f32 0.0, %v943
      %v945 = vpop.f32.mrf.mxu0
      %946 = vmatprep.mubr.bf16.mxu0 0
      %947 = vmatmul.mubr.bf16.gmra.mxu0 %v684
      %v948 = vpop.f32.mrf.mxu0
      %v949 = vadd.f32 0.0, %v948
      %v950 = vpop.f32.mrf.mxu0
      %v951 = vpop.f32.mrf.mxu0
      %v952 = vadd.f32 0.0, %v951
      %v953 = vpop.f32.mrf.mxu0
      %954 = vmatprep.mubr.bf16.mxu0 0
      %955 = vmatmul.mubr.bf16.gmra.mxu0 %v687
      %v956 = vpop.f32.mrf.mxu0
      %v957 = vadd.f32 0.0, %v956
      %v958 = vpop.f32.mrf.mxu0
      %v959 = vpop.f32.mrf.mxu0
      %v960 = vadd.f32 0.0, %v959
      %v961 = vpop.f32.mrf.mxu0
      %962 = vmatprep.mubr.bf16.mxu0 0
      %963 = vmatmul.mubr.bf16.gmra.mxu0 %v690
      %v964 = vpop.f32.mrf.mxu0
      %v965 = vadd.f32 0.0, %v964
      %v966 = vpop.f32.mrf.mxu0
      %v967 = vpop.f32.mrf.mxu0
      %v968 = vadd.f32 0.0, %v967
      %v969 = vpop.f32.mrf.mxu0
      %970 = vmatprep.mubr.bf16.mxu0 0
      %971 = vmatmul.mubr.bf16.gmra.mxu0 %v693
      %v972 = vpop.f32.mrf.mxu0
      %v973 = vadd.f32 0.0, %v972
      %v974 = vpop.f32.mrf.mxu0
      %v975 = vpop.f32.mrf.mxu0
      %v976 = vadd.f32 0.0, %v975
      %v977 = vpop.f32.mrf.mxu0
      %978 = vmatprep.mubr.bf16.mxu0 0
      %979 = vmatmul.mubr.bf16.gmra.mxu0 %v696
      %v980 = vpop.f32.mrf.mxu0
      %v981 = vadd.f32 0.0, %v980
      %v982 = vpop.f32.mrf.mxu0
      %v983 = vpop.f32.mrf.mxu0
      %v984 = vadd.f32 0.0, %v983
      %v985 = vpop.f32.mrf.mxu0
      %986 = vdwg.mxu0
      %v987 = vadd.f32 %v289, %v733
      %v988 = vadd.f32 %v290, %v736
      %v989 = vadd.f32 %v291, %v741
      %v990 = vadd.f32 %v292, %v744
      %v991 = vadd.f32 %v293, %v749
      %v992 = vadd.f32 %v294, %v752
      %v993 = vadd.f32 %v295, %v757
      %v994 = vadd.f32 %v296, %v760
      %v995 = vadd.f32 %v297, %v765
      %v996 = vadd.f32 %v298, %v768
      %v997 = vadd.f32 %v299, %v773
      %v998 = vadd.f32 %v300, %v776
      %v999 = vadd.f32 %v301, %v781
      %v1000 = vadd.f32 %v302, %v784
      %v1001 = vadd.f32 %v303, %v789
      %v1002 = vadd.f32 %v304, %v792
      %v1003 = vadd.f32 %v305, %v797
      %v1004 = vadd.f32 %v306, %v800
      %v1005 = vadd.f32 %v307, %v805
      %v1006 = vadd.f32 %v308, %v808
      %v1007 = vadd.f32 %v309, %v813
      %v1008 = vadd.f32 %v310, %v816
      %v1009 = vadd.f32 %v311, %v821
      %v1010 = vadd.f32 %v312, %v824
      %v1011 = vadd.f32 %v313, %v829
      %v1012 = vadd.f32 %v314, %v832
      %v1013 = vadd.f32 %v315, %v837
      %v1014 = vadd.f32 %v316, %v840
      %v1015 = vadd.f32 %v317, %v845
      %v1016 = vadd.f32 %v318, %v848
      %v1017 = vadd.f32 %v319, %v853
      %v1018 = vadd.f32 %v320, %v856
      %v1019 = vadd.f32 %v321, %v861
      %v1020 = vadd.f32 %v322, %v864
      %v1021 = vadd.f32 %v323, %v869
      %v1022 = vadd.f32 %v324, %v872
      %v1023 = vadd.f32 %v325, %v877
      %v1024 = vadd.f32 %v326, %v880
      %v1025 = vadd.f32 %v327, %v885
      %v1026 = vadd.f32 %v328, %v888
      %v1027 = vadd.f32 %v329, %v893
      %v1028 = vadd.f32 %v330, %v896
      %v1029 = vadd.f32 %v331, %v901
      %v1030 = vadd.f32 %v332, %v904
      %v1031 = vadd.f32 %v333, %v909
      %v1032 = vadd.f32 %v334, %v912
      %v1033 = vadd.f32 %v335, %v917
      %v1034 = vadd.f32 %v336, %v920
      %v1035 = vadd.f32 %v337, %v925
      %v1036 = vadd.f32 %v338, %v928
      %v1037 = vadd.f32 %v339, %v933
      %v1038 = vadd.f32 %v340, %v936
      %v1039 = vadd.f32 %v341, %v941
      %v1040 = vadd.f32 %v342, %v944
      %v1041 = vadd.f32 %v343, %v949
      %v1042 = vadd.f32 %v344, %v952
      %v1043 = vadd.f32 %v345, %v957
      %v1044 = vadd.f32 %v346, %v960
      %v1045 = vadd.f32 %v347, %v965
      %v1046 = vadd.f32 %v348, %v968
      %v1047 = vadd.f32 %v349, %v973
      %v1048 = vadd.f32 %v350, %v976
      %v1049 = vadd.f32 %v351, %v981
      %v1050 = vadd.f32 %v352, %v984
      %vm1051 = vcmask 261120
      %1052 = vst.msk [vmem:[#allocation2] sm:$0xff] %vm1051, %v987
      %1053 = vst.msk [vmem:[#allocation2 + $0x8] sm:$0xff] %vm1051, %v988
      %1054 = vst.msk [vmem:[#allocation2 + $0x10] sm:$0xff] %vm1051, %v989
      %1055 = vst.msk [vmem:[#allocation2 + $0x18] sm:$0xff] %vm1051, %v990
      %1056 = vst.msk [vmem:[#allocation2 + $0x20] sm:$0xff] %vm1051, %v991
      %1057 = vst.msk [vmem:[#allocation2 + $0x28] sm:$0xff] %vm1051, %v992
      %1058 = vst.msk [vmem:[#allocation2 + $0x30] sm:$0xff] %vm1051, %v993
      %1059 = vst.msk [vmem:[#allocation2 + $0x38] sm:$0xff] %vm1051, %v994
      %1060 = vst.msk [vmem:[#allocation2 + $0x40] sm:$0xff] %vm1051, %v995
      %1061 = vst.msk [vmem:[#allocation2 + $0x48] sm:$0xff] %vm1051, %v996
      %1062 = vst.msk [vmem:[#allocation2 + $0x50] sm:$0xff] %vm1051, %v997
      %1063 = vst.msk [vmem:[#allocation2 + $0x58] sm:$0xff] %vm1051, %v998
      %1064 = vst.msk [vmem:[#allocation2 + $0x60] sm:$0xff] %vm1051, %v999
      %1065 = vst.msk [vmem:[#allocation2 + $0x68] sm:$0xff] %vm1051, %v1000
      %1066 = vst.msk [vmem:[#allocation2 + $0x70] sm:$0xff] %vm1051, %v1001
      %1067 = vst.msk [vmem:[#allocation2 + $0x78] sm:$0xff] %vm1051, %v1002
      %1068 = vst.msk [vmem:[#allocation2 + $0x80] sm:$0xff] %vm1051, %v1003
      %1069 = vst.msk [vmem:[#allocation2 + $0x88] sm:$0xff] %vm1051, %v1004
      %1070 = vst.msk [vmem:[#allocation2 + $0x90] sm:$0xff] %vm1051, %v1005
      %1071 = vst.msk [vmem:[#allocation2 + $0x98] sm:$0xff] %vm1051, %v1006
      %1072 = vst.msk [vmem:[#allocation2 + $0xa0] sm:$0xff] %vm1051, %v1007
      %1073 = vst.msk [vmem:[#allocation2 + $0xa8] sm:$0xff] %vm1051, %v1008
      %1074 = vst.msk [vmem:[#allocation2 + $0xb0] sm:$0xff] %vm1051, %v1009
      %1075 = vst.msk [vmem:[#allocation2 + $0xb8] sm:$0xff] %vm1051, %v1010
      %1076 = vst.msk [vmem:[#allocation2 + $0xc0] sm:$0xff] %vm1051, %v1011
      %1077 = vst.msk [vmem:[#allocation2 + $0xc8] sm:$0xff] %vm1051, %v1012
      %1078 = vst.msk [vmem:[#allocation2 + $0xd0] sm:$0xff] %vm1051, %v1013
      %1079 = vst.msk [vmem:[#allocation2 + $0xd8] sm:$0xff] %vm1051, %v1014
      %1080 = vst.msk [vmem:[#allocation2 + $0xe0] sm:$0xff] %vm1051, %v1015
      %1081 = vst.msk [vmem:[#allocation2 + $0xe8] sm:$0xff] %vm1051, %v1016
      %1082 = vst.msk [vmem:[#allocation2 + $0xf0] sm:$0xff] %vm1051, %v1017
      %1083 = vst.msk [vmem:[#allocation2 + $0xf8] sm:$0xff] %vm1051, %v1018
      %1084 = vst.msk [vmem:[#allocation2 + $0x100] sm:$0xff] %vm1051, %v1019
      %1085 = vst.msk [vmem:[#allocation2 + $0x108] sm:$0xff] %vm1051, %v1020
      %1086 = vst.msk [vmem:[#allocation2 + $0x110] sm:$0xff] %vm1051, %v1021
      %1087 = vst.msk [vmem:[#allocation2 + $0x118] sm:$0xff] %vm1051, %v1022
      %1088 = vst.msk [vmem:[#allocation2 + $0x120] sm:$0xff] %vm1051, %v1023
      %1089 = vst.msk [vmem:[#allocation2 + $0x128] sm:$0xff] %vm1051, %v1024
      %1090 = vst.msk [vmem:[#allocation2 + $0x130] sm:$0xff] %vm1051, %v1025
      %1091 = vst.msk [vmem:[#allocation2 + $0x138] sm:$0xff] %vm1051, %v1026
      %1092 = vst.msk [vmem:[#allocation2 + $0x140] sm:$0xff] %vm1051, %v1027
      %1093 = vst.msk [vmem:[#allocation2 + $0x148] sm:$0xff] %vm1051, %v1028
      %1094 = vst.msk [vmem:[#allocation2 + $0x150] sm:$0xff] %vm1051, %v1029
      %1095 = vst.msk [vmem:[#allocation2 + $0x158] sm:$0xff] %vm1051, %v1030
      %1096 = vst.msk [vmem:[#allocation2 + $0x160] sm:$0xff] %vm1051, %v1031
      %1097 = vst.msk [vmem:[#allocation2 + $0x168] sm:$0xff] %vm1051, %v1032
      %1098 = vst.msk [vmem:[#allocation2 + $0x170] sm:$0xff] %vm1051, %v1033
      %1099 = vst.msk [vmem:[#allocation2 + $0x178] sm:$0xff] %vm1051, %v1034
      %1100 = vst.msk [vmem:[#allocation2 + $0x180] sm:$0xff] %vm1051, %v1035
      %1101 = vst.msk [vmem:[#allocation2 + $0x188] sm:$0xff] %vm1051, %v1036
      %1102 = vst.msk [vmem:[#allocation2 + $0x190] sm:$0xff] %vm1051, %v1037
      %1103 = vst.msk [vmem:[#allocation2 + $0x198] sm:$0xff] %vm1051, %v1038
      %1104 = vst.msk [vmem:[#allocation2 + $0x1a0] sm:$0xff] %vm1051, %v1039
      %1105 = vst.msk [vmem:[#allocation2 + $0x1a8] sm:$0xff] %vm1051, %v1040
      %1106 = vst.msk [vmem:[#allocation2 + $0x1b0] sm:$0xff] %vm1051, %v1041
      %1107 = vst.msk [vmem:[#allocation2 + $0x1b8] sm:$0xff] %vm1051, %v1042
      %1108 = vst.msk [vmem:[#allocation2 + $0x1c0] sm:$0xff] %vm1051, %v1043
      %1109 = vst.msk [vmem:[#allocation2 + $0x1c8] sm:$0xff] %vm1051, %v1044
      %1110 = vst.msk [vmem:[#allocation2 + $0x1d0] sm:$0xff] %vm1051, %v1045
      %1111 = vst.msk [vmem:[#allocation2 + $0x1d8] sm:$0xff] %vm1051, %v1046
      %1112 = vst.msk [vmem:[#allocation2 + $0x1e0] sm:$0xff] %vm1051, %v1047
      %1113 = vst.msk [vmem:[#allocation2 + $0x1e8] sm:$0xff] %vm1051, %v1048
      %1114 = vst.msk [vmem:[#allocation2 + $0x1f0] sm:$0xff] %vm1051, %v1049
      %1115 = vst.msk [vmem:[#allocation2 + $0x1f8] sm:$0xff] %vm1051, %v1050
      // Predicated region
      $region37: #{encoder_forward.4} parent=31 // pred_check
        %p1116 = pneg %p220
      $region38: #{encoder_forward.4} parent=31 // pred_check_branch
        %1118 = sbr.rel (%p1116) target = $region40
      $region39: #{encoder_forward.4} parent=31 // pred_region
        %v1119 = vld [vmem:[#allocation2] sm:$0xff]
        %v1120 = vld [vmem:[#allocation2 + $0x8] sm:$0xff]
        %v1121 = vld [vmem:[#allocation2 + $0x10] sm:$0xff]
        %v1122 = vld [vmem:[#allocation2 + $0x18] sm:$0xff]
        %v1123 = vld [vmem:[#allocation2 + $0x20] sm:$0xff]
        %v1124 = vld [vmem:[#allocation2 + $0x28] sm:$0xff]
        %v1125 = vld [vmem:[#allocation2 + $0x30] sm:$0xff]
        %v1126 = vld [vmem:[#allocation2 + $0x38] sm:$0xff]
        %v1127 = vld [vmem:[#allocation2 + $0x40] sm:$0xff]
        %v1128 = vld [vmem:[#allocation2 + $0x48] sm:$0xff]
        %v1129 = vld [vmem:[#allocation2 + $0x50] sm:$0xff]
        %v1130 = vld [vmem:[#allocation2 + $0x58] sm:$0xff]
        %v1131 = vld [vmem:[#allocation2 + $0x60] sm:$0xff]
        %v1132 = vld [vmem:[#allocation2 + $0x68] sm:$0xff]
        %v1133 = vld [vmem:[#allocation2 + $0x70] sm:$0xff]
        %v1134 = vld [vmem:[#allocation2 + $0x78] sm:$0xff]
        %v1135 = vld [vmem:[#allocation2 + $0x80] sm:$0xff]
        %v1136 = vld [vmem:[#allocation2 + $0x88] sm:$0xff]
        %v1137 = vld [vmem:[#allocation2 + $0x90] sm:$0xff]
        %v1138 = vld [vmem:[#allocation2 + $0x98] sm:$0xff]
        %v1139 = vld [vmem:[#allocation2 + $0xa0] sm:$0xff]
        %v1140 = vld [vmem:[#allocation2 + $0xa8] sm:$0xff]
        %v1141 = vld [vmem:[#allocation2 + $0xb0] sm:$0xff]
        %v1142 = vld [vmem:[#allocation2 + $0xb8] sm:$0xff]
        %v1143 = vld [vmem:[#allocation2 + $0xc0] sm:$0xff]
        %v1144 = vld [vmem:[#allocation2 + $0xc8] sm:$0xff]
        %v1145 = vld [vmem:[#allocation2 + $0xd0] sm:$0xff]
        %v1146 = vld [vmem:[#allocation2 + $0xd8] sm:$0xff]
        %v1147 = vld [vmem:[#allocation2 + $0xe0] sm:$0xff]
        %v1148 = vld [vmem:[#allocation2 + $0xe8] sm:$0xff]
        %v1149 = vld [vmem:[#allocation2 + $0xf0] sm:$0xff]
        %v1150 = vld [vmem:[#allocation2 + $0xf8] sm:$0xff]
        %v1151 = vld [vmem:[#allocation2 + $0x100] sm:$0xff]
        %v1152 = vld [vmem:[#allocation2 + $0x108] sm:$0xff]
        %v1153 = vld [vmem:[#allocation2 + $0x110] sm:$0xff]
        %v1154 = vld [vmem:[#allocation2 + $0x118] sm:$0xff]
        %v1155 = vld [vmem:[#allocation2 + $0x120] sm:$0xff]
        %v1156 = vld [vmem:[#allocation2 + $0x128] sm:$0xff]
        %v1157 = vld [vmem:[#allocation2 + $0x130] sm:$0xff]
        %v1158 = vld [vmem:[#allocation2 + $0x138] sm:$0xff]
        %v1159 = vld [vmem:[#allocation2 + $0x140] sm:$0xff]
        %v1160 = vld [vmem:[#allocation2 + $0x148] sm:$0xff]
        %v1161 = vld [vmem:[#allocation2 + $0x150] sm:$0xff]
        %v1162 = vld [vmem:[#allocation2 + $0x158] sm:$0xff]
        %v1163 = vld [vmem:[#allocation2 + $0x160] sm:$0xff]
        %v1164 = vld [vmem:[#allocation2 + $0x168] sm:$0xff]
        %v1165 = vld [vmem:[#allocation2 + $0x170] sm:$0xff]
        %v1166 = vld [vmem:[#allocation2 + $0x178] sm:$0xff]
        %v1167 = vld [vmem:[#allocation2 + $0x180] sm:$0xff]
        %v1168 = vld [vmem:[#allocation2 + $0x188] sm:$0xff]
        %v1169 = vld [vmem:[#allocation2 + $0x190] sm:$0xff]
        %v1170 = vld [vmem:[#allocation2 + $0x198] sm:$0xff]
        %v1171 = vld [vmem:[#allocation2 + $0x1a0] sm:$0xff]
        %v1172 = vld [vmem:[#allocation2 + $0x1a8] sm:$0xff]
        %v1173 = vld [vmem:[#allocation2 + $0x1b0] sm:$0xff]
        %v1174 = vld [vmem:[#allocation2 + $0x1b8] sm:$0xff]
        %v1175 = vld [vmem:[#allocation2 + $0x1c0] sm:$0xff]
        %v1176 = vld [vmem:[#allocation2 + $0x1c8] sm:$0xff]
        %v1177 = vld [vmem:[#allocation2 + $0x1d0] sm:$0xff]
        %v1178 = vld [vmem:[#allocation2 + $0x1d8] sm:$0xff]
        %v1179 = vld [vmem:[#allocation2 + $0x1e0] sm:$0xff]
        %v1180 = vld [vmem:[#allocation2 + $0x1e8] sm:$0xff]
        %v1181 = vld [vmem:[#allocation2 + $0x1f0] sm:$0xff]
        %v1182 = vld [vmem:[#allocation2 + $0x1f8] sm:$0xff]
        %v1183 = vld [vmem:[%s2] sm:$0x1]
        %v1185 = vlaneseq
        %v1186 = vshrl.u32 %v1185, 7
        %v1187 = vsub.s32 0, %v1186
        %v1188 = vrot.slane %v1183, %v1187
        %v1190 = vadd.f32 %v1119, %v1188
        %v1191 = vadd.f32 %v1120, %v1188
        %v1192 = vadd.f32 %v1121, %v1188
        %v1193 = vadd.f32 %v1122, %v1188
        %v1194 = vadd.f32 %v1123, %v1188
        %v1195 = vadd.f32 %v1124, %v1188
        %v1196 = vadd.f32 %v1125, %v1188
        %v1197 = vadd.f32 %v1126, %v1188
        %v1198 = vadd.f32 %v1127, %v1188
        %v1199 = vadd.f32 %v1128, %v1188
        %v1200 = vadd.f32 %v1129, %v1188
        %v1201 = vadd.f32 %v1130, %v1188
        %v1202 = vadd.f32 %v1131, %v1188
        %v1203 = vadd.f32 %v1132, %v1188
        %v1204 = vadd.f32 %v1133, %v1188
        %v1205 = vadd.f32 %v1134, %v1188
        %v1206 = vadd.f32 %v1135, %v1188
        %v1207 = vadd.f32 %v1136, %v1188
        %v1208 = vadd.f32 %v1137, %v1188
        %v1209 = vadd.f32 %v1138, %v1188
        %v1210 = vadd.f32 %v1139, %v1188
        %v1211 = vadd.f32 %v1140, %v1188
        %v1212 = vadd.f32 %v1141, %v1188
        %v1213 = vadd.f32 %v1142, %v1188
        %v1214 = vadd.f32 %v1143, %v1188
        %v1215 = vadd.f32 %v1144, %v1188
        %v1216 = vadd.f32 %v1145, %v1188
        %v1217 = vadd.f32 %v1146, %v1188
        %v1218 = vadd.f32 %v1147, %v1188
        %v1219 = vadd.f32 %v1148, %v1188
        %v1220 = vadd.f32 %v1149, %v1188
        %v1221 = vadd.f32 %v1150, %v1188
        %v1222 = vadd.f32 %v1151, %v1188
        %v1223 = vadd.f32 %v1152, %v1188
        %v1224 = vadd.f32 %v1153, %v1188
        %v1225 = vadd.f32 %v1154, %v1188
        %v1226 = vadd.f32 %v1155, %v1188
        %v1227 = vadd.f32 %v1156, %v1188
        %v1228 = vadd.f32 %v1157, %v1188
        %v1229 = vadd.f32 %v1158, %v1188
        %v1230 = vadd.f32 %v1159, %v1188
        %v1231 = vadd.f32 %v1160, %v1188
        %v1232 = vadd.f32 %v1161, %v1188
        %v1233 = vadd.f32 %v1162, %v1188
        %v1234 = vadd.f32 %v1163, %v1188
        %v1235 = vadd.f32 %v1164, %v1188
        %v1236 = vadd.f32 %v1165, %v1188
        %v1237 = vadd.f32 %v1166, %v1188
        %v1238 = vadd.f32 %v1167, %v1188
        %v1239 = vadd.f32 %v1168, %v1188
        %v1240 = vadd.f32 %v1169, %v1188
        %v1241 = vadd.f32 %v1170, %v1188
        %v1242 = vadd.f32 %v1171, %v1188
        %v1243 = vadd.f32 %v1172, %v1188
        %v1244 = vadd.f32 %v1173, %v1188
        %v1245 = vadd.f32 %v1174, %v1188
        %v1246 = vadd.f32 %v1175, %v1188
        %v1247 = vadd.f32 %v1176, %v1188
        %v1248 = vadd.f32 %v1177, %v1188
        %v1249 = vadd.f32 %v1178, %v1188
        %v1250 = vadd.f32 %v1179, %v1188
        %v1251 = vadd.f32 %v1180, %v1188
        %v1252 = vadd.f32 %v1181, %v1188
        %v1253 = vadd.f32 %v1182, %v1188
        %v1254 = vmax.f32 %v1190, 0.0
        %v1255 = vmax.f32 %v1191, 0.0
        %v1256 = vmax.f32 %v1192, 0.0
        %v1257 = vmax.f32 %v1193, 0.0
        %v1258 = vmax.f32 %v1194, 0.0
        %v1259 = vmax.f32 %v1195, 0.0
        %v1260 = vmax.f32 %v1196, 0.0
        %v1261 = vmax.f32 %v1197, 0.0
        %v1262 = vmax.f32 %v1198, 0.0
        %v1263 = vmax.f32 %v1199, 0.0
        %v1264 = vmax.f32 %v1200, 0.0
        %v1265 = vmax.f32 %v1201, 0.0
        %v1266 = vmax.f32 %v1202, 0.0
        %v1267 = vmax.f32 %v1203, 0.0
        %v1268 = vmax.f32 %v1204, 0.0
        %v1269 = vmax.f32 %v1205, 0.0
        %v1270 = vmax.f32 %v1206, 0.0
        %v1271 = vmax.f32 %v1207, 0.0
        %v1272 = vmax.f32 %v1208, 0.0
        %v1273 = vmax.f32 %v1209, 0.0
        %v1274 = vmax.f32 %v1210, 0.0
        %v1275 = vmax.f32 %v1211, 0.0
        %v1276 = vmax.f32 %v1212, 0.0
        %v1277 = vmax.f32 %v1213, 0.0
        %v1278 = vmax.f32 %v1214, 0.0
        %v1279 = vmax.f32 %v1215, 0.0
        %v1280 = vmax.f32 %v1216, 0.0
        %v1281 = vmax.f32 %v1217, 0.0
        %v1282 = vmax.f32 %v1218, 0.0
        %v1283 = vmax.f32 %v1219, 0.0
        %v1284 = vmax.f32 %v1220, 0.0
        %v1285 = vmax.f32 %v1221, 0.0
        %v1286 = vmax.f32 %v1222, 0.0
        %v1287 = vmax.f32 %v1223, 0.0
        %v1288 = vmax.f32 %v1224, 0.0
        %v1289 = vmax.f32 %v1225, 0.0
        %v1290 = vmax.f32 %v1226, 0.0
        %v1291 = vmax.f32 %v1227, 0.0
        %v1292 = vmax.f32 %v1228, 0.0
        %v1293 = vmax.f32 %v1229, 0.0
        %v1294 = vmax.f32 %v1230, 0.0
        %v1295 = vmax.f32 %v1231, 0.0
        %v1296 = vmax.f32 %v1232, 0.0
        %v1297 = vmax.f32 %v1233, 0.0
        %v1298 = vmax.f32 %v1234, 0.0
        %v1299 = vmax.f32 %v1235, 0.0
        %v1300 = vmax.f32 %v1236, 0.0
        %v1301 = vmax.f32 %v1237, 0.0
        %v1302 = vmax.f32 %v1238, 0.0
        %v1303 = vmax.f32 %v1239, 0.0
        %v1304 = vmax.f32 %v1240, 0.0
        %v1305 = vmax.f32 %v1241, 0.0
        %v1306 = vmax.f32 %v1242, 0.0
        %v1307 = vmax.f32 %v1243, 0.0
        %v1308 = vmax.f32 %v1244, 0.0
        %v1309 = vmax.f32 %v1245, 0.0
        %v1310 = vmax.f32 %v1246, 0.0
        %v1311 = vmax.f32 %v1247, 0.0
        %v1312 = vmax.f32 %v1248, 0.0
        %v1313 = vmax.f32 %v1249, 0.0
        %v1314 = vmax.f32 %v1250, 0.0
        %v1315 = vmax.f32 %v1251, 0.0
        %v1316 = vmax.f32 %v1252, 0.0
        %v1317 = vmax.f32 %v1253, 0.0
        %v1318 = vpack.c.bf16 %v1255, %v1254
        %v1319 = vpack.c.bf16 %v1257, %v1256
        %v1320 = vpack.c.bf16 %v1259, %v1258
        %v1321 = vpack.c.bf16 %v1261, %v1260
        %v1322 = vpack.c.bf16 %v1263, %v1262
        %v1323 = vpack.c.bf16 %v1265, %v1264
        %v1324 = vpack.c.bf16 %v1267, %v1266
        %v1325 = vpack.c.bf16 %v1269, %v1268
        %v1326 = vpack.c.bf16 %v1271, %v1270
        %v1327 = vpack.c.bf16 %v1273, %v1272
        %v1328 = vpack.c.bf16 %v1275, %v1274
        %v1329 = vpack.c.bf16 %v1277, %v1276
        %v1330 = vpack.c.bf16 %v1279, %v1278
        %v1331 = vpack.c.bf16 %v1281, %v1280
        %v1332 = vpack.c.bf16 %v1283, %v1282
        %v1333 = vpack.c.bf16 %v1285, %v1284
        %v1334 = vpack.c.bf16 %v1287, %v1286
        %v1335 = vpack.c.bf16 %v1289, %v1288
        %v1336 = vpack.c.bf16 %v1291, %v1290
        %v1337 = vpack.c.bf16 %v1293, %v1292
        %v1338 = vpack.c.bf16 %v1295, %v1294
        %v1339 = vpack.c.bf16 %v1297, %v1296
        %v1340 = vpack.c.bf16 %v1299, %v1298
        %v1341 = vpack.c.bf16 %v1301, %v1300
        %v1342 = vpack.c.bf16 %v1303, %v1302
        %v1343 = vpack.c.bf16 %v1305, %v1304
        %v1344 = vpack.c.bf16 %v1307, %v1306
        %v1345 = vpack.c.bf16 %v1309, %v1308
        %v1346 = vpack.c.bf16 %v1311, %v1310
        %v1347 = vpack.c.bf16 %v1313, %v1312
        %v1348 = vpack.c.bf16 %v1315, %v1314
        %v1349 = vpack.c.bf16 %v1317, %v1316
        %v1382 = vunpack.c.l.b16 %v1318
        %v1383 = vunpack.c.h.b16 %v1318
        %v1384 = vunpack.c.l.b16 %v1319
        %v1385 = vunpack.c.h.b16 %v1319
        %v1386 = vunpack.c.l.b16 %v1320
        %v1387 = vunpack.c.h.b16 %v1320
        %v1388 = vunpack.c.l.b16 %v1321
        %v1389 = vunpack.c.h.b16 %v1321
        %v1390 = vunpack.c.l.b16 %v1322
        %v1391 = vunpack.c.h.b16 %v1322
        %v1392 = vunpack.c.l.b16 %v1323
        %v1393 = vunpack.c.h.b16 %v1323
        %v1394 = vunpack.c.l.b16 %v1324
        %v1395 = vunpack.c.h.b16 %v1324
        %v1396 = vunpack.c.l.b16 %v1325
        %v1397 = vunpack.c.h.b16 %v1325
        %v1398 = vunpack.c.l.b16 %v1326
        %v1399 = vunpack.c.h.b16 %v1326
        %v1400 = vunpack.c.l.b16 %v1327
        %v1401 = vunpack.c.h.b16 %v1327
        %v1402 = vunpack.c.l.b16 %v1328
        %v1403 = vunpack.c.h.b16 %v1328
        %v1404 = vunpack.c.l.b16 %v1329
        %v1405 = vunpack.c.h.b16 %v1329
        %v1406 = vunpack.c.l.b16 %v1330
        %v1407 = vunpack.c.h.b16 %v1330
        %v1408 = vunpack.c.l.b16 %v1331
        %v1409 = vunpack.c.h.b16 %v1331
        %v1410 = vunpack.c.l.b16 %v1332
        %v1411 = vunpack.c.h.b16 %v1332
        %v1412 = vunpack.c.l.b16 %v1333
        %v1413 = vunpack.c.h.b16 %v1333
        %v1414 = vunpack.c.l.b16 %v1334
        %v1415 = vunpack.c.h.b16 %v1334
        %v1416 = vunpack.c.l.b16 %v1335
        %v1417 = vunpack.c.h.b16 %v1335
        %v1418 = vunpack.c.l.b16 %v1336
        %v1419 = vunpack.c.h.b16 %v1336
        %v1420 = vunpack.c.l.b16 %v1337
        %v1421 = vunpack.c.h.b16 %v1337
        %v1422 = vunpack.c.l.b16 %v1338
        %v1423 = vunpack.c.h.b16 %v1338
        %v1424 = vunpack.c.l.b16 %v1339
        %v1425 = vunpack.c.h.b16 %v1339
        %v1426 = vunpack.c.l.b16 %v1340
        %v1427 = vunpack.c.h.b16 %v1340
        %v1428 = vunpack.c.l.b16 %v1341
        %v1429 = vunpack.c.h.b16 %v1341
        %v1430 = vunpack.c.l.b16 %v1342
        %v1431 = vunpack.c.h.b16 %v1342
        %v1432 = vunpack.c.l.b16 %v1343
        %v1433 = vunpack.c.h.b16 %v1343
        %v1434 = vunpack.c.l.b16 %v1344
        %v1435 = vunpack.c.h.b16 %v1344
        %v1436 = vunpack.c.l.b16 %v1345
        %v1437 = vunpack.c.h.b16 %v1345
        %v1438 = vunpack.c.l.b16 %v1346
        %v1439 = vunpack.c.h.b16 %v1346
        %v1440 = vunpack.c.l.b16 %v1347
        %v1441 = vunpack.c.h.b16 %v1347
        %v1442 = vunpack.c.l.b16 %v1348
        %v1443 = vunpack.c.h.b16 %v1348
        %v1444 = vunpack.c.l.b16 %v1349
        %v1445 = vunpack.c.h.b16 %v1349
        %v1446 = vpack.c.b16 %v1382, %v1382
        %v1447 = vpack.c.b16 %v1383, %v1383
        %v1448 = vpack.c.b16 %v1384, %v1384
        %v1449 = vpack.c.b16 %v1385, %v1385
        %v1450 = vpack.c.b16 %v1386, %v1386
        %v1451 = vpack.c.b16 %v1387, %v1387
        %v1452 = vpack.c.b16 %v1388, %v1388
        %v1453 = vpack.c.b16 %v1389, %v1389
        %v1454 = vpack.c.b16 %v1390, %v1390
        %v1455 = vpack.c.b16 %v1391, %v1391
        %v1456 = vpack.c.b16 %v1392, %v1392
        %v1457 = vpack.c.b16 %v1393, %v1393
        %v1458 = vpack.c.b16 %v1394, %v1394
        %v1459 = vpack.c.b16 %v1395, %v1395
        %v1460 = vpack.c.b16 %v1396, %v1396
        %v1461 = vpack.c.b16 %v1397, %v1397
        %v1462 = vpack.c.b16 %v1398, %v1398
        %v1463 = vpack.c.b16 %v1399, %v1399
        %v1464 = vpack.c.b16 %v1400, %v1400
        %v1465 = vpack.c.b16 %v1401, %v1401
        %v1466 = vpack.c.b16 %v1402, %v1402
        %v1467 = vpack.c.b16 %v1403, %v1403
        %v1468 = vpack.c.b16 %v1404, %v1404
        %v1469 = vpack.c.b16 %v1405, %v1405
        %v1470 = vpack.c.b16 %v1406, %v1406
        %v1471 = vpack.c.b16 %v1407, %v1407
        %v1472 = vpack.c.b16 %v1408, %v1408
        %v1473 = vpack.c.b16 %v1409, %v1409
        %v1474 = vpack.c.b16 %v1410, %v1410
        %v1475 = vpack.c.b16 %v1411, %v1411
        %v1476 = vpack.c.b16 %v1412, %v1412
        %v1477 = vpack.c.b16 %v1413, %v1413
        %v1478 = vpack.c.b16 %v1414, %v1414
        %v1479 = vpack.c.b16 %v1415, %v1415
        %v1480 = vpack.c.b16 %v1416, %v1416
        %v1481 = vpack.c.b16 %v1417, %v1417
        %v1482 = vpack.c.b16 %v1418, %v1418
        %v1483 = vpack.c.b16 %v1419, %v1419
        %v1484 = vpack.c.b16 %v1420, %v1420
        %v1485 = vpack.c.b16 %v1421, %v1421
        %v1486 = vpack.c.b16 %v1422, %v1422
        %v1487 = vpack.c.b16 %v1423, %v1423
        %v1488 = vpack.c.b16 %v1424, %v1424
        %v1489 = vpack.c.b16 %v1425, %v1425
        %v1490 = vpack.c.b16 %v1426, %v1426
        %v1491 = vpack.c.b16 %v1427, %v1427
        %v1492 = vpack.c.b16 %v1428, %v1428
        %v1493 = vpack.c.b16 %v1429, %v1429
        %v1494 = vpack.c.b16 %v1430, %v1430
        %v1495 = vpack.c.b16 %v1431, %v1431
        %v1496 = vpack.c.b16 %v1432, %v1432
        %v1497 = vpack.c.b16 %v1433, %v1433
        %v1498 = vpack.c.b16 %v1434, %v1434
        %v1499 = vpack.c.b16 %v1435, %v1435
        %v1500 = vpack.c.b16 %v1436, %v1436
        %v1501 = vpack.c.b16 %v1437, %v1437
        %v1502 = vpack.c.b16 %v1438, %v1438
        %v1503 = vpack.c.b16 %v1439, %v1439
        %v1504 = vpack.c.b16 %v1440, %v1440
        %v1505 = vpack.c.b16 %v1441, %v1441
        %v1506 = vpack.c.b16 %v1442, %v1442
        %v1507 = vpack.c.b16 %v1443, %v1443
        %v1508 = vpack.c.b16 %v1444, %v1444
        %v1509 = vpack.c.b16 %v1445, %v1445
        %vm1574 = vcmask 257024
        %1575 = vst.msk [vmem:[%s217] sm:$0xf] %vm1574, %v1446
        %1576 = vst.msk [vmem:[%s217 + $0x4] sm:$0xf] %vm1574, %v1447
        %1577 = vst.msk [vmem:[%s217 + $0x8] sm:$0xf] %vm1574, %v1448
        %1578 = vst.msk [vmem:[%s217 + $0xc] sm:$0xf] %vm1574, %v1449
        %1579 = vst.msk [vmem:[%s217 + $0x10] sm:$0xf] %vm1574, %v1450
        %1580 = vst.msk [vmem:[%s217 + $0x14] sm:$0xf] %vm1574, %v1451
        %1581 = vst.msk [vmem:[%s217 + $0x18] sm:$0xf] %vm1574, %v1452
        %1582 = vst.msk [vmem:[%s217 + $0x1c] sm:$0xf] %vm1574, %v1453
        %1583 = vst.msk [vmem:[%s217 + $0x20] sm:$0xf] %vm1574, %v1454
        %1584 = vst.msk [vmem:[%s217 + $0x24] sm:$0xf] %vm1574, %v1455
        %1585 = vst.msk [vmem:[%s217 + $0x28] sm:$0xf] %vm1574, %v1456
        %1586 = vst.msk [vmem:[%s217 + $0x2c] sm:$0xf] %vm1574, %v1457
        %1587 = vst.msk [vmem:[%s217 + $0x30] sm:$0xf] %vm1574, %v1458
        %1588 = vst.msk [vmem:[%s217 + $0x34] sm:$0xf] %vm1574, %v1459
        %1589 = vst.msk [vmem:[%s217 + $0x38] sm:$0xf] %vm1574, %v1460
        %1590 = vst.msk [vmem:[%s217 + $0x3c] sm:$0xf] %vm1574, %v1461
        %1591 = vst.msk [vmem:[%s217 + $0x40] sm:$0xf] %vm1574, %v1462
        %1592 = vst.msk [vmem:[%s217 + $0x44] sm:$0xf] %vm1574, %v1463
        %1593 = vst.msk [vmem:[%s217 + $0x48] sm:$0xf] %vm1574, %v1464
        %1594 = vst.msk [vmem:[%s217 + $0x4c] sm:$0xf] %vm1574, %v1465
        %1595 = vst.msk [vmem:[%s217 + $0x50] sm:$0xf] %vm1574, %v1466
        %1596 = vst.msk [vmem:[%s217 + $0x54] sm:$0xf] %vm1574, %v1467
        %1597 = vst.msk [vmem:[%s217 + $0x58] sm:$0xf] %vm1574, %v1468
        %1598 = vst.msk [vmem:[%s217 + $0x5c] sm:$0xf] %vm1574, %v1469
        %1599 = vst.msk [vmem:[%s217 + $0x60] sm:$0xf] %vm1574, %v1470
        %1600 = vst.msk [vmem:[%s217 + $0x64] sm:$0xf] %vm1574, %v1471
        %1601 = vst.msk [vmem:[%s217 + $0x68] sm:$0xf] %vm1574, %v1472
        %1602 = vst.msk [vmem:[%s217 + $0x6c] sm:$0xf] %vm1574, %v1473
        %1603 = vst.msk [vmem:[%s217 + $0x70] sm:$0xf] %vm1574, %v1474
        %1604 = vst.msk [vmem:[%s217 + $0x74] sm:$0xf] %vm1574, %v1475
        %1605 = vst.msk [vmem:[%s217 + $0x78] sm:$0xf] %vm1574, %v1476
        %1606 = vst.msk [vmem:[%s217 + $0x7c] sm:$0xf] %vm1574, %v1477
        %1607 = vst.msk [vmem:[%s217 + $0x80] sm:$0xf] %vm1574, %v1478
        %1608 = vst.msk [vmem:[%s217 + $0x84] sm:$0xf] %vm1574, %v1479
        %1609 = vst.msk [vmem:[%s217 + $0x88] sm:$0xf] %vm1574, %v1480
        %1610 = vst.msk [vmem:[%s217 + $0x8c] sm:$0xf] %vm1574, %v1481
        %1611 = vst.msk [vmem:[%s217 + $0x90] sm:$0xf] %vm1574, %v1482
        %1612 = vst.msk [vmem:[%s217 + $0x94] sm:$0xf] %vm1574, %v1483
        %1613 = vst.msk [vmem:[%s217 + $0x98] sm:$0xf] %vm1574, %v1484
        %1614 = vst.msk [vmem:[%s217 + $0x9c] sm:$0xf] %vm1574, %v1485
        %1615 = vst.msk [vmem:[%s217 + $0xa0] sm:$0xf] %vm1574, %v1486
        %1616 = vst.msk [vmem:[%s217 + $0xa4] sm:$0xf] %vm1574, %v1487
        %1617 = vst.msk [vmem:[%s217 + $0xa8] sm:$0xf] %vm1574, %v1488
        %1618 = vst.msk [vmem:[%s217 + $0xac] sm:$0xf] %vm1574, %v1489
        %1619 = vst.msk [vmem:[%s217 + $0xb0] sm:$0xf] %vm1574, %v1490
        %1620 = vst.msk [vmem:[%s217 + $0xb4] sm:$0xf] %vm1574, %v1491
        %1621 = vst.msk [vmem:[%s217 + $0xb8] sm:$0xf] %vm1574, %v1492
        %1622 = vst.msk [vmem:[%s217 + $0xbc] sm:$0xf] %vm1574, %v1493
        %1623 = vst.msk [vmem:[%s217 + $0xc0] sm:$0xf] %vm1574, %v1494
        %1624 = vst.msk [vmem:[%s217 + $0xc4] sm:$0xf] %vm1574, %v1495
        %1625 = vst.msk [vmem:[%s217 + $0xc8] sm:$0xf] %vm1574, %v1496
        %1626 = vst.msk [vmem:[%s217 + $0xcc] sm:$0xf] %vm1574, %v1497
        %1627 = vst.msk [vmem:[%s217 + $0xd0] sm:$0xf] %vm1574, %v1498
        %1628 = vst.msk [vmem:[%s217 + $0xd4] sm:$0xf] %vm1574, %v1499
        %1629 = vst.msk [vmem:[%s217 + $0xd8] sm:$0xf] %vm1574, %v1500
        %1630 = vst.msk [vmem:[%s217 + $0xdc] sm:$0xf] %vm1574, %v1501
        %1631 = vst.msk [vmem:[%s217 + $0xe0] sm:$0xf] %vm1574, %v1502
        %1632 = vst.msk [vmem:[%s217 + $0xe4] sm:$0xf] %vm1574, %v1503
        %1633 = vst.msk [vmem:[%s217 + $0xe8] sm:$0xf] %vm1574, %v1504
        %1634 = vst.msk [vmem:[%s217 + $0xec] sm:$0xf] %vm1574, %v1505
        %1635 = vst.msk [vmem:[%s217 + $0xf0] sm:$0xf] %vm1574, %v1506
        %1636 = vst.msk [vmem:[%s217 + $0xf4] sm:$0xf] %vm1574, %v1507
        %1637 = vst.msk [vmem:[%s217 + $0xf8] sm:$0xf] %vm1574, %v1508
        %1638 = vst.msk [vmem:[%s217 + $0xfc] sm:$0xf] %vm1574, %v1509
      $region40: #{encoder_forward.4} parent=31 // pred_fallthru
        _
      %s1639 = smul.u32 64, %s18
      %p1640 = scmp.lt.s32.totalorder %s1639, 255
      %s1641 = scalar_select %p1640, %s1639, 255
      %s1642 = smul.addr %s1641, 4
      %s1643 = scalar_lea.vmem %s3, %s1642
      // Predicated region
      $region41: #{encoder_forward.4} parent=31 // pred_check
        %p1644 = pneg %p119
      $region42: #{encoder_forward.4} parent=31 // pred_check_branch
        %1646 = sbr.rel (%p1644) target = $region44
      $region43: #{encoder_forward.4} parent=31 // pred_region
        %s1647 = smul.u32 64, %s18
      $region44: #{encoder_forward.4} parent=31 // pred_fallthru
        _
    $region32: #{encoder_forward.4} parent=5 // pred_fallthru
      _
    %p1648 = scmp.le.s32.totalorder 2, %s9
    // Predicated region
    $region45: #{encoder_forward.4} parent=5 // pred_check
      %p1649 = pneg %p1648
    $region46: #{encoder_forward.4} parent=5 // pred_check_branch
      %1651 = sbr.rel (%p1649) target = $region48
    $region47: #{encoder_forward.4} parent=5 // pred_region
      %s1652 = ssub.s32 %s9, 2
      // Predicated region
      $region49: #{encoder_forward.4} parent=47 // pred_check
        %p1653 = pneg %p125
      $region50: #{encoder_forward.4} parent=47 // pred_check_branch
        %1655 = sbr.rel (%p1653) target = $region52
      $region51: #{encoder_forward.4} parent=47 // pred_region
        %s1656 = smul.u32 64, %s20
        %p1657 = scmp.lt.s32.totalorder %s1656, 255
        %s1658 = scalar_select %p1657, %s1656, 255
        %s1659 = smul.addr %s1658, 4
        %s1660 = scalar_lea.vmem %s3, %s1659
      $region52: #{encoder_forward.4} parent=47 // pred_fallthru
        _
    $region48: #{encoder_forward.4} parent=5 // pred_fallthru
      _
  $region6: #{encoder_forward.4} parent=0 // loop_footer
    %s13 = sadd.s32 1, %s9
  $region7: #{encoder_forward.4} parent=0 // loop_footer_branch
    %8 = sbr.rel target = $region3
  $region8: #{encoder_forward.4} parent=0 // loop_exit
    _

// kernel: encoder_forward.5
$region0: #{encoder_forward.5}
  #allocation0 [shape = 'u32[]', space=smem, size = 0x4, offset = 0x4, fixed_abs, tag = 'smem constant byte address 0x4 - core index']
  #allocation1 [shape = 'u32[144,128]{1,0:T(1,128)}', space=vmem, size = 0x12000, scoped, tag = 'internal scratch']
  #allocation2 [shape = 'f32[392,64]{1,0:T(8,128)}', space=vmem, size = 0x31000, scoped, tag = 'scratch operand']
  %s0 = inlined_call_operand.vmem [shape: bf16[392,512], index: 0, kind: input, shape index: {}]
  %s1 = inlined_call_operand.vmem [shape: bf16[512,64], index: 1, kind: input, shape index: {}]
  %s2 = inlined_call_operand.vmem [shape: f32[1,64], index: 2, kind: input, shape index: {}]
  %s3 = inlined_call_operand.vmem [shape: bf16[392,64], index: 3, kind: output, shape index: {}]
  %s4 = sld [smem:[#allocation0]]
  $region30: #{encoder_forward.5} parent=0
    _
  %s6 = ssub.s32 1, %s4
  %s7 = scalar_select 0, %s6, %s4
  // Predicated region
  $region2: #{encoder_forward.5} parent=0 // pred_check
    _
  $region3: #{encoder_forward.5} parent=0 // pred_check_branch
    %9 = sbr.rel (0) target = $region5
  $region4: #{encoder_forward.5} parent=0 // pred_region
    _
  $region5: #{encoder_forward.5} parent=0 // pred_fallthru
    _
  // Predicated region
  $region6: #{encoder_forward.5} parent=0 // pred_check
    _
  $region7: #{encoder_forward.5} parent=0 // pred_check_branch
    %11 = sbr.rel (0) target = $region9
  $region8: #{encoder_forward.5} parent=0 // pred_region
    _
  $region9: #{encoder_forward.5} parent=0 // pred_fallthru
    _
  // Predicated region
  $region10: #{encoder_forward.5} parent=0 // pred_check
    _
  $region11: #{encoder_forward.5} parent=0 // pred_check_branch
    %13 = sbr.rel (0) target = $region13
  $region12: #{encoder_forward.5} parent=0 // pred_region
    _
  $region13: #{encoder_forward.5} parent=0 // pred_fallthru
    _
  %p15 = scmp.eq.s32.totalorder 0, 0
  // Predicated region
  $region14: #{encoder_forward.5} parent=0 // pred_check
    %p16 = pneg %p15
  $region15: #{encoder_forward.5} parent=0 // pred_check_branch
    %18 = sbr.rel (%p16) target = $region17
  $region16: #{encoder_forward.5} parent=0 // pred_region
    %vm19 = vcmask 523264
    %20 = vst.msk [vmem:[#allocation2] sm:$0xff] %vm19, 0.0
    %21 = vst.msk [vmem:[#allocation2 + $0x8] sm:$0xff] %vm19, 0.0
    %22 = vst.msk [vmem:[#allocation2 + $0x10] sm:$0xff] %vm19, 0.0
    %23 = vst.msk [vmem:[#allocation2 + $0x18] sm:$0xff] %vm19, 0.0
    %24 = vst.msk [vmem:[#allocation2 + $0x20] sm:$0xff] %vm19, 0.0
    %25 = vst.msk [vmem:[#allocation2 + $0x28] sm:$0xff] %vm19, 0.0
    %26 = vst.msk [vmem:[#allocation2 + $0x30] sm:$0xff] %vm19, 0.0
    %27 = vst.msk [vmem:[#allocation2 + $0x38] sm:$0xff] %vm19, 0.0
    %28 = vst.msk [vmem:[#allocation2 + $0x40] sm:$0xff] %vm19, 0.0
    %29 = vst.msk [vmem:[#allocation2 + $0x48] sm:$0xff] %vm19, 0.0
    %30 = vst.msk [vmem:[#allocation2 + $0x50] sm:$0xff] %vm19, 0.0
    %31 = vst.msk [vmem:[#allocation2 + $0x58] sm:$0xff] %vm19, 0.0
    %32 = vst.msk [vmem:[#allocation2 + $0x60] sm:$0xff] %vm19, 0.0
    %33 = vst.msk [vmem:[#allocation2 + $0x68] sm:$0xff] %vm19, 0.0
    %34 = vst.msk [vmem:[#allocation2 + $0x70] sm:$0xff] %vm19, 0.0
    %35 = vst.msk [vmem:[#allocation2 + $0x78] sm:$0xff] %vm19, 0.0
    %36 = vst.msk [vmem:[#allocation2 + $0x80] sm:$0xff] %vm19, 0.0
    %37 = vst.msk [vmem:[#allocation2 + $0x88] sm:$0xff] %vm19, 0.0
    %38 = vst.msk [vmem:[#allocation2 + $0x90] sm:$0xff] %vm19, 0.0
    %39 = vst.msk [vmem:[#allocation2 + $0x98] sm:$0xff] %vm19, 0.0
    %40 = vst.msk [vmem:[#allocation2 + $0xa0] sm:$0xff] %vm19, 0.0
    %41 = vst.msk [vmem:[#allocation2 + $0xa8] sm:$0xff] %vm19, 0.0
    %42 = vst.msk [vmem:[#allocation2 + $0xb0] sm:$0xff] %vm19, 0.0
    %43 = vst.msk [vmem:[#allocation2 + $0xb8] sm:$0xff] %vm19, 0.0
    %44 = vst.msk [vmem:[#allocation2 + $0xc0] sm:$0xff] %vm19, 0.0
    %45 = vst.msk [vmem:[#allocation2 + $0xc8] sm:$0xff] %vm19, 0.0
    %46 = vst.msk [vmem:[#allocation2 + $0xd0] sm:$0xff] %vm19, 0.0
    %47 = vst.msk [vmem:[#allocation2 + $0xd8] sm:$0xff] %vm19, 0.0
    %48 = vst.msk [vmem:[#allocation2 + $0xe0] sm:$0xff] %vm19, 0.0
    %49 = vst.msk [vmem:[#allocation2 + $0xe8] sm:$0xff] %vm19, 0.0
    %50 = vst.msk [vmem:[#allocation2 + $0xf0] sm:$0xff] %vm19, 0.0
    %51 = vst.msk [vmem:[#allocation2 + $0xf8] sm:$0xff] %vm19, 0.0
    %52 = vst.msk [vmem:[#allocation2 + $0x100] sm:$0xff] %vm19, 0.0
    %53 = vst.msk [vmem:[#allocation2 + $0x108] sm:$0xff] %vm19, 0.0
    %54 = vst.msk [vmem:[#allocation2 + $0x110] sm:$0xff] %vm19, 0.0
    %55 = vst.msk [vmem:[#allocation2 + $0x118] sm:$0xff] %vm19, 0.0
    %56 = vst.msk [vmem:[#allocation2 + $0x120] sm:$0xff] %vm19, 0.0
    %57 = vst.msk [vmem:[#allocation2 + $0x128] sm:$0xff] %vm19, 0.0
    %58 = vst.msk [vmem:[#allocation2 + $0x130] sm:$0xff] %vm19, 0.0
    %59 = vst.msk [vmem:[#allocation2 + $0x138] sm:$0xff] %vm19, 0.0
    %60 = vst.msk [vmem:[#allocation2 + $0x140] sm:$0xff] %vm19, 0.0
    %61 = vst.msk [vmem:[#allocation2 + $0x148] sm:$0xff] %vm19, 0.0
    %62 = vst.msk [vmem:[#allocation2 + $0x150] sm:$0xff] %vm19, 0.0
    %63 = vst.msk [vmem:[#allocation2 + $0x158] sm:$0xff] %vm19, 0.0
    %64 = vst.msk [vmem:[#allocation2 + $0x160] sm:$0xff] %vm19, 0.0
    %65 = vst.msk [vmem:[#allocation2 + $0x168] sm:$0xff] %vm19, 0.0
    %66 = vst.msk [vmem:[#allocation2 + $0x170] sm:$0xff] %vm19, 0.0
    %67 = vst.msk [vmem:[#allocation2 + $0x178] sm:$0xff] %vm19, 0.0
    %68 = vst.msk [vmem:[#allocation2 + $0x180] sm:$0xff] %vm19, 0.0
  $region17: #{encoder_forward.5} parent=0 // pred_fallthru
    _
  %v69 = vld [vmem:[#allocation2] sm:$0xff]
  %v70 = vld [vmem:[#allocation2 + $0x8] sm:$0xff]
  %v71 = vld [vmem:[#allocation2 + $0x10] sm:$0xff]
  %v72 = vld [vmem:[#allocation2 + $0x18] sm:$0xff]
  %v73 = vld [vmem:[#allocation2 + $0x20] sm:$0xff]
  %v74 = vld [vmem:[#allocation2 + $0x28] sm:$0xff]
  %v75 = vld [vmem:[#allocation2 + $0x30] sm:$0xff]
  %v76 = vld [vmem:[#allocation2 + $0x38] sm:$0xff]
  %v77 = vld [vmem:[#allocation2 + $0x40] sm:$0xff]
  %v78 = vld [vmem:[#allocation2 + $0x48] sm:$0xff]
  %v79 = vld [vmem:[#allocation2 + $0x50] sm:$0xff]
  %v80 = vld [vmem:[#allocation2 + $0x58] sm:$0xff]
  %v81 = vld [vmem:[#allocation2 + $0x60] sm:$0xff]
  %v82 = vld [vmem:[#allocation2 + $0x68] sm:$0xff]
  %v83 = vld [vmem:[#allocation2 + $0x70] sm:$0xff]
  %v84 = vld [vmem:[#allocation2 + $0x78] sm:$0xff]
  %v85 = vld [vmem:[#allocation2 + $0x80] sm:$0xff]
  %v86 = vld [vmem:[#allocation2 + $0x88] sm:$0xff]
  %v87 = vld [vmem:[#allocation2 + $0x90] sm:$0xff]
  %v88 = vld [vmem:[#allocation2 + $0x98] sm:$0xff]
  %v89 = vld [vmem:[#allocation2 + $0xa0] sm:$0xff]
  %v90 = vld [vmem:[#allocation2 + $0xa8] sm:$0xff]
  %v91 = vld [vmem:[#allocation2 + $0xb0] sm:$0xff]
  %v92 = vld [vmem:[#allocation2 + $0xb8] sm:$0xff]
  %v93 = vld [vmem:[#allocation2 + $0xc0] sm:$0xff]
  %v94 = vld [vmem:[#allocation2 + $0xc8] sm:$0xff]
  %v95 = vld [vmem:[#allocation2 + $0xd0] sm:$0xff]
  %v96 = vld [vmem:[#allocation2 + $0xd8] sm:$0xff]
  %v97 = vld [vmem:[#allocation2 + $0xe0] sm:$0xff]
  %v98 = vld [vmem:[#allocation2 + $0xe8] sm:$0xff]
  %v99 = vld [vmem:[#allocation2 + $0xf0] sm:$0xff]
  %v100 = vld [vmem:[#allocation2 + $0xf8] sm:$0xff]
  %v101 = vld [vmem:[#allocation2 + $0x100] sm:$0xff]
  %v102 = vld [vmem:[#allocation2 + $0x108] sm:$0xff]
  %v103 = vld [vmem:[#allocation2 + $0x110] sm:$0xff]
  %v104 = vld [vmem:[#allocation2 + $0x118] sm:$0xff]
  %v105 = vld [vmem:[#allocation2 + $0x120] sm:$0xff]
  %v106 = vld [vmem:[#allocation2 + $0x128] sm:$0xff]
  %v107 = vld [vmem:[#allocation2 + $0x130] sm:$0xff]
  %v108 = vld [vmem:[#allocation2 + $0x138] sm:$0xff]
  %v109 = vld [vmem:[#allocation2 + $0x140] sm:$0xff]
  %v110 = vld [vmem:[#allocation2 + $0x148] sm:$0xff]
  %v111 = vld [vmem:[#allocation2 + $0x150] sm:$0xff]
  %v112 = vld [vmem:[#allocation2 + $0x158] sm:$0xff]
  %v113 = vld [vmem:[#allocation2 + $0x160] sm:$0xff]
  %v114 = vld [vmem:[#allocation2 + $0x168] sm:$0xff]
  %v115 = vld [vmem:[#allocation2 + $0x170] sm:$0xff]
  %v116 = vld [vmem:[#allocation2 + $0x178] sm:$0xff]
  %v117 = vld [vmem:[#allocation2 + $0x180] sm:$0xff]
  %v118 = vld [vmem:[%s0] sm:$0xff]
  %v119 = vld [vmem:[%s0 + $0x8] sm:$0xff]
  %v120 = vld [vmem:[%s0 + $0x10] sm:$0xff]
  %v121 = vld [vmem:[%s0 + $0x18] sm:$0xff]
  %v122 = vld [vmem:[%s0 + $0x20] sm:$0xff]
  %v123 = vld [vmem:[%s0 + $0x28] sm:$0xff]
  %v124 = vld [vmem:[%s0 + $0x30] sm:$0xff]
  %v125 = vld [vmem:[%s0 + $0x38] sm:$0xff]
  %v126 = vld [vmem:[%s0 + $0x40] sm:$0xff]
  %v127 = vld [vmem:[%s0 + $0x48] sm:$0xff]
  %v128 = vld [vmem:[%s0 + $0x50] sm:$0xff]
  %v129 = vld [vmem:[%s0 + $0x58] sm:$0xff]
  %v130 = vld [vmem:[%s0 + $0x60] sm:$0xff]
  %v131 = vld [vmem:[%s0 + $0x68] sm:$0xff]
  %v132 = vld [vmem:[%s0 + $0x70] sm:$0xff]
  %v133 = vld [vmem:[%s0 + $0x78] sm:$0xff]
  %v134 = vld [vmem:[%s0 + $0x80] sm:$0xff]
  %v135 = vld [vmem:[%s0 + $0x88] sm:$0xff]
  %v136 = vld [vmem:[%s0 + $0x90] sm:$0xff]
  %v137 = vld [vmem:[%s0 + $0x98] sm:$0xff]
  %v138 = vld [vmem:[%s0 + $0xa0] sm:$0xff]
  %v139 = vld [vmem:[%s0 + $0xa8] sm:$0xff]
  %v140 = vld [vmem:[%s0 + $0xb0] sm:$0xff]
  %v141 = vld [vmem:[%s0 + $0xb8] sm:$0xff]
  %v142 = vld [vmem:[%s0 + $0xc0] sm:$0xff]
  %v143 = vld [vmem:[%s0 + $0xc8] sm:$0xff]
  %v144 = vld [vmem:[%s0 + $0xd0] sm:$0xff]
  %v145 = vld [vmem:[%s0 + $0xd8] sm:$0xff]
  %v146 = vld [vmem:[%s0 + $0xe0] sm:$0xff]
  %v147 = vld [vmem:[%s0 + $0xe8] sm:$0xff]
  %v148 = vld [vmem:[%s0 + $0xf0] sm:$0xff]
  %v149 = vld [vmem:[%s0 + $0xf8] sm:$0xff]
  %v150 = vld [vmem:[%s0 + $0x100] sm:$0xff]
  %v151 = vld [vmem:[%s0 + $0x108] sm:$0xff]
  %v152 = vld [vmem:[%s0 + $0x110] sm:$0xff]
  %v153 = vld [vmem:[%s0 + $0x118] sm:$0xff]
  %v154 = vld [vmem:[%s0 + $0x120] sm:$0xff]
  %v155 = vld [vmem:[%s0 + $0x128] sm:$0xff]
  %v156 = vld [vmem:[%s0 + $0x130] sm:$0xff]
  %v157 = vld [vmem:[%s0 + $0x138] sm:$0xff]
  %v158 = vld [vmem:[%s0 + $0x140] sm:$0xff]
  %v159 = vld [vmem:[%s0 + $0x148] sm:$0xff]
  %v160 = vld [vmem:[%s0 + $0x150] sm:$0xff]
  %v161 = vld [vmem:[%s0 + $0x158] sm:$0xff]
  %v162 = vld [vmem:[%s0 + $0x160] sm:$0xff]
  %v163 = vld [vmem:[%s0 + $0x168] sm:$0xff]
  %v164 = vld [vmem:[%s0 + $0x170] sm:$0xff]
  %v165 = vld [vmem:[%s0 + $0x178] sm:$0xff]
  %v166 = vld [vmem:[%s0 + $0x180] sm:$0xff]
  %v167 = vld [vmem:[%s0 + $0x188] sm:$0xff]
  %v168 = vld [vmem:[%s0 + $0x190] sm:$0xff]
  %v169 = vld [vmem:[%s0 + $0x198] sm:$0xff]
  %v170 = vld [vmem:[%s0 + $0x1a0] sm:$0xff]
  %v171 = vld [vmem:[%s0 + $0x1a8] sm:$0xff]
  %v172 = vld [vmem:[%s0 + $0x1b0] sm:$0xff]
  %v173 = vld [vmem:[%s0 + $0x1b8] sm:$0xff]
  %v174 = vld [vmem:[%s0 + $0x1c0] sm:$0xff]
  %v175 = vld [vmem:[%s0 + $0x1c8] sm:$0xff]
  %v176 = vld [vmem:[%s0 + $0x1d0] sm:$0xff]
  %v177 = vld [vmem:[%s0 + $0x1d8] sm:$0xff]
  %v178 = vld [vmem:[%s0 + $0x1e0] sm:$0xff]
  %v179 = vld [vmem:[%s0 + $0x1e8] sm:$0xff]
  %v180 = vld [vmem:[%s0 + $0x1f0] sm:$0xff]
  %v181 = vld [vmem:[%s0 + $0x1f8] sm:$0xff]
  %v182 = vld [vmem:[%s0 + $0x200] sm:$0xff]
  %v183 = vld [vmem:[%s0 + $0x208] sm:$0xff]
  %v184 = vld [vmem:[%s0 + $0x210] sm:$0xff]
  %v185 = vld [vmem:[%s0 + $0x218] sm:$0xff]
  %v186 = vld [vmem:[%s0 + $0x220] sm:$0xff]
  %v187 = vld [vmem:[%s0 + $0x228] sm:$0xff]
  %v188 = vld [vmem:[%s0 + $0x230] sm:$0xff]
  %v189 = vld [vmem:[%s0 + $0x238] sm:$0xff]
  %v190 = vld [vmem:[%s0 + $0x240] sm:$0xff]
  %v191 = vld [vmem:[%s0 + $0x248] sm:$0xff]
  %v192 = vld [vmem:[%s0 + $0x250] sm:$0xff]
  %v193 = vld [vmem:[%s0 + $0x258] sm:$0xff]
  %v194 = vld [vmem:[%s0 + $0x260] sm:$0xff]
  %v195 = vld [vmem:[%s0 + $0x268] sm:$0xff]
  %v196 = vld [vmem:[%s0 + $0x270] sm:$0xff]
  %v197 = vld [vmem:[%s0 + $0x278] sm:$0xff]
  %v198 = vld [vmem:[%s0 + $0x280] sm:$0xff]
  %v199 = vld [vmem:[%s0 + $0x288] sm:$0xff]
  %v200 = vld [vmem:[%s0 + $0x290] sm:$0xff]
  %v201 = vld [vmem:[%s0 + $0x298] sm:$0xff]
  %v202 = vld [vmem:[%s0 + $0x2a0] sm:$0xff]
  %v203 = vld [vmem:[%s0 + $0x2a8] sm:$0xff]
  %v204 = vld [vmem:[%s0 + $0x2b0] sm:$0xff]
  %v205 = vld [vmem:[%s0 + $0x2b8] sm:$0xff]
  %v206 = vld [vmem:[%s0 + $0x2c0] sm:$0xff]
  %v207 = vld [vmem:[%s0 + $0x2c8] sm:$0xff]
  %v208 = vld [vmem:[%s0 + $0x2d0] sm:$0xff]
  %v209 = vld [vmem:[%s0 + $0x2d8] sm:$0xff]
  %v210 = vld [vmem:[%s0 + $0x2e0] sm:$0xff]
  %v211 = vld [vmem:[%s0 + $0x2e8] sm:$0xff]
  %v212 = vld [vmem:[%s0 + $0x2f0] sm:$0xff]
  %v213 = vld [vmem:[%s0 + $0x2f8] sm:$0xff]
  %v214 = vld [vmem:[%s0 + $0x300] sm:$0xff]
  %v215 = vld [vmem:[%s0 + $0x308] sm:$0xff]
  %v216 = vld [vmem:[%s1] sm:$0xf]
  %v217 = vld [vmem:[%s1 + $0x4] sm:$0xf]
  %v218 = vld [vmem:[%s1 + $0x8] sm:$0xf]
  %v219 = vld [vmem:[%s1 + $0xc] sm:$0xf]
  %v220 = vld [vmem:[%s1 + $0x10] sm:$0xf]
  %v221 = vld [vmem:[%s1 + $0x14] sm:$0xf]
  %v222 = vld [vmem:[%s1 + $0x18] sm:$0xf]
  %v223 = vld [vmem:[%s1 + $0x1c] sm:$0xf]
  %v224 = vld [vmem:[%s1 + $0x20] sm:$0xf]
  %v225 = vld [vmem:[%s1 + $0x24] sm:$0xf]
  %v226 = vld [vmem:[%s1 + $0x28] sm:$0xf]
  %v227 = vld [vmem:[%s1 + $0x2c] sm:$0xf]
  %v228 = vld [vmem:[%s1 + $0x30] sm:$0xf]
  %v229 = vld [vmem:[%s1 + $0x34] sm:$0xf]
  %v230 = vld [vmem:[%s1 + $0x38] sm:$0xf]
  %v231 = vld [vmem:[%s1 + $0x3c] sm:$0xf]
  %v232 = vld [vmem:[%s1 + $0x40] sm:$0xf]
  %v233 = vld [vmem:[%s1 + $0x44] sm:$0xf]
  %v234 = vld [vmem:[%s1 + $0x48] sm:$0xf]
  %v235 = vld [vmem:[%s1 + $0x4c] sm:$0xf]
  %v236 = vld [vmem:[%s1 + $0x50] sm:$0xf]
  %v237 = vld [vmem:[%s1 + $0x54] sm:$0xf]
  %v238 = vld [vmem:[%s1 + $0x58] sm:$0xf]
  %v239 = vld [vmem:[%s1 + $0x5c] sm:$0xf]
  %v240 = vld [vmem:[%s1 + $0x60] sm:$0xf]
  %v241 = vld [vmem:[%s1 + $0x64] sm:$0xf]
  %v242 = vld [vmem:[%s1 + $0x68] sm:$0xf]
  %v243 = vld [vmem:[%s1 + $0x6c] sm:$0xf]
  %v244 = vld [vmem:[%s1 + $0x70] sm:$0xf]
  %v245 = vld [vmem:[%s1 + $0x74] sm:$0xf]
  %v246 = vld [vmem:[%s1 + $0x78] sm:$0xf]
  %v247 = vld [vmem:[%s1 + $0x7c] sm:$0xf]
  %v248 = vld [vmem:[%s1 + $0x80] sm:$0xf]
  %v249 = vld [vmem:[%s1 + $0x84] sm:$0xf]
  %v250 = vld [vmem:[%s1 + $0x88] sm:$0xf]
  %v251 = vld [vmem:[%s1 + $0x8c] sm:$0xf]
  %v252 = vld [vmem:[%s1 + $0x90] sm:$0xf]
  %v253 = vld [vmem:[%s1 + $0x94] sm:$0xf]
  %v254 = vld [vmem:[%s1 + $0x98] sm:$0xf]
  %v255 = vld [vmem:[%s1 + $0x9c] sm:$0xf]
  %v256 = vld [vmem:[%s1 + $0xa0] sm:$0xf]
  %v257 = vld [vmem:[%s1 + $0xa4] sm:$0xf]
  %v258 = vld [vmem:[%s1 + $0xa8] sm:$0xf]
  %v259 = vld [vmem:[%s1 + $0xac] sm:$0xf]
  %v260 = vld [vmem:[%s1 + $0xb0] sm:$0xf]
  %v261 = vld [vmem:[%s1 + $0xb4] sm:$0xf]
  %v262 = vld [vmem:[%s1 + $0xb8] sm:$0xf]
  %v263 = vld [vmem:[%s1 + $0xbc] sm:$0xf]
  %v264 = vld [vmem:[%s1 + $0xc0] sm:$0xf]
  %v265 = vld [vmem:[%s1 + $0xc4] sm:$0xf]
  %v266 = vld [vmem:[%s1 + $0xc8] sm:$0xf]
  %v267 = vld [vmem:[%s1 + $0xcc] sm:$0xf]
  %v268 = vld [vmem:[%s1 + $0xd0] sm:$0xf]
  %v269 = vld [vmem:[%s1 + $0xd4] sm:$0xf]
  %v270 = vld [vmem:[%s1 + $0xd8] sm:$0xf]
  %v271 = vld [vmem:[%s1 + $0xdc] sm:$0xf]
  %v272 = vld [vmem:[%s1 + $0xe0] sm:$0xf]
  %v273 = vld [vmem:[%s1 + $0xe4] sm:$0xf]
  %v274 = vld [vmem:[%s1 + $0xe8] sm:$0xf]
  %v275 = vld [vmem:[%s1 + $0xec] sm:$0xf]
  %v276 = vld [vmem:[%s1 + $0xf0] sm:$0xf]
  %v277 = vld [vmem:[%s1 + $0xf4] sm:$0xf]
  %v278 = vld [vmem:[%s1 + $0xf8] sm:$0xf]
  %v279 = vld [vmem:[%s1 + $0xfc] sm:$0xf]
  %v378 = vunpack.c.l.b16 %v118
  %v379 = vunpack.c.h.b16 %v118
  %v380 = vunpack.c.l.b16 %v119
  %v381 = vunpack.c.h.b16 %v119
  %v382 = vunpack.c.l.b16 %v120
  %v383 = vunpack.c.h.b16 %v120
  %v384 = vunpack.c.l.b16 %v121
  %v385 = vunpack.c.h.b16 %v121
  %v386 = vunpack.c.l.b16 %v122
  %v387 = vunpack.c.h.b16 %v122
  %v388 = vunpack.c.l.b16 %v123
  %v389 = vunpack.c.h.b16 %v123
  %v390 = vunpack.c.l.b16 %v124
  %v391 = vunpack.c.h.b16 %v124
  %v392 = vunpack.c.l.b16 %v125
  %v393 = vunpack.c.h.b16 %v125
  %v394 = vunpack.c.l.b16 %v126
  %v395 = vunpack.c.h.b16 %v126
  %v396 = vunpack.c.l.b16 %v127
  %v397 = vunpack.c.h.b16 %v127
  %v398 = vunpack.c.l.b16 %v128
  %v399 = vunpack.c.h.b16 %v128
  %v400 = vunpack.c.l.b16 %v129
  %v401 = vunpack.c.h.b16 %v129
  %v402 = vunpack.c.l.b16 %v130
  %v403 = vunpack.c.h.b16 %v130
  %v404 = vunpack.c.l.b16 %v131
  %v405 = vunpack.c.h.b16 %v131
  %v406 = vunpack.c.l.b16 %v132
  %v407 = vunpack.c.h.b16 %v132
  %v408 = vunpack.c.l.b16 %v133
  %v409 = vunpack.c.h.b16 %v133
  %v410 = vunpack.c.l.b16 %v134
  %v411 = vunpack.c.h.b16 %v134
  %v412 = vunpack.c.l.b16 %v135
  %v413 = vunpack.c.h.b16 %v135
  %v414 = vunpack.c.l.b16 %v136
  %v415 = vunpack.c.h.b16 %v136
  %v416 = vunpack.c.l.b16 %v137
  %v417 = vunpack.c.h.b16 %v137
  %v418 = vunpack.c.l.b16 %v138
  %v419 = vunpack.c.h.b16 %v138
  %v420 = vunpack.c.l.b16 %v139
  %v421 = vunpack.c.h.b16 %v139
  %v422 = vunpack.c.l.b16 %v140
  %v423 = vunpack.c.h.b16 %v140
  %v424 = vunpack.c.l.b16 %v141
  %v425 = vunpack.c.h.b16 %v141
  %v426 = vunpack.c.l.b16 %v142
  %v427 = vunpack.c.h.b16 %v142
  %v428 = vunpack.c.l.b16 %v143
  %v429 = vunpack.c.h.b16 %v143
  %v430 = vunpack.c.l.b16 %v144
  %v431 = vunpack.c.h.b16 %v144
  %v432 = vunpack.c.l.b16 %v145
  %v433 = vunpack.c.h.b16 %v145
  %v434 = vunpack.c.l.b16 %v146
  %v435 = vunpack.c.h.b16 %v146
  %v436 = vunpack.c.l.b16 %v147
  %v437 = vunpack.c.h.b16 %v147
  %v438 = vunpack.c.l.b16 %v148
  %v439 = vunpack.c.h.b16 %v148
  %v440 = vunpack.c.l.b16 %v149
  %v441 = vunpack.c.h.b16 %v149
  %v442 = vunpack.c.l.b16 %v150
  %v443 = vunpack.c.h.b16 %v150
  %v444 = vunpack.c.l.b16 %v151
  %v445 = vunpack.c.h.b16 %v151
  %v446 = vunpack.c.l.b16 %v152
  %v447 = vunpack.c.h.b16 %v152
  %v448 = vunpack.c.l.b16 %v153
  %v449 = vunpack.c.h.b16 %v153
  %v450 = vunpack.c.l.b16 %v154
  %v451 = vunpack.c.h.b16 %v154
  %v452 = vunpack.c.l.b16 %v155
  %v453 = vunpack.c.h.b16 %v155
  %v454 = vunpack.c.l.b16 %v156
  %v455 = vunpack.c.h.b16 %v156
  %v456 = vunpack.c.l.b16 %v157
  %v457 = vunpack.c.h.b16 %v157
  %v458 = vunpack.c.l.b16 %v158
  %v459 = vunpack.c.h.b16 %v158
  %v460 = vunpack.c.l.b16 %v159
  %v461 = vunpack.c.h.b16 %v159
  %v462 = vunpack.c.l.b16 %v160
  %v463 = vunpack.c.h.b16 %v160
  %v464 = vunpack.c.l.b16 %v161
  %v465 = vunpack.c.h.b16 %v161
  %v466 = vunpack.c.l.b16 %v162
  %v467 = vunpack.c.h.b16 %v162
  %v468 = vunpack.c.l.b16 %v163
  %v469 = vunpack.c.h.b16 %v163
  %v470 = vunpack.c.l.b16 %v164
  %v471 = vunpack.c.h.b16 %v164
  %v472 = vunpack.c.l.b16 %v165
  %v473 = vunpack.c.h.b16 %v165
  %v474 = vunpack.c.l.b16 %v166
  %v475 = vunpack.c.h.b16 %v166
  %v476 = vunpack.c.l.b16 %v167
  %v477 = vunpack.c.h.b16 %v167
  %v478 = vunpack.c.l.b16 %v168
  %v479 = vunpack.c.h.b16 %v168
  %v480 = vunpack.c.l.b16 %v169
  %v481 = vunpack.c.h.b16 %v169
  %v482 = vunpack.c.l.b16 %v170
  %v483 = vunpack.c.h.b16 %v170
  %v484 = vunpack.c.l.b16 %v171
  %v485 = vunpack.c.h.b16 %v171
  %v486 = vunpack.c.l.b16 %v172
  %v487 = vunpack.c.h.b16 %v172
  %v488 = vunpack.c.l.b16 %v173
  %v489 = vunpack.c.h.b16 %v173
  %v490 = vunpack.c.l.b16 %v174
  %v491 = vunpack.c.h.b16 %v174
  %v492 = vunpack.c.l.b16 %v175
  %v493 = vunpack.c.h.b16 %v175
  %v494 = vunpack.c.l.b16 %v176
  %v495 = vunpack.c.h.b16 %v176
  %v496 = vunpack.c.l.b16 %v177
  %v497 = vunpack.c.h.b16 %v177
  %v498 = vunpack.c.l.b16 %v178
  %v499 = vunpack.c.h.b16 %v178
  %v500 = vunpack.c.l.b16 %v179
  %v501 = vunpack.c.h.b16 %v179
  %v502 = vunpack.c.l.b16 %v180
  %v503 = vunpack.c.h.b16 %v180
  %v504 = vunpack.c.l.b16 %v181
  %v505 = vunpack.c.h.b16 %v181
  %v506 = vunpack.c.l.b16 %v182
  %v507 = vunpack.c.h.b16 %v182
  %v508 = vunpack.c.l.b16 %v183
  %v509 = vunpack.c.h.b16 %v183
  %v510 = vunpack.c.l.b16 %v184
  %v511 = vunpack.c.h.b16 %v184
  %v512 = vunpack.c.l.b16 %v185
  %v513 = vunpack.c.h.b16 %v185
  %v514 = vunpack.c.l.b16 %v186
  %v515 = vunpack.c.h.b16 %v186
  %v516 = vunpack.c.l.b16 %v187
  %v517 = vunpack.c.h.b16 %v187
  %v518 = vunpack.c.l.b16 %v188
  %v519 = vunpack.c.h.b16 %v188
  %v520 = vunpack.c.l.b16 %v189
  %v521 = vunpack.c.h.b16 %v189
  %v522 = vunpack.c.l.b16 %v190
  %v523 = vunpack.c.h.b16 %v190
  %v524 = vunpack.c.l.b16 %v191
  %v525 = vunpack.c.h.b16 %v191
  %v526 = vunpack.c.l.b16 %v192
  %v527 = vunpack.c.h.b16 %v192
  %v528 = vunpack.c.l.b16 %v193
  %v529 = vunpack.c.h.b16 %v193
  %v530 = vunpack.c.l.b16 %v194
  %v531 = vunpack.c.h.b16 %v194
  %v532 = vunpack.c.l.b16 %v195
  %v533 = vunpack.c.h.b16 %v195
  %v534 = vunpack.c.l.b16 %v196
  %v535 = vunpack.c.h.b16 %v196
  %v536 = vunpack.c.l.b16 %v197
  %v537 = vunpack.c.h.b16 %v197
  %v538 = vunpack.c.l.b16 %v198
  %v539 = vunpack.c.h.b16 %v198
  %v540 = vunpack.c.l.b16 %v199
  %v541 = vunpack.c.h.b16 %v199
  %v542 = vunpack.c.l.b16 %v200
  %v543 = vunpack.c.h.b16 %v200
  %v544 = vunpack.c.l.b16 %v201
  %v545 = vunpack.c.h.b16 %v201
  %v546 = vunpack.c.l.b16 %v202
  %v547 = vunpack.c.h.b16 %v202
  %v548 = vunpack.c.l.b16 %v203
  %v549 = vunpack.c.h.b16 %v203
  %v550 = vunpack.c.l.b16 %v204
  %v551 = vunpack.c.h.b16 %v204
  %v552 = vunpack.c.l.b16 %v205
  %v553 = vunpack.c.h.b16 %v205
  %v554 = vunpack.c.l.b16 %v206
  %v555 = vunpack.c.h.b16 %v206
  %v556 = vunpack.c.l.b16 %v207
  %v557 = vunpack.c.h.b16 %v207
  %v558 = vunpack.c.l.b16 %v208
  %v559 = vunpack.c.h.b16 %v208
  %v560 = vunpack.c.l.b16 %v209
  %v561 = vunpack.c.h.b16 %v209
  %v562 = vunpack.c.l.b16 %v210
  %v563 = vunpack.c.h.b16 %v210
  %v564 = vunpack.c.l.b16 %v211
  %v565 = vunpack.c.h.b16 %v211
  %v566 = vunpack.c.l.b16 %v212
  %v567 = vunpack.c.h.b16 %v212
  %v568 = vunpack.c.l.b16 %v213
  %v569 = vunpack.c.h.b16 %v213
  %v570 = vunpack.c.l.b16 %v214
  %v571 = vunpack.c.h.b16 %v214
  %v572 = vunpack.c.l.b16 %v215
  %v573 = vunpack.c.h.b16 %v215
  %v574 = vpack.c.b16 %v382, %v378
  %v575 = vpack.c.b16 %v383, %v379
  %v576 = vpack.c.b16 %v384, %v380
  %v577 = vpack.c.b16 %v385, %v381
  %v578 = vpack.c.b16 %v390, %v386
  %v579 = vpack.c.b16 %v391, %v387
  %v580 = vpack.c.b16 %v392, %v388
  %v581 = vpack.c.b16 %v393, %v389
  %v582 = vpack.c.b16 %v398, %v394
  %v583 = vpack.c.b16 %v399, %v395
  %v584 = vpack.c.b16 %v400, %v396
  %v585 = vpack.c.b16 %v401, %v397
  %v586 = vpack.c.b16 %v406, %v402
  %v587 = vpack.c.b16 %v407, %v403
  %v588 = vpack.c.b16 %v408, %v404
  %v589 = vpack.c.b16 %v409, %v405
  %v590 = vpack.c.b16 %v414, %v410
  %v591 = vpack.c.b16 %v415, %v411
  %v592 = vpack.c.b16 %v416, %v412
  %v593 = vpack.c.b16 %v417, %v413
  %v594 = vpack.c.b16 %v422, %v418
  %v595 = vpack.c.b16 %v423, %v419
  %v596 = vpack.c.b16 %v424, %v420
  %v597 = vpack.c.b16 %v425, %v421
  %v598 = vpack.c.b16 %v430, %v426
  %v599 = vpack.c.b16 %v431, %v427
  %v600 = vpack.c.b16 %v432, %v428
  %v601 = vpack.c.b16 %v433, %v429
  %v602 = vpack.c.b16 %v438, %v434
  %v603 = vpack.c.b16 %v439, %v435
  %v604 = vpack.c.b16 %v440, %v436
  %v605 = vpack.c.b16 %v441, %v437
  %v606 = vpack.c.b16 %v446, %v442
  %v607 = vpack.c.b16 %v447, %v443
  %v608 = vpack.c.b16 %v448, %v444
  %v609 = vpack.c.b16 %v449, %v445
  %v610 = vpack.c.b16 %v454, %v450
  %v611 = vpack.c.b16 %v455, %v451
  %v612 = vpack.c.b16 %v456, %v452
  %v613 = vpack.c.b16 %v457, %v453
  %v614 = vpack.c.b16 %v462, %v458
  %v615 = vpack.c.b16 %v463, %v459
  %v616 = vpack.c.b16 %v464, %v460
  %v617 = vpack.c.b16 %v465, %v461
  %v618 = vpack.c.b16 %v470, %v466
  %v619 = vpack.c.b16 %v471, %v467
  %v620 = vpack.c.b16 %v472, %v468
  %v621 = vpack.c.b16 %v473, %v469
  %v622 = vpack.c.b16 %v478, %v474
  %v623 = vpack.c.b16 %v479, %v475
  %v624 = vpack.c.b16 %v480, %v476
  %v625 = vpack.c.b16 %v481, %v477
  %v626 = vpack.c.b16 %v486, %v482
  %v627 = vpack.c.b16 %v487, %v483
  %v628 = vpack.c.b16 %v488, %v484
  %v629 = vpack.c.b16 %v489, %v485
  %v630 = vpack.c.b16 %v494, %v490
  %v631 = vpack.c.b16 %v495, %v491
  %v632 = vpack.c.b16 %v496, %v492
  %v633 = vpack.c.b16 %v497, %v493
  %v634 = vpack.c.b16 %v502, %v498
  %v635 = vpack.c.b16 %v503, %v499
  %v636 = vpack.c.b16 %v504, %v500
  %v637 = vpack.c.b16 %v505, %v501
  %v638 = vpack.c.b16 %v510, %v506
  %v639 = vpack.c.b16 %v511, %v507
  %v640 = vpack.c.b16 %v512, %v508
  %v641 = vpack.c.b16 %v513, %v509
  %v642 = vpack.c.b16 %v518, %v514
  %v643 = vpack.c.b16 %v519, %v515
  %v644 = vpack.c.b16 %v520, %v516
  %v645 = vpack.c.b16 %v521, %v517
  %v646 = vpack.c.b16 %v526, %v522
  %v647 = vpack.c.b16 %v527, %v523
  %v648 = vpack.c.b16 %v528, %v524
  %v649 = vpack.c.b16 %v529, %v525
  %v650 = vpack.c.b16 %v534, %v530
  %v651 = vpack.c.b16 %v535, %v531
  %v652 = vpack.c.b16 %v536, %v532
  %v653 = vpack.c.b16 %v537, %v533
  %v654 = vpack.c.b16 %v542, %v538
  %v655 = vpack.c.b16 %v543, %v539
  %v656 = vpack.c.b16 %v544, %v540
  %v657 = vpack.c.b16 %v545, %v541
  %v658 = vpack.c.b16 %v550, %v546
  %v659 = vpack.c.b16 %v551, %v547
  %v660 = vpack.c.b16 %v552, %v548
  %v661 = vpack.c.b16 %v553, %v549
  %v662 = vpack.c.b16 %v558, %v554
  %v663 = vpack.c.b16 %v559, %v555
  %v664 = vpack.c.b16 %v560, %v556
  %v665 = vpack.c.b16 %v561, %v557
  %v666 = vpack.c.b16 %v566, %v562
  %v667 = vpack.c.b16 %v567, %v563
  %v668 = vpack.c.b16 %v568, %v564
  %v669 = vpack.c.b16 %v569, %v565
  %v670 = vpack.c.b16 %v570, %v570
  %v671 = vpack.c.b16 %v571, %v571
  %v672 = vpack.c.b16 %v572, %v572
  %v673 = vpack.c.b16 %v573, %v573
  %v838 = vunpack.c.l.b16 %v216
  %v839 = vunpack.c.l.b16 %v217
  %v840 = vunpack.c.l.b16 %v218
  %v841 = vunpack.c.l.b16 %v219
  %v842 = vunpack.c.l.b16 %v220
  %v843 = vunpack.c.l.b16 %v221
  %v844 = vunpack.c.l.b16 %v222
  %v845 = vunpack.c.l.b16 %v223
  %v846 = vunpack.c.l.b16 %v224
  %v847 = vunpack.c.l.b16 %v225
  %v848 = vunpack.c.l.b16 %v226
  %v849 = vunpack.c.l.b16 %v227
  %v850 = vunpack.c.l.b16 %v228
  %v851 = vunpack.c.l.b16 %v229
  %v852 = vunpack.c.l.b16 %v230
  %v853 = vunpack.c.l.b16 %v231
  %v854 = vunpack.c.l.b16 %v232
  %v855 = vunpack.c.l.b16 %v233
  %v856 = vunpack.c.l.b16 %v234
  %v857 = vunpack.c.l.b16 %v235
  %v858 = vunpack.c.l.b16 %v236
  %v859 = vunpack.c.l.b16 %v237
  %v860 = vunpack.c.l.b16 %v238
  %v861 = vunpack.c.l.b16 %v239
  %v862 = vunpack.c.l.b16 %v240
  %v863 = vunpack.c.l.b16 %v241
  %v864 = vunpack.c.l.b16 %v242
  %v865 = vunpack.c.l.b16 %v243
  %v866 = vunpack.c.l.b16 %v244
  %v867 = vunpack.c.l.b16 %v245
  %v868 = vunpack.c.l.b16 %v246
  %v869 = vunpack.c.l.b16 %v247
  %v870 = vunpack.c.l.b16 %v248
  %v871 = vunpack.c.l.b16 %v249
  %v872 = vunpack.c.l.b16 %v250
  %v873 = vunpack.c.l.b16 %v251
  %v874 = vunpack.c.l.b16 %v252
  %v875 = vunpack.c.l.b16 %v253
  %v876 = vunpack.c.l.b16 %v254
  %v877 = vunpack.c.l.b16 %v255
  %v878 = vunpack.c.l.b16 %v256
  %v879 = vunpack.c.l.b16 %v257
  %v880 = vunpack.c.l.b16 %v258
  %v881 = vunpack.c.l.b16 %v259
  %v882 = vunpack.c.l.b16 %v260
  %v883 = vunpack.c.l.b16 %v261
  %v884 = vunpack.c.l.b16 %v262
  %v885 = vunpack.c.l.b16 %v263
  %v886 = vunpack.c.l.b16 %v264
  %v887 = vunpack.c.l.b16 %v265
  %v888 = vunpack.c.l.b16 %v266
  %v889 = vunpack.c.l.b16 %v267
  %v890 = vunpack.c.l.b16 %v268
  %v891 = vunpack.c.l.b16 %v269
  %v892 = vunpack.c.l.b16 %v270
  %v893 = vunpack.c.l.b16 %v271
  %v894 = vunpack.c.l.b16 %v272
  %v895 = vunpack.c.l.b16 %v273
  %v896 = vunpack.c.l.b16 %v274
  %v897 = vunpack.c.l.b16 %v275
  %v898 = vunpack.c.l.b16 %v276
  %v899 = vunpack.c.l.b16 %v277
  %v900 = vunpack.c.l.b16 %v278
  %v901 = vunpack.c.l.b16 %v279
  %v902 = vpack.c.b16 %v839, %v838
  %v903 = vpack.c.b16 %v841, %v840
  %v904 = vpack.c.b16 %v843, %v842
  %v905 = vpack.c.b16 %v845, %v844
  %v906 = vpack.c.b16 %v847, %v846
  %v907 = vpack.c.b16 %v849, %v848
  %v908 = vpack.c.b16 %v851, %v850
  %v909 = vpack.c.b16 %v853, %v852
  %v910 = vpack.c.b16 %v855, %v854
  %v911 = vpack.c.b16 %v857, %v856
  %v912 = vpack.c.b16 %v859, %v858
  %v913 = vpack.c.b16 %v861, %v860
  %v914 = vpack.c.b16 %v863, %v862
  %v915 = vpack.c.b16 %v865, %v864
  %v916 = vpack.c.b16 %v867, %v866
  %v917 = vpack.c.b16 %v869, %v868
  %v918 = vpack.c.b16 %v871, %v870
  %v919 = vpack.c.b16 %v873, %v872
  %v920 = vpack.c.b16 %v875, %v874
  %v921 = vpack.c.b16 %v877, %v876
  %v922 = vpack.c.b16 %v879, %v878
  %v923 = vpack.c.b16 %v881, %v880
  %v924 = vpack.c.b16 %v883, %v882
  %v925 = vpack.c.b16 %v885, %v884
  %v926 = vpack.c.b16 %v887, %v886
  %v927 = vpack.c.b16 %v889, %v888
  %v928 = vpack.c.b16 %v891, %v890
  %v929 = vpack.c.b16 %v893, %v892
  %v930 = vpack.c.b16 %v895, %v894
  %v931 = vpack.c.b16 %v897, %v896
  %v932 = vpack.c.b16 %v899, %v898
  %v933 = vpack.c.b16 %v901, %v900
  %966 = vmatprep.subr.bf16.mxu0 0
  %967 = vmatpush1.bf16.msra.mxu0 %v909
  %968 = vmatprep.subr.bf16.mxu0 0
  %969 = vmatpush1.bf16.msra.mxu0 %v908
  %970 = vmatprep.subr.bf16.mxu0 0
  %971 = vmatpush1.bf16.msra.mxu0 %v907
  %972 = vmatprep.subr.bf16.mxu0 0
  %973 = vmatpush1.bf16.msra.mxu0 %v906
  %974 = vmatprep.subr.bf16.mxu0 0
  %975 = vmatpush1.bf16.msra.mxu0 %v905
  %976 = vmatprep.subr.bf16.mxu0 0
  %977 = vmatpush1.bf16.msra.mxu0 %v904
  %978 = vmatprep.subr.bf16.mxu0 0
  %979 = vmatpush1.bf16.msra.mxu0 %v903
  %980 = vmatprep.subr.bf16.mxu0 0
  %981 = vmatpush1.bf16.msra.mxu0 %v902
  %982 = vmatprep.subr.bf16.mxu0 0
  %983 = vmatpush2.bf16.msra.mxu0 %v917
  %984 = vmatprep.subr.bf16.mxu0 0
  %985 = vmatpush2.bf16.msra.mxu0 %v916
  %986 = vmatprep.subr.bf16.mxu0 0
  %987 = vmatpush2.bf16.msra.mxu0 %v915
  %988 = vmatprep.subr.bf16.mxu0 0
  %989 = vmatpush2.bf16.msra.mxu0 %v914
  %990 = vmatprep.subr.bf16.mxu0 0
  %991 = vmatpush2.bf16.msra.mxu0 %v913
  %992 = vmatprep.subr.bf16.mxu0 0
  %993 = vmatpush2.bf16.msra.mxu0 %v912
  %994 = vmatprep.subr.bf16.mxu0 0
  %995 = vmatpush2.bf16.msra.mxu0 %v911
  %996 = vmatprep.subr.bf16.mxu0 0
  %997 = vmatpush2.bf16.msra.mxu0 %v910
  %998 = vmatprep.mubr.bf16.mxu0 %v575
  %999 = vmatmul.mubr.bf16.gmra.mxu0 %v574
  %v1000 = vpop.f32.mrf.mxu0
  %v1001 = vadd.f32 0.0, %v1000
  %v1002 = vpop.f32.mrf.mxu0
  %v1003 = vpop.f32.mrf.mxu0
  %v1004 = vadd.f32 0.0, %v1003
  %v1005 = vpop.f32.mrf.mxu0
  %1006 = vmatprep.mubr.bf16.mxu0 %v579
  %1007 = vmatmul.mubr.bf16.gmra.mxu0 %v578
  %v1008 = vpop.f32.mrf.mxu0
  %v1009 = vadd.f32 0.0, %v1008
  %v1010 = vpop.f32.mrf.mxu0
  %v1011 = vpop.f32.mrf.mxu0
  %v1012 = vadd.f32 0.0, %v1011
  %v1013 = vpop.f32.mrf.mxu0
  %1014 = vmatprep.mubr.bf16.mxu0 %v583
  %1015 = vmatmul.mubr.bf16.gmra.mxu0 %v582
  %v1016 = vpop.f32.mrf.mxu0
  %v1017 = vadd.f32 0.0, %v1016
  %v1018 = vpop.f32.mrf.mxu0
  %v1019 = vpop.f32.mrf.mxu0
  %v1020 = vadd.f32 0.0, %v1019
  %v1021 = vpop.f32.mrf.mxu0
  %1022 = vmatprep.mubr.bf16.mxu0 %v587
  %1023 = vmatmul.mubr.bf16.gmra.mxu0 %v586
  %v1024 = vpop.f32.mrf.mxu0
  %v1025 = vadd.f32 0.0, %v1024
  %v1026 = vpop.f32.mrf.mxu0
  %v1027 = vpop.f32.mrf.mxu0
  %v1028 = vadd.f32 0.0, %v1027
  %v1029 = vpop.f32.mrf.mxu0
  %1030 = vmatprep.mubr.bf16.mxu0 %v591
  %1031 = vmatmul.mubr.bf16.gmra.mxu0 %v590
  %v1032 = vpop.f32.mrf.mxu0
  %v1033 = vadd.f32 0.0, %v1032
  %v1034 = vpop.f32.mrf.mxu0
  %v1035 = vpop.f32.mrf.mxu0
  %v1036 = vadd.f32 0.0, %v1035
  %v1037 = vpop.f32.mrf.mxu0
  %1038 = vmatprep.mubr.bf16.mxu0 %v595
  %1039 = vmatmul.mubr.bf16.gmra.mxu0 %v594
  %v1040 = vpop.f32.mrf.mxu0
  %v1041 = vadd.f32 0.0, %v1040
  %v1042 = vpop.f32.mrf.mxu0
  %v1043 = vpop.f32.mrf.mxu0
  %v1044 = vadd.f32 0.0, %v1043
  %v1045 = vpop.f32.mrf.mxu0
  %1046 = vmatprep.mubr.bf16.mxu0 %v599
  %1047 = vmatmul.mubr.bf16.gmra.mxu0 %v598
  %v1048 = vpop.f32.mrf.mxu0
  %v1049 = vadd.f32 0.0, %v1048
  %v1050 = vpop.f32.mrf.mxu0
  %v1051 = vpop.f32.mrf.mxu0
  %v1052 = vadd.f32 0.0, %v1051
  %v1053 = vpop.f32.mrf.mxu0
  %1054 = vmatprep.mubr.bf16.mxu0 %v603
  %1055 = vmatmul.mubr.bf16.gmra.mxu0 %v602
  %v1056 = vpop.f32.mrf.mxu0
  %v1057 = vadd.f32 0.0, %v1056
  %v1058 = vpop.f32.mrf.mxu0
  %v1059 = vpop.f32.mrf.mxu0
  %v1060 = vadd.f32 0.0, %v1059
  %v1061 = vpop.f32.mrf.mxu0
  %1062 = vmatprep.mubr.bf16.mxu0 %v607
  %1063 = vmatmul.mubr.bf16.gmra.mxu0 %v606
  %v1064 = vpop.f32.mrf.mxu0
  %v1065 = vadd.f32 0.0, %v1064
  %v1066 = vpop.f32.mrf.mxu0
  %v1067 = vpop.f32.mrf.mxu0
  %v1068 = vadd.f32 0.0, %v1067
  %v1069 = vpop.f32.mrf.mxu0
  %1070 = vmatprep.mubr.bf16.mxu0 %v611
  %1071 = vmatmul.mubr.bf16.gmra.mxu0 %v610
  %v1072 = vpop.f32.mrf.mxu0
  %v1073 = vadd.f32 0.0, %v1072
  %v1074 = vpop.f32.mrf.mxu0
  %v1075 = vpop.f32.mrf.mxu0
  %v1076 = vadd.f32 0.0, %v1075
  %v1077 = vpop.f32.mrf.mxu0
  %1078 = vmatprep.mubr.bf16.mxu0 %v615
  %1079 = vmatmul.mubr.bf16.gmra.mxu0 %v614
  %v1080 = vpop.f32.mrf.mxu0
  %v1081 = vadd.f32 0.0, %v1080
  %v1082 = vpop.f32.mrf.mxu0
  %v1083 = vpop.f32.mrf.mxu0
  %v1084 = vadd.f32 0.0, %v1083
  %v1085 = vpop.f32.mrf.mxu0
  %1086 = vmatprep.mubr.bf16.mxu0 %v619
  %1087 = vmatmul.mubr.bf16.gmra.mxu0 %v618
  %v1088 = vpop.f32.mrf.mxu0
  %v1089 = vadd.f32 0.0, %v1088
  %v1090 = vpop.f32.mrf.mxu0
  %v1091 = vpop.f32.mrf.mxu0
  %v1092 = vadd.f32 0.0, %v1091
  %v1093 = vpop.f32.mrf.mxu0
  %1094 = vmatprep.mubr.bf16.mxu0 %v623
  %1095 = vmatmul.mubr.bf16.gmra.mxu0 %v622
  %v1096 = vpop.f32.mrf.mxu0
  %v1097 = vadd.f32 0.0, %v1096
  %v1098 = vpop.f32.mrf.mxu0
  %v1099 = vpop.f32.mrf.mxu0
  %v1100 = vadd.f32 0.0, %v1099
  %v1101 = vpop.f32.mrf.mxu0
  %1102 = vmatprep.mubr.bf16.mxu0 %v627
  %1103 = vmatmul.mubr.bf16.gmra.mxu0 %v626
  %v1104 = vpop.f32.mrf.mxu0
  %v1105 = vadd.f32 0.0, %v1104
  %v1106 = vpop.f32.mrf.mxu0
  %v1107 = vpop.f32.mrf.mxu0
  %v1108 = vadd.f32 0.0, %v1107
  %v1109 = vpop.f32.mrf.mxu0
  %1110 = vmatprep.mubr.bf16.mxu0 %v631
  %1111 = vmatmul.mubr.bf16.gmra.mxu0 %v630
  %v1112 = vpop.f32.mrf.mxu0
  %v1113 = vadd.f32 0.0, %v1112
  %v1114 = vpop.f32.mrf.mxu0
  %v1115 = vpop.f32.mrf.mxu0
  %v1116 = vadd.f32 0.0, %v1115
  %v1117 = vpop.f32.mrf.mxu0
  %1118 = vmatprep.mubr.bf16.mxu0 %v635
  %1119 = vmatmul.mubr.bf16.gmra.mxu0 %v634
  %v1120 = vpop.f32.mrf.mxu0
  %v1121 = vadd.f32 0.0, %v1120
  %v1122 = vpop.f32.mrf.mxu0
  %v1123 = vpop.f32.mrf.mxu0
  %v1124 = vadd.f32 0.0, %v1123
  %v1125 = vpop.f32.mrf.mxu0
  %1126 = vmatprep.mubr.bf16.mxu0 %v639
  %1127 = vmatmul.mubr.bf16.gmra.mxu0 %v638
  %v1128 = vpop.f32.mrf.mxu0
  %v1129 = vadd.f32 0.0, %v1128
  %v1130 = vpop.f32.mrf.mxu0
  %v1131 = vpop.f32.mrf.mxu0
  %v1132 = vadd.f32 0.0, %v1131
  %v1133 = vpop.f32.mrf.mxu0
  %1134 = vmatprep.mubr.bf16.mxu0 %v643
  %1135 = vmatmul.mubr.bf16.gmra.mxu0 %v642
  %v1136 = vpop.f32.mrf.mxu0
  %v1137 = vadd.f32 0.0, %v1136
  %v1138 = vpop.f32.mrf.mxu0
  %v1139 = vpop.f32.mrf.mxu0
  %v1140 = vadd.f32 0.0, %v1139
  %v1141 = vpop.f32.mrf.mxu0
  %1142 = vmatprep.mubr.bf16.mxu0 %v647
  %1143 = vmatmul.mubr.bf16.gmra.mxu0 %v646
  %v1144 = vpop.f32.mrf.mxu0
  %v1145 = vadd.f32 0.0, %v1144
  %v1146 = vpop.f32.mrf.mxu0
  %v1147 = vpop.f32.mrf.mxu0
  %v1148 = vadd.f32 0.0, %v1147
  %v1149 = vpop.f32.mrf.mxu0
  %1150 = vmatprep.mubr.bf16.mxu0 %v651
  %1151 = vmatmul.mubr.bf16.gmra.mxu0 %v650
  %v1152 = vpop.f32.mrf.mxu0
  %v1153 = vadd.f32 0.0, %v1152
  %v1154 = vpop.f32.mrf.mxu0
  %v1155 = vpop.f32.mrf.mxu0
  %v1156 = vadd.f32 0.0, %v1155
  %v1157 = vpop.f32.mrf.mxu0
  %1158 = vmatprep.mubr.bf16.mxu0 %v655
  %1159 = vmatmul.mubr.bf16.gmra.mxu0 %v654
  %v1160 = vpop.f32.mrf.mxu0
  %v1161 = vadd.f32 0.0, %v1160
  %v1162 = vpop.f32.mrf.mxu0
  %v1163 = vpop.f32.mrf.mxu0
  %v1164 = vadd.f32 0.0, %v1163
  %v1165 = vpop.f32.mrf.mxu0
  %1166 = vmatprep.mubr.bf16.mxu0 %v659
  %1167 = vmatmul.mubr.bf16.gmra.mxu0 %v658
  %v1168 = vpop.f32.mrf.mxu0
  %v1169 = vadd.f32 0.0, %v1168
  %v1170 = vpop.f32.mrf.mxu0
  %v1171 = vpop.f32.mrf.mxu0
  %v1172 = vadd.f32 0.0, %v1171
  %v1173 = vpop.f32.mrf.mxu0
  %1174 = vmatprep.mubr.bf16.mxu0 %v663
  %1175 = vmatmul.mubr.bf16.gmra.mxu0 %v662
  %v1176 = vpop.f32.mrf.mxu0
  %v1177 = vadd.f32 0.0, %v1176
  %v1178 = vpop.f32.mrf.mxu0
  %v1179 = vpop.f32.mrf.mxu0
  %v1180 = vadd.f32 0.0, %v1179
  %v1181 = vpop.f32.mrf.mxu0
  %1182 = vmatprep.mubr.bf16.mxu0 %v667
  %1183 = vmatmul.mubr.bf16.gmra.mxu0 %v666
  %v1184 = vpop.f32.mrf.mxu0
  %v1185 = vadd.f32 0.0, %v1184
  %v1186 = vpop.f32.mrf.mxu0
  %v1187 = vpop.f32.mrf.mxu0
  %v1188 = vadd.f32 0.0, %v1187
  %v1189 = vpop.f32.mrf.mxu0
  %1190 = vmatprep.mubr.bf16.mxu0 %v671
  %1191 = vmatmul.mubr.bf16.gmra.mxu0 %v670
  %v1192 = vpop.f32.mrf.mxu0
  %v1193 = vadd.f32 0.0, %v1192
  %v1194 = vpop.f32.mrf.mxu0
  %v1195 = vpop.f32.mrf.mxu0
  %v1196 = vpop.f32.mrf.mxu0
  %1197 = vdwg.mxu0
  %1198 = vmatprep.subr.bf16.mxu0 0
  %1199 = vmatpush1.bf16.msra.mxu0 %v925
  %1200 = vmatprep.subr.bf16.mxu0 0
  %1201 = vmatpush1.bf16.msra.mxu0 %v924
  %1202 = vmatprep.subr.bf16.mxu0 0
  %1203 = vmatpush1.bf16.msra.mxu0 %v923
  %1204 = vmatprep.subr.bf16.mxu0 0
  %1205 = vmatpush1.bf16.msra.mxu0 %v922
  %1206 = vmatprep.subr.bf16.mxu0 0
  %1207 = vmatpush1.bf16.msra.mxu0 %v921
  %1208 = vmatprep.subr.bf16.mxu0 0
  %1209 = vmatpush1.bf16.msra.mxu0 %v920
  %1210 = vmatprep.subr.bf16.mxu0 0
  %1211 = vmatpush1.bf16.msra.mxu0 %v919
  %1212 = vmatprep.subr.bf16.mxu0 0
  %1213 = vmatpush1.bf16.msra.mxu0 %v918
  %1214 = vmatprep.subr.bf16.mxu0 0
  %1215 = vmatpush2.bf16.msra.mxu0 %v933
  %1216 = vmatprep.subr.bf16.mxu0 0
  %1217 = vmatpush2.bf16.msra.mxu0 %v932
  %1218 = vmatprep.subr.bf16.mxu0 0
  %1219 = vmatpush2.bf16.msra.mxu0 %v931
  %1220 = vmatprep.subr.bf16.mxu0 0
  %1221 = vmatpush2.bf16.msra.mxu0 %v930
  %1222 = vmatprep.subr.bf16.mxu0 0
  %1223 = vmatpush2.bf16.msra.mxu0 %v929
  %1224 = vmatprep.subr.bf16.mxu0 0
  %1225 = vmatpush2.bf16.msra.mxu0 %v928
  %1226 = vmatprep.subr.bf16.mxu0 0
  %1227 = vmatpush2.bf16.msra.mxu0 %v927
  %1228 = vmatprep.subr.bf16.mxu0 0
  %1229 = vmatpush2.bf16.msra.mxu0 %v926
  %1230 = vmatprep.mubr.bf16.mxu0 %v577
  %1231 = vmatmul.mubr.bf16.gmra.mxu0 %v576
  %v1232 = vpop.f32.mrf.mxu0
  %v1233 = vadd.f32 %v1001, %v1232
  %v1234 = vpop.f32.mrf.mxu0
  %v1235 = vpop.f32.mrf.mxu0
  %v1236 = vadd.f32 %v1004, %v1235
  %v1237 = vpop.f32.mrf.mxu0
  %1238 = vmatprep.mubr.bf16.mxu0 %v581
  %1239 = vmatmul.mubr.bf16.gmra.mxu0 %v580
  %v1240 = vpop.f32.mrf.mxu0
  %v1241 = vadd.f32 %v1009, %v1240
  %v1242 = vpop.f32.mrf.mxu0
  %v1243 = vpop.f32.mrf.mxu0
  %v1244 = vadd.f32 %v1012, %v1243
  %v1245 = vpop.f32.mrf.mxu0
  %1246 = vmatprep.mubr.bf16.mxu0 %v585
  %1247 = vmatmul.mubr.bf16.gmra.mxu0 %v584
  %v1248 = vpop.f32.mrf.mxu0
  %v1249 = vadd.f32 %v1017, %v1248
  %v1250 = vpop.f32.mrf.mxu0
  %v1251 = vpop.f32.mrf.mxu0
  %v1252 = vadd.f32 %v1020, %v1251
  %v1253 = vpop.f32.mrf.mxu0
  %1254 = vmatprep.mubr.bf16.mxu0 %v589
  %1255 = vmatmul.mubr.bf16.gmra.mxu0 %v588
  %v1256 = vpop.f32.mrf.mxu0
  %v1257 = vadd.f32 %v1025, %v1256
  %v1258 = vpop.f32.mrf.mxu0
  %v1259 = vpop.f32.mrf.mxu0
  %v1260 = vadd.f32 %v1028, %v1259
  %v1261 = vpop.f32.mrf.mxu0
  %1262 = vmatprep.mubr.bf16.mxu0 %v593
  %1263 = vmatmul.mubr.bf16.gmra.mxu0 %v592
  %v1264 = vpop.f32.mrf.mxu0
  %v1265 = vadd.f32 %v1033, %v1264
  %v1266 = vpop.f32.mrf.mxu0
  %v1267 = vpop.f32.mrf.mxu0
  %v1268 = vadd.f32 %v1036, %v1267
  %v1269 = vpop.f32.mrf.mxu0
  %1270 = vmatprep.mubr.bf16.mxu0 %v597
  %1271 = vmatmul.mubr.bf16.gmra.mxu0 %v596
  %v1272 = vpop.f32.mrf.mxu0
  %v1273 = vadd.f32 %v1041, %v1272
  %v1274 = vpop.f32.mrf.mxu0
  %v1275 = vpop.f32.mrf.mxu0
  %v1276 = vadd.f32 %v1044, %v1275
  %v1277 = vpop.f32.mrf.mxu0
  %1278 = vmatprep.mubr.bf16.mxu0 %v601
  %1279 = vmatmul.mubr.bf16.gmra.mxu0 %v600
  %v1280 = vpop.f32.mrf.mxu0
  %v1281 = vadd.f32 %v1049, %v1280
  %v1282 = vpop.f32.mrf.mxu0
  %v1283 = vpop.f32.mrf.mxu0
  %v1284 = vadd.f32 %v1052, %v1283
  %v1285 = vpop.f32.mrf.mxu0
  %1286 = vmatprep.mubr.bf16.mxu0 %v605
  %1287 = vmatmul.mubr.bf16.gmra.mxu0 %v604
  %v1288 = vpop.f32.mrf.mxu0
  %v1289 = vadd.f32 %v1057, %v1288
  %v1290 = vpop.f32.mrf.mxu0
  %v1291 = vpop.f32.mrf.mxu0
  %v1292 = vadd.f32 %v1060, %v1291
  %v1293 = vpop.f32.mrf.mxu0
  %1294 = vmatprep.mubr.bf16.mxu0 %v609
  %1295 = vmatmul.mubr.bf16.gmra.mxu0 %v608
  %v1296 = vpop.f32.mrf.mxu0
  %v1297 = vadd.f32 %v1065, %v1296
  %v1298 = vpop.f32.mrf.mxu0
  %v1299 = vpop.f32.mrf.mxu0
  %v1300 = vadd.f32 %v1068, %v1299
  %v1301 = vpop.f32.mrf.mxu0
  %1302 = vmatprep.mubr.bf16.mxu0 %v613
  %1303 = vmatmul.mubr.bf16.gmra.mxu0 %v612
  %v1304 = vpop.f32.mrf.mxu0
  %v1305 = vadd.f32 %v1073, %v1304
  %v1306 = vpop.f32.mrf.mxu0
  %v1307 = vpop.f32.mrf.mxu0
  %v1308 = vadd.f32 %v1076, %v1307
  %v1309 = vpop.f32.mrf.mxu0
  %1310 = vmatprep.mubr.bf16.mxu0 %v617
  %1311 = vmatmul.mubr.bf16.gmra.mxu0 %v616
  %v1312 = vpop.f32.mrf.mxu0
  %v1313 = vadd.f32 %v1081, %v1312
  %v1314 = vpop.f32.mrf.mxu0
  %v1315 = vpop.f32.mrf.mxu0
  %v1316 = vadd.f32 %v1084, %v1315
  %v1317 = vpop.f32.mrf.mxu0
  %1318 = vmatprep.mubr.bf16.mxu0 %v621
  %1319 = vmatmul.mubr.bf16.gmra.mxu0 %v620
  %v1320 = vpop.f32.mrf.mxu0
  %v1321 = vadd.f32 %v1089, %v1320
  %v1322 = vpop.f32.mrf.mxu0
  %v1323 = vpop.f32.mrf.mxu0
  %v1324 = vadd.f32 %v1092, %v1323
  %v1325 = vpop.f32.mrf.mxu0
  %1326 = vmatprep.mubr.bf16.mxu0 %v625
  %1327 = vmatmul.mubr.bf16.gmra.mxu0 %v624
  %v1328 = vpop.f32.mrf.mxu0
  %v1329 = vadd.f32 %v1097, %v1328
  %v1330 = vpop.f32.mrf.mxu0
  %v1331 = vpop.f32.mrf.mxu0
  %v1332 = vadd.f32 %v1100, %v1331
  %v1333 = vpop.f32.mrf.mxu0
  %1334 = vmatprep.mubr.bf16.mxu0 %v629
  %1335 = vmatmul.mubr.bf16.gmra.mxu0 %v628
  %v1336 = vpop.f32.mrf.mxu0
  %v1337 = vadd.f32 %v1105, %v1336
  %v1338 = vpop.f32.mrf.mxu0
  %v1339 = vpop.f32.mrf.mxu0
  %v1340 = vadd.f32 %v1108, %v1339
  %v1341 = vpop.f32.mrf.mxu0
  %1342 = vmatprep.mubr.bf16.mxu0 %v633
  %1343 = vmatmul.mubr.bf16.gmra.mxu0 %v632
  %v1344 = vpop.f32.mrf.mxu0
  %v1345 = vadd.f32 %v1113, %v1344
  %v1346 = vpop.f32.mrf.mxu0
  %v1347 = vpop.f32.mrf.mxu0
  %v1348 = vadd.f32 %v1116, %v1347
  %v1349 = vpop.f32.mrf.mxu0
  %1350 = vmatprep.mubr.bf16.mxu0 %v637
  %1351 = vmatmul.mubr.bf16.gmra.mxu0 %v636
  %v1352 = vpop.f32.mrf.mxu0
  %v1353 = vadd.f32 %v1121, %v1352
  %v1354 = vpop.f32.mrf.mxu0
  %v1355 = vpop.f32.mrf.mxu0
  %v1356 = vadd.f32 %v1124, %v1355
  %v1357 = vpop.f32.mrf.mxu0
  %1358 = vmatprep.mubr.bf16.mxu0 %v641
  %1359 = vmatmul.mubr.bf16.gmra.mxu0 %v640
  %v1360 = vpop.f32.mrf.mxu0
  %v1361 = vadd.f32 %v1129, %v1360
  %v1362 = vpop.f32.mrf.mxu0
  %v1363 = vpop.f32.mrf.mxu0
  %v1364 = vadd.f32 %v1132, %v1363
  %v1365 = vpop.f32.mrf.mxu0
  %1366 = vmatprep.mubr.bf16.mxu0 %v645
  %1367 = vmatmul.mubr.bf16.gmra.mxu0 %v644
  %v1368 = vpop.f32.mrf.mxu0
  %v1369 = vadd.f32 %v1137, %v1368
  %v1370 = vpop.f32.mrf.mxu0
  %v1371 = vpop.f32.mrf.mxu0
  %v1372 = vadd.f32 %v1140, %v1371
  %v1373 = vpop.f32.mrf.mxu0
  %1374 = vmatprep.mubr.bf16.mxu0 %v649
  %1375 = vmatmul.mubr.bf16.gmra.mxu0 %v648
  %v1376 = vpop.f32.mrf.mxu0
  %v1377 = vadd.f32 %v1145, %v1376
  %v1378 = vpop.f32.mrf.mxu0
  %v1379 = vpop.f32.mrf.mxu0
  %v1380 = vadd.f32 %v1148, %v1379
  %v1381 = vpop.f32.mrf.mxu0
  %1382 = vmatprep.mubr.bf16.mxu0 %v653
  %1383 = vmatmul.mubr.bf16.gmra.mxu0 %v652
  %v1384 = vpop.f32.mrf.mxu0
  %v1385 = vadd.f32 %v1153, %v1384
  %v1386 = vpop.f32.mrf.mxu0
  %v1387 = vpop.f32.mrf.mxu0
  %v1388 = vadd.f32 %v1156, %v1387
  %v1389 = vpop.f32.mrf.mxu0
  %1390 = vmatprep.mubr.bf16.mxu0 %v657
  %1391 = vmatmul.mubr.bf16.gmra.mxu0 %v656
  %v1392 = vpop.f32.mrf.mxu0
  %v1393 = vadd.f32 %v1161, %v1392
  %v1394 = vpop.f32.mrf.mxu0
  %v1395 = vpop.f32.mrf.mxu0
  %v1396 = vadd.f32 %v1164, %v1395
  %v1397 = vpop.f32.mrf.mxu0
  %1398 = vmatprep.mubr.bf16.mxu0 %v661
  %1399 = vmatmul.mubr.bf16.gmra.mxu0 %v660
  %v1400 = vpop.f32.mrf.mxu0
  %v1401 = vadd.f32 %v1169, %v1400
  %v1402 = vpop.f32.mrf.mxu0
  %v1403 = vpop.f32.mrf.mxu0
  %v1404 = vadd.f32 %v1172, %v1403
  %v1405 = vpop.f32.mrf.mxu0
  %1406 = vmatprep.mubr.bf16.mxu0 %v665
  %1407 = vmatmul.mubr.bf16.gmra.mxu0 %v664
  %v1408 = vpop.f32.mrf.mxu0
  %v1409 = vadd.f32 %v1177, %v1408
  %v1410 = vpop.f32.mrf.mxu0
  %v1411 = vpop.f32.mrf.mxu0
  %v1412 = vadd.f32 %v1180, %v1411
  %v1413 = vpop.f32.mrf.mxu0
  %1414 = vmatprep.mubr.bf16.mxu0 %v669
  %1415 = vmatmul.mubr.bf16.gmra.mxu0 %v668
  %v1416 = vpop.f32.mrf.mxu0
  %v1417 = vadd.f32 %v1185, %v1416
  %v1418 = vpop.f32.mrf.mxu0
  %v1419 = vpop.f32.mrf.mxu0
  %v1420 = vadd.f32 %v1188, %v1419
  %v1421 = vpop.f32.mrf.mxu0
  %1422 = vmatprep.mubr.bf16.mxu0 %v673
  %1423 = vmatmul.mubr.bf16.gmra.mxu0 %v672
  %v1424 = vpop.f32.mrf.mxu0
  %v1425 = vadd.f32 %v1193, %v1424
  %v1426 = vpop.f32.mrf.mxu0
  %v1427 = vpop.f32.mrf.mxu0
  %v1428 = vpop.f32.mrf.mxu0
  %1429 = vdwg.mxu0
  %v1430 = vadd.f32 %v69, %v1233
  %v1431 = vadd.f32 %v70, %v1236
  %v1432 = vadd.f32 %v71, %v1241
  %v1433 = vadd.f32 %v72, %v1244
  %v1434 = vadd.f32 %v73, %v1249
  %v1435 = vadd.f32 %v74, %v1252
  %v1436 = vadd.f32 %v75, %v1257
  %v1437 = vadd.f32 %v76, %v1260
  %v1438 = vadd.f32 %v77, %v1265
  %v1439 = vadd.f32 %v78, %v1268
  %v1440 = vadd.f32 %v79, %v1273
  %v1441 = vadd.f32 %v80, %v1276
  %v1442 = vadd.f32 %v81, %v1281
  %v1443 = vadd.f32 %v82, %v1284
  %v1444 = vadd.f32 %v83, %v1289
  %v1445 = vadd.f32 %v84, %v1292
  %v1446 = vadd.f32 %v85, %v1297
  %v1447 = vadd.f32 %v86, %v1300
  %v1448 = vadd.f32 %v87, %v1305
  %v1449 = vadd.f32 %v88, %v1308
  %v1450 = vadd.f32 %v89, %v1313
  %v1451 = vadd.f32 %v90, %v1316
  %v1452 = vadd.f32 %v91, %v1321
  %v1453 = vadd.f32 %v92, %v1324
  %v1454 = vadd.f32 %v93, %v1329
  %v1455 = vadd.f32 %v94, %v1332
  %v1456 = vadd.f32 %v95, %v1337
  %v1457 = vadd.f32 %v96, %v1340
  %v1458 = vadd.f32 %v97, %v1345
  %v1459 = vadd.f32 %v98, %v1348
  %v1460 = vadd.f32 %v99, %v1353
  %v1461 = vadd.f32 %v100, %v1356
  %v1462 = vadd.f32 %v101, %v1361
  %v1463 = vadd.f32 %v102, %v1364
  %v1464 = vadd.f32 %v103, %v1369
  %v1465 = vadd.f32 %v104, %v1372
  %v1466 = vadd.f32 %v105, %v1377
  %v1467 = vadd.f32 %v106, %v1380
  %v1468 = vadd.f32 %v107, %v1385
  %v1469 = vadd.f32 %v108, %v1388
  %v1470 = vadd.f32 %v109, %v1393
  %v1471 = vadd.f32 %v110, %v1396
  %v1472 = vadd.f32 %v111, %v1401
  %v1473 = vadd.f32 %v112, %v1404
  %v1474 = vadd.f32 %v113, %v1409
  %v1475 = vadd.f32 %v114, %v1412
  %v1476 = vadd.f32 %v115, %v1417
  %v1477 = vadd.f32 %v116, %v1420
  %v1478 = vadd.f32 %v117, %v1425
  %vm1479 = vcmask 523264
  %1480 = vst.msk [vmem:[#allocation2] sm:$0xff] %vm1479, %v1430
  %1481 = vst.msk [vmem:[#allocation2 + $0x8] sm:$0xff] %vm1479, %v1431
  %1482 = vst.msk [vmem:[#allocation2 + $0x10] sm:$0xff] %vm1479, %v1432
  %1483 = vst.msk [vmem:[#allocation2 + $0x18] sm:$0xff] %vm1479, %v1433
  %1484 = vst.msk [vmem:[#allocation2 + $0x20] sm:$0xff] %vm1479, %v1434
  %1485 = vst.msk [vmem:[#allocation2 + $0x28] sm:$0xff] %vm1479, %v1435
  %1486 = vst.msk [vmem:[#allocation2 + $0x30] sm:$0xff] %vm1479, %v1436
  %1487 = vst.msk [vmem:[#allocation2 + $0x38] sm:$0xff] %vm1479, %v1437
  %1488 = vst.msk [vmem:[#allocation2 + $0x40] sm:$0xff] %vm1479, %v1438
  %1489 = vst.msk [vmem:[#allocation2 + $0x48] sm:$0xff] %vm1479, %v1439
  %1490 = vst.msk [vmem:[#allocation2 + $0x50] sm:$0xff] %vm1479, %v1440
  %1491 = vst.msk [vmem:[#allocation2 + $0x58] sm:$0xff] %vm1479, %v1441
  %1492 = vst.msk [vmem:[#allocation2 + $0x60] sm:$0xff] %vm1479, %v1442
  %1493 = vst.msk [vmem:[#allocation2 + $0x68] sm:$0xff] %vm1479, %v1443
  %1494 = vst.msk [vmem:[#allocation2 + $0x70] sm:$0xff] %vm1479, %v1444
  %1495 = vst.msk [vmem:[#allocation2 + $0x78] sm:$0xff] %vm1479, %v1445
  %1496 = vst.msk [vmem:[#allocation2 + $0x80] sm:$0xff] %vm1479, %v1446
  %1497 = vst.msk [vmem:[#allocation2 + $0x88] sm:$0xff] %vm1479, %v1447
  %1498 = vst.msk [vmem:[#allocation2 + $0x90] sm:$0xff] %vm1479, %v1448
  %1499 = vst.msk [vmem:[#allocation2 + $0x98] sm:$0xff] %vm1479, %v1449
  %1500 = vst.msk [vmem:[#allocation2 + $0xa0] sm:$0xff] %vm1479, %v1450
  %1501 = vst.msk [vmem:[#allocation2 + $0xa8] sm:$0xff] %vm1479, %v1451
  %1502 = vst.msk [vmem:[#allocation2 + $0xb0] sm:$0xff] %vm1479, %v1452
  %1503 = vst.msk [vmem:[#allocation2 + $0xb8] sm:$0xff] %vm1479, %v1453
  %1504 = vst.msk [vmem:[#allocation2 + $0xc0] sm:$0xff] %vm1479, %v1454
  %1505 = vst.msk [vmem:[#allocation2 + $0xc8] sm:$0xff] %vm1479, %v1455
  %1506 = vst.msk [vmem:[#allocation2 + $0xd0] sm:$0xff] %vm1479, %v1456
  %1507 = vst.msk [vmem:[#allocation2 + $0xd8] sm:$0xff] %vm1479, %v1457
  %1508 = vst.msk [vmem:[#allocation2 + $0xe0] sm:$0xff] %vm1479, %v1458
  %1509 = vst.msk [vmem:[#allocation2 + $0xe8] sm:$0xff] %vm1479, %v1459
  %1510 = vst.msk [vmem:[#allocation2 + $0xf0] sm:$0xff] %vm1479, %v1460
  %1511 = vst.msk [vmem:[#allocation2 + $0xf8] sm:$0xff] %vm1479, %v1461
  %1512 = vst.msk [vmem:[#allocation2 + $0x100] sm:$0xff] %vm1479, %v1462
  %1513 = vst.msk [vmem:[#allocation2 + $0x108] sm:$0xff] %vm1479, %v1463
  %1514 = vst.msk [vmem:[#allocation2 + $0x110] sm:$0xff] %vm1479, %v1464
  %1515 = vst.msk [vmem:[#allocation2 + $0x118] sm:$0xff] %vm1479, %v1465
  %1516 = vst.msk [vmem:[#allocation2 + $0x120] sm:$0xff] %vm1479, %v1466
  %1517 = vst.msk [vmem:[#allocation2 + $0x128] sm:$0xff] %vm1479, %v1467
  %1518 = vst.msk [vmem:[#allocation2 + $0x130] sm:$0xff] %vm1479, %v1468
  %1519 = vst.msk [vmem:[#allocation2 + $0x138] sm:$0xff] %vm1479, %v1469
  %1520 = vst.msk [vmem:[#allocation2 + $0x140] sm:$0xff] %vm1479, %v1470
  %1521 = vst.msk [vmem:[#allocation2 + $0x148] sm:$0xff] %vm1479, %v1471
  %1522 = vst.msk [vmem:[#allocation2 + $0x150] sm:$0xff] %vm1479, %v1472
  %1523 = vst.msk [vmem:[#allocation2 + $0x158] sm:$0xff] %vm1479, %v1473
  %1524 = vst.msk [vmem:[#allocation2 + $0x160] sm:$0xff] %vm1479, %v1474
  %1525 = vst.msk [vmem:[#allocation2 + $0x168] sm:$0xff] %vm1479, %v1475
  %1526 = vst.msk [vmem:[#allocation2 + $0x170] sm:$0xff] %vm1479, %v1476
  %1527 = vst.msk [vmem:[#allocation2 + $0x178] sm:$0xff] %vm1479, %v1477
  %1528 = vst.msk [vmem:[#allocation2 + $0x180] sm:$0xff] %vm1479, %v1478
  // Predicated region
  $region18: #{encoder_forward.5} parent=0 // pred_check
    %p1529 = pneg %p15
  $region19: #{encoder_forward.5} parent=0 // pred_check_branch
    %1531 = sbr.rel (%p1529) target = $region21
  $region20: #{encoder_forward.5} parent=0 // pred_region
    %v1532 = vld [vmem:[#allocation2] sm:$0xff]
    %v1533 = vld [vmem:[#allocation2 + $0x8] sm:$0xff]
    %v1534 = vld [vmem:[#allocation2 + $0x10] sm:$0xff]
    %v1535 = vld [vmem:[#allocation2 + $0x18] sm:$0xff]
    %v1536 = vld [vmem:[#allocation2 + $0x20] sm:$0xff]
    %v1537 = vld [vmem:[#allocation2 + $0x28] sm:$0xff]
    %v1538 = vld [vmem:[#allocation2 + $0x30] sm:$0xff]
    %v1539 = vld [vmem:[#allocation2 + $0x38] sm:$0xff]
    %v1540 = vld [vmem:[#allocation2 + $0x40] sm:$0xff]
    %v1541 = vld [vmem:[#allocation2 + $0x48] sm:$0xff]
    %v1542 = vld [vmem:[#allocation2 + $0x50] sm:$0xff]
    %v1543 = vld [vmem:[#allocation2 + $0x58] sm:$0xff]
    %v1544 = vld [vmem:[#allocation2 + $0x60] sm:$0xff]
    %v1545 = vld [vmem:[#allocation2 + $0x68] sm:$0xff]
    %v1546 = vld [vmem:[#allocation2 + $0x70] sm:$0xff]
    %v1547 = vld [vmem:[#allocation2 + $0x78] sm:$0xff]
    %v1548 = vld [vmem:[#allocation2 + $0x80] sm:$0xff]
    %v1549 = vld [vmem:[#allocation2 + $0x88] sm:$0xff]
    %v1550 = vld [vmem:[#allocation2 + $0x90] sm:$0xff]
    %v1551 = vld [vmem:[#allocation2 + $0x98] sm:$0xff]
    %v1552 = vld [vmem:[#allocation2 + $0xa0] sm:$0xff]
    %v1553 = vld [vmem:[#allocation2 + $0xa8] sm:$0xff]
    %v1554 = vld [vmem:[#allocation2 + $0xb0] sm:$0xff]
    %v1555 = vld [vmem:[#allocation2 + $0xb8] sm:$0xff]
    %v1556 = vld [vmem:[#allocation2 + $0xc0] sm:$0xff]
    %v1557 = vld [vmem:[#allocation2 + $0xc8] sm:$0xff]
    %v1558 = vld [vmem:[#allocation2 + $0xd0] sm:$0xff]
    %v1559 = vld [vmem:[#allocation2 + $0xd8] sm:$0xff]
    %v1560 = vld [vmem:[#allocation2 + $0xe0] sm:$0xff]
    %v1561 = vld [vmem:[#allocation2 + $0xe8] sm:$0xff]
    %v1562 = vld [vmem:[#allocation2 + $0xf0] sm:$0xff]
    %v1563 = vld [vmem:[#allocation2 + $0xf8] sm:$0xff]
    %v1564 = vld [vmem:[#allocation2 + $0x100] sm:$0xff]
    %v1565 = vld [vmem:[#allocation2 + $0x108] sm:$0xff]
    %v1566 = vld [vmem:[#allocation2 + $0x110] sm:$0xff]
    %v1567 = vld [vmem:[#allocation2 + $0x118] sm:$0xff]
    %v1568 = vld [vmem:[#allocation2 + $0x120] sm:$0xff]
    %v1569 = vld [vmem:[#allocation2 + $0x128] sm:$0xff]
    %v1570 = vld [vmem:[#allocation2 + $0x130] sm:$0xff]
    %v1571 = vld [vmem:[#allocation2 + $0x138] sm:$0xff]
    %v1572 = vld [vmem:[#allocation2 + $0x140] sm:$0xff]
    %v1573 = vld [vmem:[#allocation2 + $0x148] sm:$0xff]
    %v1574 = vld [vmem:[#allocation2 + $0x150] sm:$0xff]
    %v1575 = vld [vmem:[#allocation2 + $0x158] sm:$0xff]
    %v1576 = vld [vmem:[#allocation2 + $0x160] sm:$0xff]
    %v1577 = vld [vmem:[#allocation2 + $0x168] sm:$0xff]
    %v1578 = vld [vmem:[#allocation2 + $0x170] sm:$0xff]
    %v1579 = vld [vmem:[#allocation2 + $0x178] sm:$0xff]
    %v1580 = vld [vmem:[#allocation2 + $0x180] sm:$0xff]
    %v1581 = vld [vmem:[%s2] sm:$0x1]
    %v1583 = vlaneseq
    %v1584 = vshrl.u32 %v1583, 7
    %v1585 = vsub.s32 0, %v1584
    %v1586 = vrot.slane %v1581, %v1585
    %v1588 = vadd.f32 %v1532, %v1586
    %v1589 = vadd.f32 %v1533, %v1586
    %v1590 = vadd.f32 %v1534, %v1586
    %v1591 = vadd.f32 %v1535, %v1586
    %v1592 = vadd.f32 %v1536, %v1586
    %v1593 = vadd.f32 %v1537, %v1586
    %v1594 = vadd.f32 %v1538, %v1586
    %v1595 = vadd.f32 %v1539, %v1586
    %v1596 = vadd.f32 %v1540, %v1586
    %v1597 = vadd.f32 %v1541, %v1586
    %v1598 = vadd.f32 %v1542, %v1586
    %v1599 = vadd.f32 %v1543, %v1586
    %v1600 = vadd.f32 %v1544, %v1586
    %v1601 = vadd.f32 %v1545, %v1586
    %v1602 = vadd.f32 %v1546, %v1586
    %v1603 = vadd.f32 %v1547, %v1586
    %v1604 = vadd.f32 %v1548, %v1586
    %v1605 = vadd.f32 %v1549, %v1586
    %v1606 = vadd.f32 %v1550, %v1586
    %v1607 = vadd.f32 %v1551, %v1586
    %v1608 = vadd.f32 %v1552, %v1586
    %v1609 = vadd.f32 %v1553, %v1586
    %v1610 = vadd.f32 %v1554, %v1586
    %v1611 = vadd.f32 %v1555, %v1586
    %v1612 = vadd.f32 %v1556, %v1586
    %v1613 = vadd.f32 %v1557, %v1586
    %v1614 = vadd.f32 %v1558, %v1586
    %v1615 = vadd.f32 %v1559, %v1586
    %v1616 = vadd.f32 %v1560, %v1586
    %v1617 = vadd.f32 %v1561, %v1586
    %v1618 = vadd.f32 %v1562, %v1586
    %v1619 = vadd.f32 %v1563, %v1586
    %v1620 = vadd.f32 %v1564, %v1586
    %v1621 = vadd.f32 %v1565, %v1586
    %v1622 = vadd.f32 %v1566, %v1586
    %v1623 = vadd.f32 %v1567, %v1586
    %v1624 = vadd.f32 %v1568, %v1586
    %v1625 = vadd.f32 %v1569, %v1586
    %v1626 = vadd.f32 %v1570, %v1586
    %v1627 = vadd.f32 %v1571, %v1586
    %v1628 = vadd.f32 %v1572, %v1586
    %v1629 = vadd.f32 %v1573, %v1586
    %v1630 = vadd.f32 %v1574, %v1586
    %v1631 = vadd.f32 %v1575, %v1586
    %v1632 = vadd.f32 %v1576, %v1586
    %v1633 = vadd.f32 %v1577, %v1586
    %v1634 = vadd.f32 %v1578, %v1586
    %v1635 = vadd.f32 %v1579, %v1586
    %v1636 = vadd.f32 %v1580, %v1586
    %v1637 = vmax.f32 %v1588, 0.0
    %v1638 = vmax.f32 %v1589, 0.0
    %v1639 = vmax.f32 %v1590, 0.0
    %v1640 = vmax.f32 %v1591, 0.0
    %v1641 = vmax.f32 %v1592, 0.0
    %v1642 = vmax.f32 %v1593, 0.0
    %v1643 = vmax.f32 %v1594, 0.0
    %v1644 = vmax.f32 %v1595, 0.0
    %v1645 = vmax.f32 %v1596, 0.0
    %v1646 = vmax.f32 %v1597, 0.0
    %v1647 = vmax.f32 %v1598, 0.0
    %v1648 = vmax.f32 %v1599, 0.0
    %v1649 = vmax.f32 %v1600, 0.0
    %v1650 = vmax.f32 %v1601, 0.0
    %v1651 = vmax.f32 %v1602, 0.0
    %v1652 = vmax.f32 %v1603, 0.0
    %v1653 = vmax.f32 %v1604, 0.0
    %v1654 = vmax.f32 %v1605, 0.0
    %v1655 = vmax.f32 %v1606, 0.0
    %v1656 = vmax.f32 %v1607, 0.0
    %v1657 = vmax.f32 %v1608, 0.0
    %v1658 = vmax.f32 %v1609, 0.0
    %v1659 = vmax.f32 %v1610, 0.0
    %v1660 = vmax.f32 %v1611, 0.0
    %v1661 = vmax.f32 %v1612, 0.0
    %v1662 = vmax.f32 %v1613, 0.0
    %v1663 = vmax.f32 %v1614, 0.0
    %v1664 = vmax.f32 %v1615, 0.0
    %v1665 = vmax.f32 %v1616, 0.0
    %v1666 = vmax.f32 %v1617, 0.0
    %v1667 = vmax.f32 %v1618, 0.0
    %v1668 = vmax.f32 %v1619, 0.0
    %v1669 = vmax.f32 %v1620, 0.0
    %v1670 = vmax.f32 %v1621, 0.0
    %v1671 = vmax.f32 %v1622, 0.0
    %v1672 = vmax.f32 %v1623, 0.0
    %v1673 = vmax.f32 %v1624, 0.0
    %v1674 = vmax.f32 %v1625, 0.0
    %v1675 = vmax.f32 %v1626, 0.0
    %v1676 = vmax.f32 %v1627, 0.0
    %v1677 = vmax.f32 %v1628, 0.0
    %v1678 = vmax.f32 %v1629, 0.0
    %v1679 = vmax.f32 %v1630, 0.0
    %v1680 = vmax.f32 %v1631, 0.0
    %v1681 = vmax.f32 %v1632, 0.0
    %v1682 = vmax.f32 %v1633, 0.0
    %v1683 = vmax.f32 %v1634, 0.0
    %v1684 = vmax.f32 %v1635, 0.0
    %v1685 = vmax.f32 %v1636, 0.0
    %v1686 = vpack.c.bf16 %v1638, %v1637
    %v1687 = vpack.c.bf16 %v1640, %v1639
    %v1688 = vpack.c.bf16 %v1642, %v1641
    %v1689 = vpack.c.bf16 %v1644, %v1643
    %v1690 = vpack.c.bf16 %v1646, %v1645
    %v1691 = vpack.c.bf16 %v1648, %v1647
    %v1692 = vpack.c.bf16 %v1650, %v1649
    %v1693 = vpack.c.bf16 %v1652, %v1651
    %v1694 = vpack.c.bf16 %v1654, %v1653
    %v1695 = vpack.c.bf16 %v1656, %v1655
    %v1696 = vpack.c.bf16 %v1658, %v1657
    %v1697 = vpack.c.bf16 %v1660, %v1659
    %v1698 = vpack.c.bf16 %v1662, %v1661
    %v1699 = vpack.c.bf16 %v1664, %v1663
    %v1700 = vpack.c.bf16 %v1666, %v1665
    %v1701 = vpack.c.bf16 %v1668, %v1667
    %v1702 = vpack.c.bf16 %v1670, %v1669
    %v1703 = vpack.c.bf16 %v1672, %v1671
    %v1704 = vpack.c.bf16 %v1674, %v1673
    %v1705 = vpack.c.bf16 %v1676, %v1675
    %v1706 = vpack.c.bf16 %v1678, %v1677
    %v1707 = vpack.c.bf16 %v1680, %v1679
    %v1708 = vpack.c.bf16 %v1682, %v1681
    %v1709 = vpack.c.bf16 %v1684, %v1683
    %v1710 = vpack.c.bf16 %v1685, %v1685
    %v1736 = vunpack.c.l.b16 %v1686
    %v1737 = vunpack.c.h.b16 %v1686
    %v1738 = vunpack.c.l.b16 %v1687
    %v1739 = vunpack.c.h.b16 %v1687
    %v1740 = vunpack.c.l.b16 %v1688
    %v1741 = vunpack.c.h.b16 %v1688
    %v1742 = vunpack.c.l.b16 %v1689
    %v1743 = vunpack.c.h.b16 %v1689
    %v1744 = vunpack.c.l.b16 %v1690
    %v1745 = vunpack.c.h.b16 %v1690
    %v1746 = vunpack.c.l.b16 %v1691
    %v1747 = vunpack.c.h.b16 %v1691
    %v1748 = vunpack.c.l.b16 %v1692
    %v1749 = vunpack.c.h.b16 %v1692
    %v1750 = vunpack.c.l.b16 %v1693
    %v1751 = vunpack.c.h.b16 %v1693
    %v1752 = vunpack.c.l.b16 %v1694
    %v1753 = vunpack.c.h.b16 %v1694
    %v1754 = vunpack.c.l.b16 %v1695
    %v1755 = vunpack.c.h.b16 %v1695
    %v1756 = vunpack.c.l.b16 %v1696
    %v1757 = vunpack.c.h.b16 %v1696
    %v1758 = vunpack.c.l.b16 %v1697
    %v1759 = vunpack.c.h.b16 %v1697
    %v1760 = vunpack.c.l.b16 %v1698
    %v1761 = vunpack.c.h.b16 %v1698
    %v1762 = vunpack.c.l.b16 %v1699
    %v1763 = vunpack.c.h.b16 %v1699
    %v1764 = vunpack.c.l.b16 %v1700
    %v1765 = vunpack.c.h.b16 %v1700
    %v1766 = vunpack.c.l.b16 %v1701
    %v1767 = vunpack.c.h.b16 %v1701
    %v1768 = vunpack.c.l.b16 %v1702
    %v1769 = vunpack.c.h.b16 %v1702
    %v1770 = vunpack.c.l.b16 %v1703
    %v1771 = vunpack.c.h.b16 %v1703
    %v1772 = vunpack.c.l.b16 %v1704
    %v1773 = vunpack.c.h.b16 %v1704
    %v1774 = vunpack.c.l.b16 %v1705
    %v1775 = vunpack.c.h.b16 %v1705
    %v1776 = vunpack.c.l.b16 %v1706
    %v1777 = vunpack.c.h.b16 %v1706
    %v1778 = vunpack.c.l.b16 %v1707
    %v1779 = vunpack.c.h.b16 %v1707
    %v1780 = vunpack.c.l.b16 %v1708
    %v1781 = vunpack.c.h.b16 %v1708
    %v1782 = vunpack.c.l.b16 %v1709
    %v1783 = vunpack.c.h.b16 %v1709
    %v1784 = vunpack.c.l.b16 %v1710
    %v1785 = vpack.c.b16 %v1736, %v1736
    %v1786 = vpack.c.b16 %v1737, %v1737
    %v1787 = vpack.c.b16 %v1738, %v1738
    %v1788 = vpack.c.b16 %v1739, %v1739
    %v1789 = vpack.c.b16 %v1740, %v1740
    %v1790 = vpack.c.b16 %v1741, %v1741
    %v1791 = vpack.c.b16 %v1742, %v1742
    %v1792 = vpack.c.b16 %v1743, %v1743
    %v1793 = vpack.c.b16 %v1744, %v1744
    %v1794 = vpack.c.b16 %v1745, %v1745
    %v1795 = vpack.c.b16 %v1746, %v1746
    %v1796 = vpack.c.b16 %v1747, %v1747
    %v1797 = vpack.c.b16 %v1748, %v1748
    %v1798 = vpack.c.b16 %v1749, %v1749
    %v1799 = vpack.c.b16 %v1750, %v1750
    %v1800 = vpack.c.b16 %v1751, %v1751
    %v1801 = vpack.c.b16 %v1752, %v1752
    %v1802 = vpack.c.b16 %v1753, %v1753
    %v1803 = vpack.c.b16 %v1754, %v1754
    %v1804 = vpack.c.b16 %v1755, %v1755
    %v1805 = vpack.c.b16 %v1756, %v1756
    %v1806 = vpack.c.b16 %v1757, %v1757
    %v1807 = vpack.c.b16 %v1758, %v1758
    %v1808 = vpack.c.b16 %v1759, %v1759
    %v1809 = vpack.c.b16 %v1760, %v1760
    %v1810 = vpack.c.b16 %v1761, %v1761
    %v1811 = vpack.c.b16 %v1762, %v1762
    %v1812 = vpack.c.b16 %v1763, %v1763
    %v1813 = vpack.c.b16 %v1764, %v1764
    %v1814 = vpack.c.b16 %v1765, %v1765
    %v1815 = vpack.c.b16 %v1766, %v1766
    %v1816 = vpack.c.b16 %v1767, %v1767
    %v1817 = vpack.c.b16 %v1768, %v1768
    %v1818 = vpack.c.b16 %v1769, %v1769
    %v1819 = vpack.c.b16 %v1770, %v1770
    %v1820 = vpack.c.b16 %v1771, %v1771
    %v1821 = vpack.c.b16 %v1772, %v1772
    %v1822 = vpack.c.b16 %v1773, %v1773
    %v1823 = vpack.c.b16 %v1774, %v1774
    %v1824 = vpack.c.b16 %v1775, %v1775
    %v1825 = vpack.c.b16 %v1776, %v1776
    %v1826 = vpack.c.b16 %v1777, %v1777
    %v1827 = vpack.c.b16 %v1778, %v1778
    %v1828 = vpack.c.b16 %v1779, %v1779
    %v1829 = vpack.c.b16 %v1780, %v1780
    %v1830 = vpack.c.b16 %v1781, %v1781
    %v1831 = vpack.c.b16 %v1782, %v1782
    %v1832 = vpack.c.b16 %v1783, %v1783
    %v1833 = vpack.c.b16 %v1784, %v1784
    %vm1883 = vcmask 519168
    %1884 = vst.msk [vmem:[%s3] sm:$0xf] %vm1883, %v1785
    %1885 = vst.msk [vmem:[%s3 + $0x4] sm:$0xf] %vm1883, %v1786
    %1886 = vst.msk [vmem:[%s3 + $0x8] sm:$0xf] %vm1883, %v1787
    %1887 = vst.msk [vmem:[%s3 + $0xc] sm:$0xf] %vm1883, %v1788
    %1888 = vst.msk [vmem:[%s3 + $0x10] sm:$0xf] %vm1883, %v1789
    %1889 = vst.msk [vmem:[%s3 + $0x14] sm:$0xf] %vm1883, %v1790
    %1890 = vst.msk [vmem:[%s3 + $0x18] sm:$0xf] %vm1883, %v1791
    %1891 = vst.msk [vmem:[%s3 + $0x1c] sm:$0xf] %vm1883, %v1792
    %1892 = vst.msk [vmem:[%s3 + $0x20] sm:$0xf] %vm1883, %v1793
    %1893 = vst.msk [vmem:[%s3 + $0x24] sm:$0xf] %vm1883, %v1794
    %1894 = vst.msk [vmem:[%s3 + $0x28] sm:$0xf] %vm1883, %v1795
    %1895 = vst.msk [vmem:[%s3 + $0x2c] sm:$0xf] %vm1883, %v1796
    %1896 = vst.msk [vmem:[%s3 + $0x30] sm:$0xf] %vm1883, %v1797
    %1897 = vst.msk [vmem:[%s3 + $0x34] sm:$0xf] %vm1883, %v1798
    %1898 = vst.msk [vmem:[%s3 + $0x38] sm:$0xf] %vm1883, %v1799
    %1899 = vst.msk [vmem:[%s3 + $0x3c] sm:$0xf] %vm1883, %v1800
    %1900 = vst.msk [vmem:[%s3 + $0x40] sm:$0xf] %vm1883, %v1801
    %1901 = vst.msk [vmem:[%s3 + $0x44] sm:$0xf] %vm1883, %v1802
    %1902 = vst.msk [vmem:[%s3 + $0x48] sm:$0xf] %vm1883, %v1803
    %1903 = vst.msk [vmem:[%s3 + $0x4c] sm:$0xf] %vm1883, %v1804
    %1904 = vst.msk [vmem:[%s3 + $0x50] sm:$0xf] %vm1883, %v1805
    %1905 = vst.msk [vmem:[%s3 + $0x54] sm:$0xf] %vm1883, %v1806
    %1906 = vst.msk [vmem:[%s3 + $0x58] sm:$0xf] %vm1883, %v1807
    %1907 = vst.msk [vmem:[%s3 + $0x5c] sm:$0xf] %vm1883, %v1808
    %1908 = vst.msk [vmem:[%s3 + $0x60] sm:$0xf] %vm1883, %v1809
    %1909 = vst.msk [vmem:[%s3 + $0x64] sm:$0xf] %vm1883, %v1810
    %1910 = vst.msk [vmem:[%s3 + $0x68] sm:$0xf] %vm1883, %v1811
    %1911 = vst.msk [vmem:[%s3 + $0x6c] sm:$0xf] %vm1883, %v1812
    %1912 = vst.msk [vmem:[%s3 + $0x70] sm:$0xf] %vm1883, %v1813
    %1913 = vst.msk [vmem:[%s3 + $0x74] sm:$0xf] %vm1883, %v1814
    %1914 = vst.msk [vmem:[%s3 + $0x78] sm:$0xf] %vm1883, %v1815
    %1915 = vst.msk [vmem:[%s3 + $0x7c] sm:$0xf] %vm1883, %v1816
    %1916 = vst.msk [vmem:[%s3 + $0x80] sm:$0xf] %vm1883, %v1817
    %1917 = vst.msk [vmem:[%s3 + $0x84] sm:$0xf] %vm1883, %v1818
    %1918 = vst.msk [vmem:[%s3 + $0x88] sm:$0xf] %vm1883, %v1819
    %1919 = vst.msk [vmem:[%s3 + $0x8c] sm:$0xf] %vm1883, %v1820
    %1920 = vst.msk [vmem:[%s3 + $0x90] sm:$0xf] %vm1883, %v1821
    %1921 = vst.msk [vmem:[%s3 + $0x94] sm:$0xf] %vm1883, %v1822
    %1922 = vst.msk [vmem:[%s3 + $0x98] sm:$0xf] %vm1883, %v1823
    %1923 = vst.msk [vmem:[%s3 + $0x9c] sm:$0xf] %vm1883, %v1824
    %1924 = vst.msk [vmem:[%s3 + $0xa0] sm:$0xf] %vm1883, %v1825
    %1925 = vst.msk [vmem:[%s3 + $0xa4] sm:$0xf] %vm1883, %v1826
    %1926 = vst.msk [vmem:[%s3 + $0xa8] sm:$0xf] %vm1883, %v1827
    %1927 = vst.msk [vmem:[%s3 + $0xac] sm:$0xf] %vm1883, %v1828
    %1928 = vst.msk [vmem:[%s3 + $0xb0] sm:$0xf] %vm1883, %v1829
    %1929 = vst.msk [vmem:[%s3 + $0xb4] sm:$0xf] %vm1883, %v1830
    %1930 = vst.msk [vmem:[%s3 + $0xb8] sm:$0xf] %vm1883, %v1831
    %1931 = vst.msk [vmem:[%s3 + $0xbc] sm:$0xf] %vm1883, %v1832
    %1932 = vst.msk [vmem:[%s3 + $0xc0] sm:$0xf] %vm1883, %v1833
  $region21: #{encoder_forward.5} parent=0 // pred_fallthru
    _
  // Predicated region
  $region22: #{encoder_forward.5} parent=0 // pred_check
    _
  $region23: #{encoder_forward.5} parent=0 // pred_check_branch
    %1934 = sbr.rel (0) target = $region25
  $region24: #{encoder_forward.5} parent=0 // pred_region
    _
  $region25: #{encoder_forward.5} parent=0 // pred_fallthru
    _
  // Predicated region
  $region26: #{encoder_forward.5} parent=0 // pred_check
    _
  $region27: #{encoder_forward.5} parent=0 // pred_check_branch
    %1936 = sbr.rel (0) target = $region29
  $region28: #{encoder_forward.5} parent=0 // pred_region
    _
  $region29: #{encoder_forward.5} parent=0 // pred_fallthru
    _

// kernel: encoder_forward.6
$region0: #{encoder_forward.6}
  #allocation0 [shape = 'u32[]', space=smem, size = 0x4, offset = 0x4, fixed_abs, tag = 'smem constant byte address 0x4 - core index']
  #allocation1 [shape = 'u32[144,128]{1,0:T(1,128)}', space=vmem, size = 0x12000, scoped, tag = 'internal scratch']
  #allocation2 [shape = 'f32[72,128]{1,0:T(8,128)}', space=vmem, size = 0x9000, scoped, tag = 'scratch operand']
  %s0 = inlined_call_operand.vmem [shape: bf16[72,1024], index: 0, kind: input, shape index: {}]
  %s1 = inlined_call_operand.vmem [shape: bf16[1024,128], index: 1, kind: input, shape index: {}]
  %s2 = inlined_call_operand.vmem [shape: f32[1,128], index: 2, kind: input, shape index: {}]
  %s3 = inlined_call_operand.vmem [shape: bf16[72,128], index: 3, kind: output, shape index: {}]
  %s4 = sld [smem:[#allocation0]]
  $region76: #{encoder_forward.6} parent=0
    _
  %s6 = ssub.s32 1, %s4
  %s7 = scalar_select 0, %s6, %s4
  $region1: #{encoder_forward.6} parent=0
    #allocation3 [shape = 'u8[147456]{0}', space=vmem, size = 0x24000, scoped, tag = 'input window, operand 0']
    loop: start=0, step=1, limit=4
    $region2: #{encoder_forward.6} parent=1 // loop_pre_header
      _
    $region3: #{encoder_forward.6} parent=1 // loop_header
      %s9 = sphi 0, %s13
      %p10 = scmp.ge.s32.totalorder %s9, 4
      %s16 = sphi 0, %s28
      %s17 = sphi 0, %s24
      %s18 = sphi 0, %s16
      %s19 = sphi 0, %s17
      %s20 = sphi 0, %s18
      %s21 = sphi 0, %s19
      %s33 = sphi 0, %s35
      %s36 = sphi 0, %s33
      %s37 = sphi 0, %s36
      %s53 = sphi 0, %s37
      %s59 = sphi 0, %s61
      %s62 = sphi 0, %s59
      %s63 = sphi 0, %s62
      %s79 = sphi 0, %s63
      %s83 = sphi 0, %s83
      %s85 = sphi 0, %s83
      %s86 = sphi 0, %s85
      %s100 = sphi 0, %s86
      %s106 = sphi 0, %s108
      %s109 = sphi 0, %s106
      %s110 = sphi 0, %s109
      %s126 = sphi 0, %s110
    $region4: #{encoder_forward.6} parent=1 // loop_header_branch
      %12 = sbr.rel (%p10) target = $region8
    $region5: #{encoder_forward.6} parent=1 // loop_body
      %s14 = ssub.s32 %s9, 1
      %s15 = ssub.s32 %s9, 2
      %s22 = sadd.s32 1, %s17
      %p23 = scmp.ge.s32.totalorder %s22, 2
      %s24 = scalar_select %p23, 0, %s22
      %s25 = sadd.s32 1, %s16
      %s26 = scalar_select %p23, %s25, %s16
      %p27 = scmp.ge.s32.totalorder %s26, 1
      %s28 = scalar_select %p27, 0, %s26
      %s29 = ssub.s32 %s16, %s28
      %s30 = ssub.s32 %s17, %s24
      %s31 = sor.u32 %s29, %s30
      %p32 = scmp.eq.s32.totalorder %s31, 0
      %s34 = sadd.s32 %s33, 1
      %s35 = scalar_select %p32, %s33, %s34
      %p38 = pneg %p32
      %p39 = scmp.eq.s32.totalorder %s9, 1
      %p40 = por %p38, %p39
      %p41 = scmp.ne.s32.totalorder %s33, %s36
      %p42 = scmp.eq.s32.totalorder %s9, 0
      %p43 = por %p41, %p42
      %p44 = scmp.ne.s32.totalorder %s33, %s36
      %p45 = scmp.eq.s32.totalorder %s14, 1
      %p46 = por %p44, %p45
      %p47 = scmp.ne.s32.totalorder %s36, %s37
      %p48 = scmp.eq.s32.totalorder %s14, 0
      %p49 = por %p47, %p48
      %p50 = scmp.ne.s32.totalorder %s36, %s37
      %p51 = scmp.eq.s32.totalorder %s15, 1
      %p52 = por %p50, %p51
      %p54 = scmp.ne.s32.totalorder %s37, %s53
      %p55 = scmp.eq.s32.totalorder %s15, 0
      %p56 = por %p54, %p55
      %s57 = ssub.s32 %s17, %s24
      %p58 = scmp.eq.s32.totalorder %s57, 0
      %s60 = sadd.s32 %s59, 1
      %s61 = scalar_select %p58, %s59, %s60
      %p64 = pneg %p58
      %p65 = scmp.eq.s32.totalorder %s9, 1
      %p66 = por %p64, %p65
      %p67 = scmp.ne.s32.totalorder %s59, %s62
      %p68 = scmp.eq.s32.totalorder %s9, 0
      %p69 = por %p67, %p68
      %p70 = scmp.ne.s32.totalorder %s59, %s62
      %p71 = scmp.eq.s32.totalorder %s14, 1
      %p72 = por %p70, %p71
      %p73 = scmp.ne.s32.totalorder %s62, %s63
      %p74 = scmp.eq.s32.totalorder %s14, 0
      %p75 = por %p73, %p74
      %p76 = scmp.ne.s32.totalorder %s62, %s63
      %p77 = scmp.eq.s32.totalorder %s15, 1
      %p78 = por %p76, %p77
      %p80 = scmp.ne.s32.totalorder %s63, %s79
      %p81 = scmp.eq.s32.totalorder %s15, 0
      %p82 = por %p80, %p81
      %s84 = sadd.s32 %s83, 1
      %p87 = scmp.eq.s32.totalorder %s9, 1
      %p88 = scmp.ne.s32.totalorder %s83, %s85
      %p89 = scmp.eq.s32.totalorder %s9, 0
      %p90 = por %p88, %p89
      %p91 = scmp.ne.s32.totalorder %s83, %s85
      %p92 = scmp.eq.s32.totalorder %s14, 1
      %p93 = por %p91, %p92
      %p94 = scmp.ne.s32.totalorder %s85, %s86
      %p95 = scmp.eq.s32.totalorder %s14, 0
      %p96 = por %p94, %p95
      %p97 = scmp.ne.s32.totalorder %s85, %s86
      %p98 = scmp.eq.s32.totalorder %s15, 1
      %p99 = por %p97, %p98
      %p101 = scmp.ne.s32.totalorder %s86, %s100
      %p102 = scmp.eq.s32.totalorder %s15, 0
      %p103 = por %p101, %p102
      %s104 = ssub.s32 %s16, %s28
      %p105 = scmp.eq.s32.totalorder %s104, 0
      %s107 = sadd.s32 %s106, 1
      %s108 = scalar_select %p105, %s106, %s107
      %p111 = pneg %p105
      %p112 = scmp.eq.s32.totalorder %s9, 1
      %p113 = por %p111, %p112
      %p114 = scmp.ne.s32.totalorder %s106, %s109
      %p115 = scmp.eq.s32.totalorder %s9, 0
      %p116 = por %p114, %p115
      %p117 = scmp.ne.s32.totalorder %s106, %s109
      %p118 = scmp.eq.s32.totalorder %s14, 1
      %p119 = por %p117, %p118
      %p120 = scmp.ne.s32.totalorder %s109, %s110
      %p121 = scmp.eq.s32.totalorder %s14, 0
      %p122 = por %p120, %p121
      %p123 = scmp.ne.s32.totalorder %s109, %s110
      %p124 = scmp.eq.s32.totalorder %s15, 1
      %p125 = por %p123, %p124
      %p127 = scmp.ne.s32.totalorder %s110, %s126
      %p128 = scmp.eq.s32.totalorder %s15, 0
      %p129 = por %p127, %p128
      %p130 = scmp.le.s32.totalorder 1, %s9
      %p131 = scmp.lt.s32.totalorder %s9, 3
      %p132 = pnand %p130, %p131
      %p133 = pneg %p132
      // Predicated region
      $region9: #{encoder_forward.6} parent=5 // pred_check
        _
      $region10: #{encoder_forward.6} parent=5 // pred_check_branch
        %135 = sbr.rel (%p132) target = $region12
      $region11: #{encoder_forward.6} parent=5 // pred_region
        %s136 = ssub.s32 %s9, 1
        // Predicated region
        $region13: #{encoder_forward.6} parent=11 // pred_check
          %p137 = pneg %p96
        $region14: #{encoder_forward.6} parent=11 // pred_check_branch
          %139 = sbr.rel (%p137) target = $region16
        $region15: #{encoder_forward.6} parent=11 // pred_region
          _
        $region16: #{encoder_forward.6} parent=11 // pred_fallthru
          _
      $region12: #{encoder_forward.6} parent=5 // pred_fallthru
        _
      %p140 = scmp.lt.s32.totalorder %s9, 2
      // Predicated region
      $region17: #{encoder_forward.6} parent=5 // pred_check
        %p141 = pneg %p140
      $region18: #{encoder_forward.6} parent=5 // pred_check_branch
        %143 = sbr.rel (%p141) target = $region20
      $region19: #{encoder_forward.6} parent=5 // pred_region
        // Predicated region
        $region21: #{encoder_forward.6} parent=19 // pred_check
          %p144 = pneg %p43
        $region22: #{encoder_forward.6} parent=19 // pred_check_branch
          %146 = sbr.rel (%p144) target = $region24
        $region23: #{encoder_forward.6} parent=19 // pred_region
          %s147 = sand.u32 %s33, 1
          %s148 = sand.u32 %s33, 1
          %s149 = smul.addr %s148, 144
          %s150 = scalar_lea.vmem [#allocation3], %s149
          %s151 = smul.u32 9, %s16
          %s152 = smul.u32 4, %s17
          %s153 = smul.addr %s151, 8
          %s154 = sadd.s32 %s152, %s153
          %s155 = smul.addr %s154, 4
          %s156 = scalar_lea.vmem %s0, %s155
          // Predicated region
          $region25: #{encoder_forward.6} parent=23 // pred_check
            _
          $region26: #{encoder_forward.6} parent=23 // pred_check_branch
            %158 = sbr.rel (0) target = $region28
          $region27: #{encoder_forward.6} parent=23 // pred_region
            // Predicated region
            $region29: #{encoder_forward.6} parent=27 // pred_check
              _
            $region30: #{encoder_forward.6} parent=27 // pred_check_branch
              %160 = sbr.rel (0) target = $region32
            $region31: #{encoder_forward.6} parent=27 // pred_region
              loop: start=0, step=1, limit=1
              $region33: #{encoder_forward.6} parent=31 // loop_pre_header
                _
              $region34: #{encoder_forward.6} parent=31 // loop_header
                %s162 = sphi 0, %s166
                %p163 = scmp.ge.s32.totalorder %s162, 1
                %s167 = sphi %s156, %s156
                %s168 = sphi %s150, %s150
              $region35: #{encoder_forward.6} parent=31 // loop_header_branch
                %165 = sbr.rel (%p163) target = $region39
              $region36: #{encoder_forward.6} parent=31 // loop_body
                %v169 = vld [vmem:[%s167] sm:$0xff]
                %170 = vst [vmem:[%s168] sm:$0xff] %v169
                %v171 = vld [vmem:[%s167 + $0x8] sm:$0xff]
                %172 = vst [vmem:[%s168 + $0x8] sm:$0xff] %v171
                %v173 = vld [vmem:[%s167 + $0x20] sm:$0xff]
                %174 = vst [vmem:[%s168 + $0x10] sm:$0xff] %v173
                %v175 = vld [vmem:[%s167 + $0x28] sm:$0xff]
                %176 = vst [vmem:[%s168 + $0x18] sm:$0xff] %v175
                %v177 = vld [vmem:[%s167 + $0x40] sm:$0xff]
                %178 = vst [vmem:[%s168 + $0x20] sm:$0xff] %v177
                %v179 = vld [vmem:[%s167 + $0x48] sm:$0xff]
                %180 = vst [vmem:[%s168 + $0x28] sm:$0xff] %v179
                %v181 = vld [vmem:[%s167 + $0x60] sm:$0xff]
                %182 = vst [vmem:[%s168 + $0x30] sm:$0xff] %v181
                %v183 = vld [vmem:[%s167 + $0x68] sm:$0xff]
                %184 = vst [vmem:[%s168 + $0x38] sm:$0xff] %v183
                %v185 = vld [vmem:[%s167 + $0x80] sm:$0xff]
                %186 = vst [vmem:[%s168 + $0x40] sm:$0xff] %v185
                %v187 = vld [vmem:[%s167 + $0x88] sm:$0xff]
                %188 = vst [vmem:[%s168 + $0x48] sm:$0xff] %v187
                %v189 = vld [vmem:[%s167 + $0xa0] sm:$0xff]
                %190 = vst [vmem:[%s168 + $0x50] sm:$0xff] %v189
                %v191 = vld [vmem:[%s167 + $0xa8] sm:$0xff]
                %192 = vst [vmem:[%s168 + $0x58] sm:$0xff] %v191
                %v193 = vld [vmem:[%s167 + $0xc0] sm:$0xff]
                %194 = vst [vmem:[%s168 + $0x60] sm:$0xff] %v193
                %v195 = vld [vmem:[%s167 + $0xc8] sm:$0xff]
                %196 = vst [vmem:[%s168 + $0x68] sm:$0xff] %v195
                %v197 = vld [vmem:[%s167 + $0xe0] sm:$0xff]
                %198 = vst [vmem:[%s168 + $0x70] sm:$0xff] %v197
                %v199 = vld [vmem:[%s167 + $0xe8] sm:$0xff]
                %200 = vst [vmem:[%s168 + $0x78] sm:$0xff] %v199
                %v201 = vld [vmem:[%s167 + $0x100] sm:$0xff]
                %202 = vst [vmem:[%s168 + $0x80] sm:$0xff] %v201
                %v203 = vld [vmem:[%s167 + $0x108] sm:$0xff]
                %204 = vst [vmem:[%s168 + $0x88] sm:$0xff] %v203
              $region37: #{encoder_forward.6} parent=31 // loop_footer
                %s166 = sadd.s32 1, %s162
              $region38: #{encoder_forward.6} parent=31 // loop_footer_branch
                %161 = sbr.rel target = $region34
              $region39: #{encoder_forward.6} parent=31 // loop_exit
                _
            $region32: #{encoder_forward.6} parent=27 // pred_fallthru
              _
            // Predicated region
            $region40: #{encoder_forward.6} parent=27 // pred_check
              _
            $region41: #{encoder_forward.6} parent=27 // pred_check_branch
              %206 = sbr.rel target = $region43
            $region42: #{encoder_forward.6} parent=27 // pred_region
              _
            $region43: #{encoder_forward.6} parent=27 // pred_fallthru
              _
          $region28: #{encoder_forward.6} parent=23 // pred_fallthru
            _
          %207 = vnop
        $region24: #{encoder_forward.6} parent=19 // pred_fallthru
          _
        // Predicated region
        $region44: #{encoder_forward.6} parent=19 // pred_check
          %p208 = pneg %p69
        $region45: #{encoder_forward.6} parent=19 // pred_check_branch
          %210 = sbr.rel (%p208) target = $region47
        $region46: #{encoder_forward.6} parent=19 // pred_region
          %s211 = smul.u32 64, %s17
          %p212 = scmp.lt.s32.totalorder %s211, 127
          %s213 = scalar_select %p212, %s211, 127
          %s214 = smul.addr %s213, 4
          %s215 = scalar_lea.vmem %s1, %s214
          %s216 = smul.u32 64, %s17
        $region47: #{encoder_forward.6} parent=19 // pred_fallthru
          _
      $region20: #{encoder_forward.6} parent=5 // pred_fallthru
        _
      %p217 = scmp.le.s32.totalorder 1, %s9
      %p218 = scmp.lt.s32.totalorder %s9, 3
      %p219 = pnand %p217, %p218
      %p220 = pneg %p219
      // Predicated region
      $region48: #{encoder_forward.6} parent=5 // pred_check
        _
      $region49: #{encoder_forward.6} parent=5 // pred_check_branch
        %222 = sbr.rel (%p219) target = $region51
      $region50: #{encoder_forward.6} parent=5 // pred_region
        %s223 = ssub.s32 %s9, 1
        %s224 = sand.u32 %s36, 1
        %s225 = sand.u32 %s36, 1
        %s226 = smul.addr %s225, 144
        %s227 = scalar_lea.vmem [#allocation3], %s226
        // Predicated region
        $region52: #{encoder_forward.6} parent=50 // pred_check
          %p228 = pneg %p49
        $region53: #{encoder_forward.6} parent=50 // pred_check_branch
          %230 = sbr.rel (%p228) target = $region55
        $region54: #{encoder_forward.6} parent=50 // pred_region
          _
        $region55: #{encoder_forward.6} parent=50 // pred_fallthru
          _
        %s231 = sand.u32 %s36, 1
        %s232 = sand.u32 %s36, 1
        %s233 = smul.addr %s232, 144
        %s234 = scalar_lea.vmem [#allocation3], %s233
        %p235 = pneg %p49
        %p236 = pneg %p46
        %s237 = smul.u32 64, %s19
        %p238 = scmp.lt.s32.totalorder %s237, 127
        %s239 = scalar_select %p238, %s237, 127
        %s240 = smul.addr %s239, 4
        %s241 = scalar_lea.vmem %s1, %s240
        %p242 = pneg %p75
        %p243 = pneg %p72
        %p244 = pneg %p96
        %p245 = pneg %p93
        %p246 = pneg %p122
        %p247 = pneg %p119
        %s248 = smul.u32 9, %s18
        %p249 = scmp.lt.s32.totalorder %s248, 8
        %s250 = scalar_select %p249, %s248, 8
        %s251 = smul.addr %s250, 4
        %s252 = scalar_lea.vmem %s3, %s251
        %s253 = smul.u32 9, %s18
        %s254 = smul.u32 4, %s19
        %s255 = smul.u32 64, %s19
        %p256 = scmp.lt.s32.totalorder %s255, 127
        %s257 = scalar_select %p256, %s255, 127
        %s258 = smul.addr %s257, 4
        %s259 = scalar_lea.vmem %s1, %s258
        %s260 = smul.u32 64, %s19
        %s261 = smul.u32 9, %s18
        %p262 = scmp.lt.s32.totalorder %s261, 8
        %s263 = scalar_select %p262, %s261, 8
        %s264 = smul.addr %s263, 4
        %s265 = scalar_lea.vmem %s3, %s264
        %s266 = smul.u32 9, %s18
        %p268 = scmp.eq.s32.totalorder %s19, 0
        // Predicated region
        $region56: #{encoder_forward.6} parent=50 // pred_check
          %p269 = pneg %p268
        $region57: #{encoder_forward.6} parent=50 // pred_check_branch
          %271 = sbr.rel (%p269) target = $region59
        $region58: #{encoder_forward.6} parent=50 // pred_region
          %272 = vst [vmem:[#allocation2] sm:$0xff] 0.0
          %273 = vst [vmem:[#allocation2 + $0x8] sm:$0xff] 0.0
          %274 = vst [vmem:[#allocation2 + $0x10] sm:$0xff] 0.0
          %275 = vst [vmem:[#allocation2 + $0x18] sm:$0xff] 0.0
          %276 = vst [vmem:[#allocation2 + $0x20] sm:$0xff] 0.0
          %277 = vst [vmem:[#allocation2 + $0x28] sm:$0xff] 0.0
          %278 = vst [vmem:[#allocation2 + $0x30] sm:$0xff] 0.0
          %279 = vst [vmem:[#allocation2 + $0x38] sm:$0xff] 0.0
          %280 = vst [vmem:[#allocation2 + $0x40] sm:$0xff] 0.0
        $region59: #{encoder_forward.6} parent=50 // pred_fallthru
          _
        %v281 = vld [vmem:[#allocation2] sm:$0xff]
        %v282 = vld [vmem:[#allocation2 + $0x8] sm:$0xff]
        %v283 = vld [vmem:[#allocation2 + $0x10] sm:$0xff]
        %v284 = vld [vmem:[#allocation2 + $0x18] sm:$0xff]
        %v285 = vld [vmem:[#allocation2 + $0x20] sm:$0xff]
        %v286 = vld [vmem:[#allocation2 + $0x28] sm:$0xff]
        %v287 = vld [vmem:[#allocation2 + $0x30] sm:$0xff]
        %v288 = vld [vmem:[#allocation2 + $0x38] sm:$0xff]
        %v289 = vld [vmem:[#allocation2 + $0x40] sm:$0xff]
        %v290 = vld [vmem:[%s227] sm:$0xff]
        %v291 = vld [vmem:[%s227 + $0x8] sm:$0xff]
        %v292 = vld [vmem:[%s227 + $0x10] sm:$0xff]
        %v293 = vld [vmem:[%s227 + $0x18] sm:$0xff]
        %v294 = vld [vmem:[%s227 + $0x20] sm:$0xff]
        %v295 = vld [vmem:[%s227 + $0x28] sm:$0xff]
        %v296 = vld [vmem:[%s227 + $0x30] sm:$0xff]
        %v297 = vld [vmem:[%s227 + $0x38] sm:$0xff]
        %v298 = vld [vmem:[%s227 + $0x40] sm:$0xff]
        %v299 = vld [vmem:[%s227 + $0x48] sm:$0xff]
        %v300 = vld [vmem:[%s227 + $0x50] sm:$0xff]
        %v301 = vld [vmem:[%s227 + $0x58] sm:$0xff]
        %v302 = vld [vmem:[%s227 + $0x60] sm:$0xff]
        %v303 = vld [vmem:[%s227 + $0x68] sm:$0xff]
        %v304 = vld [vmem:[%s227 + $0x70] sm:$0xff]
        %v305 = vld [vmem:[%s227 + $0x78] sm:$0xff]
        %v306 = vld [vmem:[%s227 + $0x80] sm:$0xff]
        %v307 = vld [vmem:[%s227 + $0x88] sm:$0xff]
        %v308 = vld [vmem:[%s259] sm:$0xf]
        %v309 = vld [vmem:[%s259 + $0x4] sm:$0xf]
        %v310 = vld [vmem:[%s259 + $0x8] sm:$0xf]
        %v311 = vld [vmem:[%s259 + $0xc] sm:$0xf]
        %v312 = vld [vmem:[%s259 + $0x10] sm:$0xf]
        %v313 = vld [vmem:[%s259 + $0x14] sm:$0xf]
        %v314 = vld [vmem:[%s259 + $0x18] sm:$0xf]
        %v315 = vld [vmem:[%s259 + $0x1c] sm:$0xf]
        %v316 = vld [vmem:[%s259 + $0x20] sm:$0xf]
        %v317 = vld [vmem:[%s259 + $0x24] sm:$0xf]
        %v318 = vld [vmem:[%s259 + $0x28] sm:$0xf]
        %v319 = vld [vmem:[%s259 + $0x2c] sm:$0xf]
        %v320 = vld [vmem:[%s259 + $0x30] sm:$0xf]
        %v321 = vld [vmem:[%s259 + $0x34] sm:$0xf]
        %v322 = vld [vmem:[%s259 + $0x38] sm:$0xf]
        %v323 = vld [vmem:[%s259 + $0x3c] sm:$0xf]
        %v324 = vld [vmem:[%s259 + $0x40] sm:$0xf]
        %v325 = vld [vmem:[%s259 + $0x44] sm:$0xf]
        %v326 = vld [vmem:[%s259 + $0x48] sm:$0xf]
        %v327 = vld [vmem:[%s259 + $0x4c] sm:$0xf]
        %v328 = vld [vmem:[%s259 + $0x50] sm:$0xf]
        %v329 = vld [vmem:[%s259 + $0x54] sm:$0xf]
        %v330 = vld [vmem:[%s259 + $0x58] sm:$0xf]
        %v331 = vld [vmem:[%s259 + $0x5c] sm:$0xf]
        %v332 = vld [vmem:[%s259 + $0x60] sm:$0xf]
        %v333 = vld [vmem:[%s259 + $0x64] sm:$0xf]
        %v334 = vld [vmem:[%s259 + $0x68] sm:$0xf]
        %v335 = vld [vmem:[%s259 + $0x6c] sm:$0xf]
        %v336 = vld [vmem:[%s259 + $0x70] sm:$0xf]
        %v337 = vld [vmem:[%s259 + $0x74] sm:$0xf]
        %v338 = vld [vmem:[%s259 + $0x78] sm:$0xf]
        %v339 = vld [vmem:[%s259 + $0x7c] sm:$0xf]
        %v340 = vld [vmem:[%s259 + $0x80] sm:$0xf]
        %v341 = vld [vmem:[%s259 + $0x84] sm:$0xf]
        %v342 = vld [vmem:[%s259 + $0x88] sm:$0xf]
        %v343 = vld [vmem:[%s259 + $0x8c] sm:$0xf]
        %v344 = vld [vmem:[%s259 + $0x90] sm:$0xf]
        %v345 = vld [vmem:[%s259 + $0x94] sm:$0xf]
        %v346 = vld [vmem:[%s259 + $0x98] sm:$0xf]
        %v347 = vld [vmem:[%s259 + $0x9c] sm:$0xf]
        %v348 = vld [vmem:[%s259 + $0xa0] sm:$0xf]
        %v349 = vld [vmem:[%s259 + $0xa4] sm:$0xf]
        %v350 = vld [vmem:[%s259 + $0xa8] sm:$0xf]
        %v351 = vld [vmem:[%s259 + $0xac] sm:$0xf]
        %v352 = vld [vmem:[%s259 + $0xb0] sm:$0xf]
        %v353 = vld [vmem:[%s259 + $0xb4] sm:$0xf]
        %v354 = vld [vmem:[%s259 + $0xb8] sm:$0xf]
        %v355 = vld [vmem:[%s259 + $0xbc] sm:$0xf]
        %v356 = vld [vmem:[%s259 + $0xc0] sm:$0xf]
        %v357 = vld [vmem:[%s259 + $0xc4] sm:$0xf]
        %v358 = vld [vmem:[%s259 + $0xc8] sm:$0xf]
        %v359 = vld [vmem:[%s259 + $0xcc] sm:$0xf]
        %v360 = vld [vmem:[%s259 + $0xd0] sm:$0xf]
        %v361 = vld [vmem:[%s259 + $0xd4] sm:$0xf]
        %v362 = vld [vmem:[%s259 + $0xd8] sm:$0xf]
        %v363 = vld [vmem:[%s259 + $0xdc] sm:$0xf]
        %v364 = vld [vmem:[%s259 + $0xe0] sm:$0xf]
        %v365 = vld [vmem:[%s259 + $0xe4] sm:$0xf]
        %v366 = vld [vmem:[%s259 + $0xe8] sm:$0xf]
        %v367 = vld [vmem:[%s259 + $0xec] sm:$0xf]
        %v368 = vld [vmem:[%s259 + $0xf0] sm:$0xf]
        %v369 = vld [vmem:[%s259 + $0xf4] sm:$0xf]
        %v370 = vld [vmem:[%s259 + $0xf8] sm:$0xf]
        %v371 = vld [vmem:[%s259 + $0xfc] sm:$0xf]
        %v390 = vunpack.c.l.b16 %v290
        %v391 = vunpack.c.h.b16 %v290
        %v392 = vunpack.c.l.b16 %v291
        %v393 = vunpack.c.h.b16 %v291
        %v394 = vunpack.c.l.b16 %v292
        %v395 = vunpack.c.h.b16 %v292
        %v396 = vunpack.c.l.b16 %v293
        %v397 = vunpack.c.h.b16 %v293
        %v398 = vunpack.c.l.b16 %v294
        %v399 = vunpack.c.h.b16 %v294
        %v400 = vunpack.c.l.b16 %v295
        %v401 = vunpack.c.h.b16 %v295
        %v402 = vunpack.c.l.b16 %v296
        %v403 = vunpack.c.h.b16 %v296
        %v404 = vunpack.c.l.b16 %v297
        %v405 = vunpack.c.h.b16 %v297
        %v406 = vunpack.c.l.b16 %v298
        %v407 = vunpack.c.h.b16 %v298
        %v408 = vunpack.c.l.b16 %v299
        %v409 = vunpack.c.h.b16 %v299
        %v410 = vunpack.c.l.b16 %v300
        %v411 = vunpack.c.h.b16 %v300
        %v412 = vunpack.c.l.b16 %v301
        %v413 = vunpack.c.h.b16 %v301
        %v414 = vunpack.c.l.b16 %v302
        %v415 = vunpack.c.h.b16 %v302
        %v416 = vunpack.c.l.b16 %v303
        %v417 = vunpack.c.h.b16 %v303
        %v418 = vunpack.c.l.b16 %v304
        %v419 = vunpack.c.h.b16 %v304
        %v420 = vunpack.c.l.b16 %v305
        %v421 = vunpack.c.h.b16 %v305
        %v422 = vunpack.c.l.b16 %v306
        %v423 = vunpack.c.h.b16 %v306
        %v424 = vunpack.c.l.b16 %v307
        %v425 = vunpack.c.h.b16 %v307
        %v426 = vpack.c.b16 %v394, %v390
        %v427 = vpack.c.b16 %v395, %v391
        %v428 = vpack.c.b16 %v396, %v392
        %v429 = vpack.c.b16 %v397, %v393
        %v430 = vpack.c.b16 %v402, %v398
        %v431 = vpack.c.b16 %v403, %v399
        %v432 = vpack.c.b16 %v404, %v400
        %v433 = vpack.c.b16 %v405, %v401
        %v434 = vpack.c.b16 %v410, %v406
        %v435 = vpack.c.b16 %v411, %v407
        %v436 = vpack.c.b16 %v412, %v408
        %v437 = vpack.c.b16 %v413, %v409
        %v438 = vpack.c.b16 %v418, %v414
        %v439 = vpack.c.b16 %v419, %v415
        %v440 = vpack.c.b16 %v420, %v416
        %v441 = vpack.c.b16 %v421, %v417
        %v442 = vpack.c.b16 %v422, %v422
        %v443 = vpack.c.b16 %v423, %v423
        %v444 = vpack.c.b16 %v424, %v424
        %v445 = vpack.c.b16 %v425, %v425
        %v530 = vunpack.c.l.b16 %v308
        %v531 = vunpack.c.l.b16 %v309
        %v532 = vunpack.c.l.b16 %v310
        %v533 = vunpack.c.l.b16 %v311
        %v534 = vunpack.c.l.b16 %v312
        %v535 = vunpack.c.l.b16 %v313
        %v536 = vunpack.c.l.b16 %v314
        %v537 = vunpack.c.l.b16 %v315
        %v538 = vunpack.c.l.b16 %v316
        %v539 = vunpack.c.l.b16 %v317
        %v540 = vunpack.c.l.b16 %v318
        %v541 = vunpack.c.l.b16 %v319
        %v542 = vunpack.c.l.b16 %v320
        %v543 = vunpack.c.l.b16 %v321
        %v544 = vunpack.c.l.b16 %v322
        %v545 = vunpack.c.l.b16 %v323
        %v546 = vunpack.c.l.b16 %v324
        %v547 = vunpack.c.l.b16 %v325
        %v548 = vunpack.c.l.b16 %v326
        %v549 = vunpack.c.l.b16 %v327
        %v550 = vunpack.c.l.b16 %v328
        %v551 = vunpack.c.l.b16 %v329
        %v552 = vunpack.c.l.b16 %v330
        %v553 = vunpack.c.l.b16 %v331
        %v554 = vunpack.c.l.b16 %v332
        %v555 = vunpack.c.l.b16 %v333
        %v556 = vunpack.c.l.b16 %v334
        %v557 = vunpack.c.l.b16 %v335
        %v558 = vunpack.c.l.b16 %v336
        %v559 = vunpack.c.l.b16 %v337
        %v560 = vunpack.c.l.b16 %v338
        %v561 = vunpack.c.l.b16 %v339
        %v562 = vunpack.c.l.b16 %v340
        %v563 = vunpack.c.l.b16 %v341
        %v564 = vunpack.c.l.b16 %v342
        %v565 = vunpack.c.l.b16 %v343
        %v566 = vunpack.c.l.b16 %v344
        %v567 = vunpack.c.l.b16 %v345
        %v568 = vunpack.c.l.b16 %v346
        %v569 = vunpack.c.l.b16 %v347
        %v570 = vunpack.c.l.b16 %v348
        %v571 = vunpack.c.l.b16 %v349
        %v572 = vunpack.c.l.b16 %v350
        %v573 = vunpack.c.l.b16 %v351
        %v574 = vunpack.c.l.b16 %v352
        %v575 = vunpack.c.l.b16 %v353
        %v576 = vunpack.c.l.b16 %v354
        %v577 = vunpack.c.l.b16 %v355
        %v578 = vunpack.c.l.b16 %v356
        %v579 = vunpack.c.l.b16 %v357
        %v580 = vunpack.c.l.b16 %v358
        %v581 = vunpack.c.l.b16 %v359
        %v582 = vunpack.c.l.b16 %v360
        %v583 = vunpack.c.l.b16 %v361
        %v584 = vunpack.c.l.b16 %v362
        %v585 = vunpack.c.l.b16 %v363
        %v586 = vunpack.c.l.b16 %v364
        %v587 = vunpack.c.l.b16 %v365
        %v588 = vunpack.c.l.b16 %v366
        %v589 = vunpack.c.l.b16 %v367
        %v590 = vunpack.c.l.b16 %v368
        %v591 = vunpack.c.l.b16 %v369
        %v592 = vunpack.c.l.b16 %v370
        %v593 = vunpack.c.l.b16 %v371
        %v594 = vpack.c.b16 %v531, %v530
        %v595 = vpack.c.b16 %v533, %v532
        %v596 = vpack.c.b16 %v535, %v534
        %v597 = vpack.c.b16 %v537, %v536
        %v598 = vpack.c.b16 %v539, %v538
        %v599 = vpack.c.b16 %v541, %v540
        %v600 = vpack.c.b16 %v543, %v542
        %v601 = vpack.c.b16 %v545, %v544
        %v602 = vpack.c.b16 %v547, %v546
        %v603 = vpack.c.b16 %v549, %v548
        %v604 = vpack.c.b16 %v551, %v550
        %v605 = vpack.c.b16 %v553, %v552
        %v606 = vpack.c.b16 %v555, %v554
        %v607 = vpack.c.b16 %v557, %v556
        %v608 = vpack.c.b16 %v559, %v558
        %v609 = vpack.c.b16 %v561, %v560
        %v610 = vpack.c.b16 %v563, %v562
        %v611 = vpack.c.b16 %v565, %v564
        %v612 = vpack.c.b16 %v567, %v566
        %v613 = vpack.c.b16 %v569, %v568
        %v614 = vpack.c.b16 %v571, %v570
        %v615 = vpack.c.b16 %v573, %v572
        %v616 = vpack.c.b16 %v575, %v574
        %v617 = vpack.c.b16 %v577, %v576
        %v618 = vpack.c.b16 %v579, %v578
        %v619 = vpack.c.b16 %v581, %v580
        %v620 = vpack.c.b16 %v583, %v582
        %v621 = vpack.c.b16 %v585, %v584
        %v622 = vpack.c.b16 %v587, %v586
        %v623 = vpack.c.b16 %v589, %v588
        %v624 = vpack.c.b16 %v591, %v590
        %v625 = vpack.c.b16 %v593, %v592
        %658 = vmatprep.subr.bf16.mxu0 0
        %659 = vmatpush1.bf16.msra.mxu0 %v601
        %660 = vmatprep.subr.bf16.mxu0 0
        %661 = vmatpush1.bf16.msra.mxu0 %v600
        %662 = vmatprep.subr.bf16.mxu0 0
        %663 = vmatpush1.bf16.msra.mxu0 %v599
        %664 = vmatprep.subr.bf16.mxu0 0
        %665 = vmatpush1.bf16.msra.mxu0 %v598
        %666 = vmatprep.subr.bf16.mxu0 0
        %667 = vmatpush1.bf16.msra.mxu0 %v597
        %668 = vmatprep.subr.bf16.mxu0 0
        %669 = vmatpush1.bf16.msra.mxu0 %v596
        %670 = vmatprep.subr.bf16.mxu0 0
        %671 = vmatpush1.bf16.msra.mxu0 %v595
        %672 = vmatprep.subr.bf16.mxu0 0
        %673 = vmatpush1.bf16.msra.mxu0 %v594
        %674 = vmatprep.subr.bf16.mxu0 0
        %675 = vmatpush2.bf16.msra.mxu0 %v609
        %676 = vmatprep.subr.bf16.mxu0 0
        %677 = vmatpush2.bf16.msra.mxu0 %v608
        %678 = vmatprep.subr.bf16.mxu0 0
        %679 = vmatpush2.bf16.msra.mxu0 %v607
        %680 = vmatprep.subr.bf16.mxu0 0
        %681 = vmatpush2.bf16.msra.mxu0 %v606
        %682 = vmatprep.subr.bf16.mxu0 0
        %683 = vmatpush2.bf16.msra.mxu0 %v605
        %684 = vmatprep.subr.bf16.mxu0 0
        %685 = vmatpush2.bf16.msra.mxu0 %v604
        %686 = vmatprep.subr.bf16.mxu0 0
        %687 = vmatpush2.bf16.msra.mxu0 %v603
        %688 = vmatprep.subr.bf16.mxu0 0
        %689 = vmatpush2.bf16.msra.mxu0 %v602
        %690 = vmatprep.mubr.bf16.mxu0 %v427
        %691 = vmatmul.mubr.bf16.gmra.mxu0 %v426
        %v692 = vpop.f32.mrf.mxu0
        %v693 = vadd.f32 0.0, %v692
        %v694 = vpop.f32.mrf.mxu0
        %v695 = vpop.f32.mrf.mxu0
        %v696 = vadd.f32 0.0, %v695
        %v697 = vpop.f32.mrf.mxu0
        %698 = vmatprep.mubr.bf16.mxu0 %v431
        %699 = vmatmul.mubr.bf16.gmra.mxu0 %v430
        %v700 = vpop.f32.mrf.mxu0
        %v701 = vadd.f32 0.0, %v700
        %v702 = vpop.f32.mrf.mxu0
        %v703 = vpop.f32.mrf.mxu0
        %v704 = vadd.f32 0.0, %v703
        %v705 = vpop.f32.mrf.mxu0
        %706 = vmatprep.mubr.bf16.mxu0 %v435
        %707 = vmatmul.mubr.bf16.gmra.mxu0 %v434
        %v708 = vpop.f32.mrf.mxu0
        %v709 = vadd.f32 0.0, %v708
        %v710 = vpop.f32.mrf.mxu0
        %v711 = vpop.f32.mrf.mxu0
        %v712 = vadd.f32 0.0, %v711
        %v713 = vpop.f32.mrf.mxu0
        %714 = vmatprep.mubr.bf16.mxu0 %v439
        %715 = vmatmul.mubr.bf16.gmra.mxu0 %v438
        %v716 = vpop.f32.mrf.mxu0
        %v717 = vadd.f32 0.0, %v716
        %v718 = vpop.f32.mrf.mxu0
        %v719 = vpop.f32.mrf.mxu0
        %v720 = vadd.f32 0.0, %v719
        %v721 = vpop.f32.mrf.mxu0
        %722 = vmatprep.mubr.bf16.mxu0 %v443
        %723 = vmatmul.mubr.bf16.gmra.mxu0 %v442
        %v724 = vpop.f32.mrf.mxu0
        %v725 = vadd.f32 0.0, %v724
        %v726 = vpop.f32.mrf.mxu0
        %v727 = vpop.f32.mrf.mxu0
        %v728 = vpop.f32.mrf.mxu0
        %729 = vdwg.mxu0
        %730 = vmatprep.subr.bf16.mxu0 0
        %731 = vmatpush1.bf16.msra.mxu0 %v617
        %732 = vmatprep.subr.bf16.mxu0 0
        %733 = vmatpush1.bf16.msra.mxu0 %v616
        %734 = vmatprep.subr.bf16.mxu0 0
        %735 = vmatpush1.bf16.msra.mxu0 %v615
        %736 = vmatprep.subr.bf16.mxu0 0
        %737 = vmatpush1.bf16.msra.mxu0 %v614
        %738 = vmatprep.subr.bf16.mxu0 0
        %739 = vmatpush1.bf16.msra.mxu0 %v613
        %740 = vmatprep.subr.bf16.mxu0 0
        %741 = vmatpush1.bf16.msra.mxu0 %v612
        %742 = vmatprep.subr.bf16.mxu0 0
        %743 = vmatpush1.bf16.msra.mxu0 %v611
        %744 = vmatprep.subr.bf16.mxu0 0
        %745 = vmatpush1.bf16.msra.mxu0 %v610
        %746 = vmatprep.subr.bf16.mxu0 0
        %747 = vmatpush2.bf16.msra.mxu0 %v625
        %748 = vmatprep.subr.bf16.mxu0 0
        %749 = vmatpush2.bf16.msra.mxu0 %v624
        %750 = vmatprep.subr.bf16.mxu0 0
        %751 = vmatpush2.bf16.msra.mxu0 %v623
        %752 = vmatprep.subr.bf16.mxu0 0
        %753 = vmatpush2.bf16.msra.mxu0 %v622
        %754 = vmatprep.subr.bf16.mxu0 0
        %755 = vmatpush2.bf16.msra.mxu0 %v621
        %756 = vmatprep.subr.bf16.mxu0 0
        %757 = vmatpush2.bf16.msra.mxu0 %v620
        %758 = vmatprep.subr.bf16.mxu0 0
        %759 = vmatpush2.bf16.msra.mxu0 %v619
        %760 = vmatprep.subr.bf16.mxu0 0
        %761 = vmatpush2.bf16.msra.mxu0 %v618
        %762 = vmatprep.mubr.bf16.mxu0 %v429
        %763 = vmatmul.mubr.bf16.gmra.mxu0 %v428
        %v764 = vpop.f32.mrf.mxu0
        %v765 = vadd.f32 %v693, %v764
        %v766 = vpop.f32.mrf.mxu0
        %v767 = vpop.f32.mrf.mxu0
        %v768 = vadd.f32 %v696, %v767
        %v769 = vpop.f32.mrf.mxu0
        %770 = vmatprep.mubr.bf16.mxu0 %v433
        %771 = vmatmul.mubr.bf16.gmra.mxu0 %v432
        %v772 = vpop.f32.mrf.mxu0
        %v773 = vadd.f32 %v701, %v772
        %v774 = vpop.f32.mrf.mxu0
        %v775 = vpop.f32.mrf.mxu0
        %v776 = vadd.f32 %v704, %v775
        %v777 = vpop.f32.mrf.mxu0
        %778 = vmatprep.mubr.bf16.mxu0 %v437
        %779 = vmatmul.mubr.bf16.gmra.mxu0 %v436
        %v780 = vpop.f32.mrf.mxu0
        %v781 = vadd.f32 %v709, %v780
        %v782 = vpop.f32.mrf.mxu0
        %v783 = vpop.f32.mrf.mxu0
        %v784 = vadd.f32 %v712, %v783
        %v785 = vpop.f32.mrf.mxu0
        %786 = vmatprep.mubr.bf16.mxu0 %v441
        %787 = vmatmul.mubr.bf16.gmra.mxu0 %v440
        %v788 = vpop.f32.mrf.mxu0
        %v789 = vadd.f32 %v717, %v788
        %v790 = vpop.f32.mrf.mxu0
        %v791 = vpop.f32.mrf.mxu0
        %v792 = vadd.f32 %v720, %v791
        %v793 = vpop.f32.mrf.mxu0
        %794 = vmatprep.mubr.bf16.mxu0 %v445
        %795 = vmatmul.mubr.bf16.gmra.mxu0 %v444
        %v796 = vpop.f32.mrf.mxu0
        %v797 = vadd.f32 %v725, %v796
        %v798 = vpop.f32.mrf.mxu0
        %v799 = vpop.f32.mrf.mxu0
        %v800 = vpop.f32.mrf.mxu0
        %801 = vdwg.mxu0
        %v802 = vadd.f32 %v281, %v765
        %v803 = vadd.f32 %v282, %v768
        %v804 = vadd.f32 %v283, %v773
        %v805 = vadd.f32 %v284, %v776
        %v806 = vadd.f32 %v285, %v781
        %v807 = vadd.f32 %v286, %v784
        %v808 = vadd.f32 %v287, %v789
        %v809 = vadd.f32 %v288, %v792
        %v810 = vadd.f32 %v289, %v797
        %811 = vst [vmem:[#allocation2] sm:$0xff] %v802
        %812 = vst [vmem:[#allocation2 + $0x8] sm:$0xff] %v803
        %813 = vst [vmem:[#allocation2 + $0x10] sm:$0xff] %v804
        %814 = vst [vmem:[#allocation2 + $0x18] sm:$0xff] %v805
        %815 = vst [vmem:[#allocation2 + $0x20] sm:$0xff] %v806
        %816 = vst [vmem:[#allocation2 + $0x28] sm:$0xff] %v807
        %817 = vst [vmem:[#allocation2 + $0x30] sm:$0xff] %v808
        %818 = vst [vmem:[#allocation2 + $0x38] sm:$0xff] %v809
        %819 = vst [vmem:[#allocation2 + $0x40] sm:$0xff] %v810
        %p820 = scmp.eq.s32.totalorder %s19, 1
        // Predicated region
        $region60: #{encoder_forward.6} parent=50 // pred_check
          %p821 = pneg %p820
        $region61: #{encoder_forward.6} parent=50 // pred_check_branch
          %823 = sbr.rel (%p821) target = $region63
        $region62: #{encoder_forward.6} parent=50 // pred_region
          %v824 = vld [vmem:[#allocation2] sm:$0xff]
          %v825 = vld [vmem:[#allocation2 + $0x8] sm:$0xff]
          %v826 = vld [vmem:[#allocation2 + $0x10] sm:$0xff]
          %v827 = vld [vmem:[#allocation2 + $0x18] sm:$0xff]
          %v828 = vld [vmem:[#allocation2 + $0x20] sm:$0xff]
          %v829 = vld [vmem:[#allocation2 + $0x28] sm:$0xff]
          %v830 = vld [vmem:[#allocation2 + $0x30] sm:$0xff]
          %v831 = vld [vmem:[#allocation2 + $0x38] sm:$0xff]
          %v832 = vld [vmem:[#allocation2 + $0x40] sm:$0xff]
          %v833 = vld [vmem:[%s2] sm:$0x1]
          %v835 = vlaneseq
          %v836 = vshrl.u32 %v835, 7
          %v837 = vsub.s32 0, %v836
          %v838 = vrot.slane %v833, %v837
          %v840 = vadd.f32 %v824, %v838
          %v841 = vadd.f32 %v825, %v838
          %v842 = vadd.f32 %v826, %v838
          %v843 = vadd.f32 %v827, %v838
          %v844 = vadd.f32 %v828, %v838
          %v845 = vadd.f32 %v829, %v838
          %v846 = vadd.f32 %v830, %v838
          %v847 = vadd.f32 %v831, %v838
          %v848 = vadd.f32 %v832, %v838
          %v849 = vmax.f32 %v840, 0.0
          %v850 = vmax.f32 %v841, 0.0
          %v851 = vmax.f32 %v842, 0.0
          %v852 = vmax.f32 %v843, 0.0
          %v853 = vmax.f32 %v844, 0.0
          %v854 = vmax.f32 %v845, 0.0
          %v855 = vmax.f32 %v846, 0.0
          %v856 = vmax.f32 %v847, 0.0
          %v857 = vmax.f32 %v848, 0.0
          %v858 = vpack.c.bf16 %v850, %v849
          %v859 = vpack.c.bf16 %v852, %v851
          %v860 = vpack.c.bf16 %v854, %v853
          %v861 = vpack.c.bf16 %v856, %v855
          %v862 = vpack.c.bf16 %v857, %v857
          %v868 = vunpack.c.l.b16 %v858
          %v869 = vunpack.c.h.b16 %v858
          %v870 = vunpack.c.l.b16 %v859
          %v871 = vunpack.c.h.b16 %v859
          %v872 = vunpack.c.l.b16 %v860
          %v873 = vunpack.c.h.b16 %v860
          %v874 = vunpack.c.l.b16 %v861
          %v875 = vunpack.c.h.b16 %v861
          %v876 = vunpack.c.l.b16 %v862
          %v877 = vpack.c.b16 %v868, %v868
          %v878 = vpack.c.b16 %v869, %v869
          %v879 = vpack.c.b16 %v870, %v870
          %v880 = vpack.c.b16 %v871, %v871
          %v881 = vpack.c.b16 %v872, %v872
          %v882 = vpack.c.b16 %v873, %v873
          %v883 = vpack.c.b16 %v874, %v874
          %v884 = vpack.c.b16 %v875, %v875
          %v885 = vpack.c.b16 %v876, %v876
          %895 = vst [vmem:[%s265] sm:$0xf] %v877
          %896 = vst [vmem:[%s265 + $0x4] sm:$0xf] %v878
          %897 = vst [vmem:[%s265 + $0x8] sm:$0xf] %v879
          %898 = vst [vmem:[%s265 + $0xc] sm:$0xf] %v880
          %899 = vst [vmem:[%s265 + $0x10] sm:$0xf] %v881
          %900 = vst [vmem:[%s265 + $0x14] sm:$0xf] %v882
          %901 = vst [vmem:[%s265 + $0x18] sm:$0xf] %v883
          %902 = vst [vmem:[%s265 + $0x1c] sm:$0xf] %v884
          %903 = vst [vmem:[%s265 + $0x20] sm:$0xf] %v885
        $region63: #{encoder_forward.6} parent=50 // pred_fallthru
          _
        %s904 = smul.u32 9, %s18
        %p905 = scmp.lt.s32.totalorder %s904, 8
        %s906 = scalar_select %p905, %s904, 8
        %s907 = smul.addr %s906, 4
        %s908 = scalar_lea.vmem %s3, %s907
        // Predicated region
        $region64: #{encoder_forward.6} parent=50 // pred_check
          %p909 = pneg %p119
        $region65: #{encoder_forward.6} parent=50 // pred_check_branch
          %911 = sbr.rel (%p909) target = $region67
        $region66: #{encoder_forward.6} parent=50 // pred_region
          %s912 = smul.u32 9, %s18
        $region67: #{encoder_forward.6} parent=50 // pred_fallthru
          _
        // Predicated region
        $region68: #{encoder_forward.6} parent=50 // pred_check
          %p913 = pneg %p119
        $region69: #{encoder_forward.6} parent=50 // pred_check_branch
          %915 = sbr.rel (%p913) target = $region71
        $region70: #{encoder_forward.6} parent=50 // pred_region
          %s916 = smul.u32 9, %s18
          %p917 = scmp.lt.s32.totalorder %s916, 8
          %s918 = scalar_select %p917, %s916, 8
          %s919 = smul.addr %s918, 4
          %s920 = scalar_lea.vmem %s3, %s919
        $region71: #{encoder_forward.6} parent=50 // pred_fallthru
          _
      $region51: #{encoder_forward.6} parent=5 // pred_fallthru
        _
      %p921 = scmp.le.s32.totalorder 2, %s9
      // Predicated region
      $region72: #{encoder_forward.6} parent=5 // pred_check
        %p922 = pneg %p921
      $region73: #{encoder_forward.6} parent=5 // pred_check_branch
        %924 = sbr.rel (%p922) target = $region75
      $region74: #{encoder_forward.6} parent=5 // pred_region
        %s925 = ssub.s32 %s9, 2
      $region75: #{encoder_forward.6} parent=5 // pred_fallthru
        _
    $region6: #{encoder_forward.6} parent=1 // loop_footer
      %s13 = sadd.s32 1, %s9
    $region7: #{encoder_forward.6} parent=1 // loop_footer_branch
      %8 = sbr.rel target = $region3
    $region8: #{encoder_forward.6} parent=1 // loop_exit
      _

// kernel: encoder_forward.7
$region0: #{encoder_forward.7}
  #allocation0 [shape = 'u32[]', space=smem, size = 0x4, offset = 0x4, fixed_abs, tag = 'smem constant byte address 0x4 - core index']
  #allocation1 [shape = 'u32[144,128]{1,0:T(1,128)}', space=vmem, size = 0x12000, scoped, tag = 'internal scratch']
  #allocation2 [shape = 'f32[8,256]{1,0:T(8,128)}', space=vmem, size = 0x2000, scoped, tag = 'scratch operand']
  %s0 = inlined_call_operand.vmem [shape: bf16[8,2048], index: 0, kind: input, shape index: {}]
  %s1 = inlined_call_operand.vmem [shape: bf16[2048,256], index: 1, kind: input, shape index: {}]
  %s2 = inlined_call_operand.vmem [shape: f32[1,256], index: 2, kind: input, shape index: {}]
  %s3 = inlined_call_operand.vmem [shape: f32[8,256], index: 3, kind: output, shape index: {}]
  %s4 = sld [smem:[#allocation0]]
  $region53: #{encoder_forward.7} parent=0
    _
  %s6 = ssub.s32 1, %s4
  %s7 = scalar_select 0, %s6, %s4
  loop: start=0, step=1, limit=6
  $region2: #{encoder_forward.7} parent=0 // loop_pre_header
    _
  $region3: #{encoder_forward.7} parent=0 // loop_header
    %s9 = sphi 0, %s13
    %p10 = scmp.ge.s32.totalorder %s9, 6
    %s16 = sphi 0, %s28
    %s17 = sphi 0, %s24
    %s18 = sphi 0, %s16
    %s19 = sphi 0, %s17
    %s20 = sphi 0, %s18
    %s21 = sphi 0, %s19
    %s33 = sphi 0, %s35
    %s36 = sphi 0, %s33
    %s37 = sphi 0, %s36
    %s53 = sphi 0, %s37
    %s59 = sphi 0, %s61
    %s62 = sphi 0, %s59
    %s63 = sphi 0, %s62
    %s79 = sphi 0, %s63
    %s83 = sphi 0, %s83
    %s85 = sphi 0, %s83
    %s86 = sphi 0, %s85
    %s100 = sphi 0, %s86
    %s106 = sphi 0, %s108
    %s109 = sphi 0, %s106
    %s110 = sphi 0, %s109
    %s126 = sphi 0, %s110
  $region4: #{encoder_forward.7} parent=0 // loop_header_branch
    %12 = sbr.rel (%p10) target = $region8
  $region5: #{encoder_forward.7} parent=0 // loop_body
    %s14 = ssub.s32 %s9, 1
    %s15 = ssub.s32 %s9, 2
    %s22 = sadd.s32 1, %s17
    %p23 = scmp.ge.s32.totalorder %s22, 4
    %s24 = scalar_select %p23, 0, %s22
    %s25 = sadd.s32 1, %s16
    %s26 = scalar_select %p23, %s25, %s16
    %p27 = scmp.ge.s32.totalorder %s26, 1
    %s28 = scalar_select %p27, 0, %s26
    %s29 = ssub.s32 %s16, %s28
    %s30 = ssub.s32 %s17, %s24
    %s31 = sor.u32 %s29, %s30
    %p32 = scmp.eq.s32.totalorder %s31, 0
    %s34 = sadd.s32 %s33, 1
    %s35 = scalar_select %p32, %s33, %s34
    %p38 = pneg %p32
    %p39 = scmp.eq.s32.totalorder %s9, 3
    %p40 = por %p38, %p39
    %p41 = scmp.ne.s32.totalorder %s33, %s36
    %p42 = scmp.eq.s32.totalorder %s9, 0
    %p43 = por %p41, %p42
    %p44 = scmp.ne.s32.totalorder %s33, %s36
    %p45 = scmp.eq.s32.totalorder %s14, 3
    %p46 = por %p44, %p45
    %p47 = scmp.ne.s32.totalorder %s36, %s37
    %p48 = scmp.eq.s32.totalorder %s14, 0
    %p49 = por %p47, %p48
    %p50 = scmp.ne.s32.totalorder %s36, %s37
    %p51 = scmp.eq.s32.totalorder %s15, 3
    %p52 = por %p50, %p51
    %p54 = scmp.ne.s32.totalorder %s37, %s53
    %p55 = scmp.eq.s32.totalorder %s15, 0
    %p56 = por %p54, %p55
    %s57 = ssub.s32 %s17, %s24
    %p58 = scmp.eq.s32.totalorder %s57, 0
    %s60 = sadd.s32 %s59, 1
    %s61 = scalar_select %p58, %s59, %s60
    %p64 = pneg %p58
    %p65 = scmp.eq.s32.totalorder %s9, 3
    %p66 = por %p64, %p65
    %p67 = scmp.ne.s32.totalorder %s59, %s62
    %p68 = scmp.eq.s32.totalorder %s9, 0
    %p69 = por %p67, %p68
    %p70 = scmp.ne.s32.totalorder %s59, %s62
    %p71 = scmp.eq.s32.totalorder %s14, 3
    %p72 = por %p70, %p71
    %p73 = scmp.ne.s32.totalorder %s62, %s63
    %p74 = scmp.eq.s32.totalorder %s14, 0
    %p75 = por %p73, %p74
    %p76 = scmp.ne.s32.totalorder %s62, %s63
    %p77 = scmp.eq.s32.totalorder %s15, 3
    %p78 = por %p76, %p77
    %p80 = scmp.ne.s32.totalorder %s63, %s79
    %p81 = scmp.eq.s32.totalorder %s15, 0
    %p82 = por %p80, %p81
    %s84 = sadd.s32 %s83, 1
    %p87 = scmp.eq.s32.totalorder %s9, 3
    %p88 = scmp.ne.s32.totalorder %s83, %s85
    %p89 = scmp.eq.s32.totalorder %s9, 0
    %p90 = por %p88, %p89
    %p91 = scmp.ne.s32.totalorder %s83, %s85
    %p92 = scmp.eq.s32.totalorder %s14, 3
    %p93 = por %p91, %p92
    %p94 = scmp.ne.s32.totalorder %s85, %s86
    %p95 = scmp.eq.s32.totalorder %s14, 0
    %p96 = por %p94, %p95
    %p97 = scmp.ne.s32.totalorder %s85, %s86
    %p98 = scmp.eq.s32.totalorder %s15, 3
    %p99 = por %p97, %p98
    %p101 = scmp.ne.s32.totalorder %s86, %s100
    %p102 = scmp.eq.s32.totalorder %s15, 0
    %p103 = por %p101, %p102
    %s104 = ssub.s32 %s16, %s28
    %p105 = scmp.eq.s32.totalorder %s104, 0
    %s107 = sadd.s32 %s106, 1
    %s108 = scalar_select %p105, %s106, %s107
    %p111 = pneg %p105
    %p112 = scmp.eq.s32.totalorder %s9, 3
    %p113 = por %p111, %p112
    %p114 = scmp.ne.s32.totalorder %s106, %s109
    %p115 = scmp.eq.s32.totalorder %s9, 0
    %p116 = por %p114, %p115
    %p117 = scmp.ne.s32.totalorder %s106, %s109
    %p118 = scmp.eq.s32.totalorder %s14, 3
    %p119 = por %p117, %p118
    %p120 = scmp.ne.s32.totalorder %s109, %s110
    %p121 = scmp.eq.s32.totalorder %s14, 0
    %p122 = por %p120, %p121
    %p123 = scmp.ne.s32.totalorder %s109, %s110
    %p124 = scmp.eq.s32.totalorder %s15, 3
    %p125 = por %p123, %p124
    %p127 = scmp.ne.s32.totalorder %s110, %s126
    %p128 = scmp.eq.s32.totalorder %s15, 0
    %p129 = por %p127, %p128
    %p130 = scmp.le.s32.totalorder 1, %s9
    %p131 = scmp.lt.s32.totalorder %s9, 5
    %p132 = pnand %p130, %p131
    %p133 = pneg %p132
    // Predicated region
    $region9: #{encoder_forward.7} parent=5 // pred_check
      _
    $region10: #{encoder_forward.7} parent=5 // pred_check_branch
      %135 = sbr.rel (%p132) target = $region12
    $region11: #{encoder_forward.7} parent=5 // pred_region
      %s136 = ssub.s32 %s9, 1
      // Predicated region
      $region13: #{encoder_forward.7} parent=11 // pred_check
        %p137 = pneg %p96
      $region14: #{encoder_forward.7} parent=11 // pred_check_branch
        %139 = sbr.rel (%p137) target = $region16
      $region15: #{encoder_forward.7} parent=11 // pred_region
        _
      $region16: #{encoder_forward.7} parent=11 // pred_fallthru
        _
    $region12: #{encoder_forward.7} parent=5 // pred_fallthru
      _
    %p140 = scmp.lt.s32.totalorder %s9, 4
    // Predicated region
    $region17: #{encoder_forward.7} parent=5 // pred_check
      %p141 = pneg %p140
    $region18: #{encoder_forward.7} parent=5 // pred_check_branch
      %143 = sbr.rel (%p141) target = $region20
    $region19: #{encoder_forward.7} parent=5 // pred_region
      // Predicated region
      $region21: #{encoder_forward.7} parent=19 // pred_check
        %p144 = pneg %p43
      $region22: #{encoder_forward.7} parent=19 // pred_check_branch
        %146 = sbr.rel (%p144) target = $region24
      $region23: #{encoder_forward.7} parent=19 // pred_region
        %s147 = smul.u32 4, %s17
        %p148 = scmp.lt.s32.totalorder %s16, 0
        %s149 = scalar_select %p148, %s16, 0
        %p150 = scmp.lt.s32.totalorder %s147, 15
        %s151 = scalar_select %p150, %s147, 15
        %s152 = smul.addr %s149, 16
        %s153 = sadd.s32 %s151, %s152
        %s154 = smul.addr %s153, 4
        %s155 = scalar_lea.vmem %s0, %s154
        %s156 = smul.u32 4, %s17
      $region24: #{encoder_forward.7} parent=19 // pred_fallthru
        _
      // Predicated region
      $region25: #{encoder_forward.7} parent=19 // pred_check
        %p157 = pneg %p69
      $region26: #{encoder_forward.7} parent=19 // pred_check_branch
        %159 = sbr.rel (%p157) target = $region28
      $region27: #{encoder_forward.7} parent=19 // pred_region
        %s160 = smul.u32 64, %s17
        %p161 = scmp.lt.s32.totalorder %s160, 255
        %s162 = scalar_select %p161, %s160, 255
        %s163 = smul.addr %s162, 2
        %s164 = smul.addr %s163, 4
        %s165 = scalar_lea.vmem %s1, %s164
        %s166 = smul.u32 64, %s17
      $region28: #{encoder_forward.7} parent=19 // pred_fallthru
        _
    $region20: #{encoder_forward.7} parent=5 // pred_fallthru
      _
    %p167 = scmp.le.s32.totalorder 1, %s9
    %p168 = scmp.lt.s32.totalorder %s9, 5
    %p169 = pnand %p167, %p168
    %p170 = pneg %p169
    // Predicated region
    $region29: #{encoder_forward.7} parent=5 // pred_check
      _
    $region30: #{encoder_forward.7} parent=5 // pred_check_branch
      %172 = sbr.rel (%p169) target = $region32
    $region31: #{encoder_forward.7} parent=5 // pred_region
      %s173 = ssub.s32 %s9, 1
      %s174 = smul.u32 4, %s19
      %p175 = scmp.lt.s32.totalorder %s18, 0
      %s176 = scalar_select %p175, %s18, 0
      %p177 = scmp.lt.s32.totalorder %s174, 15
      %s178 = scalar_select %p177, %s174, 15
      %s179 = smul.addr %s176, 16
      %s180 = sadd.s32 %s178, %s179
      %s181 = smul.addr %s180, 4
      %s182 = scalar_lea.vmem %s0, %s181
      %p183 = pneg %p49
      %p184 = pneg %p46
      %s185 = smul.u32 64, %s19
      %p186 = scmp.lt.s32.totalorder %s185, 255
      %s187 = scalar_select %p186, %s185, 255
      %s188 = smul.addr %s187, 2
      %s189 = smul.addr %s188, 4
      %s190 = scalar_lea.vmem %s1, %s189
      %p191 = pneg %p75
      %p192 = pneg %p72
      %p193 = pneg %p96
      %p194 = pneg %p93
      %p195 = pneg %p122
      %p196 = pneg %p119
      %p197 = scmp.lt.s32.totalorder %s18, 0
      %s198 = scalar_select %p197, %s18, 0
      %s199 = smul.addr %s198, 2
      %s200 = smul.addr %s199, 8
      %s201 = scalar_lea.vmem %s3, %s200
      %s202 = smul.u32 4, %s19
      %p203 = scmp.lt.s32.totalorder %s18, 0
      %s204 = scalar_select %p203, %s18, 0
      %p205 = scmp.lt.s32.totalorder %s202, 15
      %s206 = scalar_select %p205, %s202, 15
      %s207 = smul.addr %s204, 16
      %s208 = sadd.s32 %s206, %s207
      %s209 = smul.addr %s208, 4
      %s210 = scalar_lea.vmem %s0, %s209
      %s211 = smul.u32 4, %s19
      %s212 = smul.u32 64, %s19
      %p213 = scmp.lt.s32.totalorder %s212, 255
      %s214 = scalar_select %p213, %s212, 255
      %s215 = smul.addr %s214, 2
      %s216 = smul.addr %s215, 4
      %s217 = scalar_lea.vmem %s1, %s216
      %s218 = smul.u32 64, %s19
      %p219 = scmp.lt.s32.totalorder %s18, 0
      %s220 = scalar_select %p219, %s18, 0
      %s221 = smul.addr %s220, 2
      %s222 = smul.addr %s221, 8
      %s223 = scalar_lea.vmem %s3, %s222
      %p224 = scmp.eq.s32.totalorder %s19, 0
      // Predicated region
      $region33: #{encoder_forward.7} parent=31 // pred_check
        %p225 = pneg %p224
      $region34: #{encoder_forward.7} parent=31 // pred_check_branch
        %227 = sbr.rel (%p225) target = $region36
      $region35: #{encoder_forward.7} parent=31 // pred_region
        %228 = vst [vmem:[#allocation2] sm:$0xff] 0.0
        %229 = vst [vmem:[#allocation2 + $0x8] sm:$0xff] 0.0
      $region36: #{encoder_forward.7} parent=31 // pred_fallthru
        _
      %v230 = vld [vmem:[#allocation2] sm:$0xff]
      %v231 = vld [vmem:[#allocation2 + $0x8] sm:$0xff]
      %v232 = vld [vmem:[%s210] sm:$0xff]
      %v233 = vld [vmem:[%s210 + $0x8] sm:$0xff]
      %v234 = vld [vmem:[%s217] sm:$0xff]
      %v235 = vld [vmem:[%s217 + $0x8] sm:$0xff]
      %v236 = vld [vmem:[%s217 + $0x10] sm:$0xff]
      %v237 = vld [vmem:[%s217 + $0x18] sm:$0xff]
      %v238 = vld [vmem:[%s217 + $0x20] sm:$0xff]
      %v239 = vld [vmem:[%s217 + $0x28] sm:$0xff]
      %v240 = vld [vmem:[%s217 + $0x30] sm:$0xff]
      %v241 = vld [vmem:[%s217 + $0x38] sm:$0xff]
      %v242 = vld [vmem:[%s217 + $0x40] sm:$0xff]
      %v243 = vld [vmem:[%s217 + $0x48] sm:$0xff]
      %v244 = vld [vmem:[%s217 + $0x50] sm:$0xff]
      %v245 = vld [vmem:[%s217 + $0x58] sm:$0xff]
      %v246 = vld [vmem:[%s217 + $0x60] sm:$0xff]
      %v247 = vld [vmem:[%s217 + $0x68] sm:$0xff]
      %v248 = vld [vmem:[%s217 + $0x70] sm:$0xff]
      %v249 = vld [vmem:[%s217 + $0x78] sm:$0xff]
      %v250 = vld [vmem:[%s217 + $0x80] sm:$0xff]
      %v251 = vld [vmem:[%s217 + $0x88] sm:$0xff]
      %v252 = vld [vmem:[%s217 + $0x90] sm:$0xff]
      %v253 = vld [vmem:[%s217 + $0x98] sm:$0xff]
      %v254 = vld [vmem:[%s217 + $0xa0] sm:$0xff]
      %v255 = vld [vmem:[%s217 + $0xa8] sm:$0xff]
      %v256 = vld [vmem:[%s217 + $0xb0] sm:$0xff]
      %v257 = vld [vmem:[%s217 + $0xb8] sm:$0xff]
      %v258 = vld [vmem:[%s217 + $0xc0] sm:$0xff]
      %v259 = vld [vmem:[%s217 + $0xc8] sm:$0xff]
      %v260 = vld [vmem:[%s217 + $0xd0] sm:$0xff]
      %v261 = vld [vmem:[%s217 + $0xd8] sm:$0xff]
      %v262 = vld [vmem:[%s217 + $0xe0] sm:$0xff]
      %v263 = vld [vmem:[%s217 + $0xe8] sm:$0xff]
      %v264 = vld [vmem:[%s217 + $0xf0] sm:$0xff]
      %v265 = vld [vmem:[%s217 + $0xf8] sm:$0xff]
      %v266 = vld [vmem:[%s217 + $0x100] sm:$0xff]
      %v267 = vld [vmem:[%s217 + $0x108] sm:$0xff]
      %v268 = vld [vmem:[%s217 + $0x110] sm:$0xff]
      %v269 = vld [vmem:[%s217 + $0x118] sm:$0xff]
      %v270 = vld [vmem:[%s217 + $0x120] sm:$0xff]
      %v271 = vld [vmem:[%s217 + $0x128] sm:$0xff]
      %v272 = vld [vmem:[%s217 + $0x130] sm:$0xff]
      %v273 = vld [vmem:[%s217 + $0x138] sm:$0xff]
      %v274 = vld [vmem:[%s217 + $0x140] sm:$0xff]
      %v275 = vld [vmem:[%s217 + $0x148] sm:$0xff]
      %v276 = vld [vmem:[%s217 + $0x150] sm:$0xff]
      %v277 = vld [vmem:[%s217 + $0x158] sm:$0xff]
      %v278 = vld [vmem:[%s217 + $0x160] sm:$0xff]
      %v279 = vld [vmem:[%s217 + $0x168] sm:$0xff]
      %v280 = vld [vmem:[%s217 + $0x170] sm:$0xff]
      %v281 = vld [vmem:[%s217 + $0x178] sm:$0xff]
      %v282 = vld [vmem:[%s217 + $0x180] sm:$0xff]
      %v283 = vld [vmem:[%s217 + $0x188] sm:$0xff]
      %v284 = vld [vmem:[%s217 + $0x190] sm:$0xff]
      %v285 = vld [vmem:[%s217 + $0x198] sm:$0xff]
      %v286 = vld [vmem:[%s217 + $0x1a0] sm:$0xff]
      %v287 = vld [vmem:[%s217 + $0x1a8] sm:$0xff]
      %v288 = vld [vmem:[%s217 + $0x1b0] sm:$0xff]
      %v289 = vld [vmem:[%s217 + $0x1b8] sm:$0xff]
      %v290 = vld [vmem:[%s217 + $0x1c0] sm:$0xff]
      %v291 = vld [vmem:[%s217 + $0x1c8] sm:$0xff]
      %v292 = vld [vmem:[%s217 + $0x1d0] sm:$0xff]
      %v293 = vld [vmem:[%s217 + $0x1d8] sm:$0xff]
      %v294 = vld [vmem:[%s217 + $0x1e0] sm:$0xff]
      %v295 = vld [vmem:[%s217 + $0x1e8] sm:$0xff]
      %v296 = vld [vmem:[%s217 + $0x1f0] sm:$0xff]
      %v297 = vld [vmem:[%s217 + $0x1f8] sm:$0xff]
      %v300 = vunpack.c.l.b16 %v232
      %v301 = vunpack.c.h.b16 %v232
      %v302 = vunpack.c.l.b16 %v233
      %v303 = vunpack.c.h.b16 %v233
      %v304 = vpack.c.b16 %v300, %v300
      %v305 = vpack.c.b16 %v301, %v301
      %v306 = vpack.c.b16 %v302, %v302
      %v307 = vpack.c.b16 %v303, %v303
      %v376 = vunpack.c.l.b16 %v234
      %v377 = vunpack.c.h.b16 %v234
      %v378 = vunpack.c.l.b16 %v235
      %v379 = vunpack.c.h.b16 %v235
      %v380 = vunpack.c.l.b16 %v236
      %v381 = vunpack.c.h.b16 %v236
      %v382 = vunpack.c.l.b16 %v237
      %v383 = vunpack.c.h.b16 %v237
      %v384 = vunpack.c.l.b16 %v238
      %v385 = vunpack.c.h.b16 %v238
      %v386 = vunpack.c.l.b16 %v239
      %v387 = vunpack.c.h.b16 %v239
      %v388 = vunpack.c.l.b16 %v240
      %v389 = vunpack.c.h.b16 %v240
      %v390 = vunpack.c.l.b16 %v241
      %v391 = vunpack.c.h.b16 %v241
      %v392 = vunpack.c.l.b16 %v242
      %v393 = vunpack.c.h.b16 %v242
      %v394 = vunpack.c.l.b16 %v243
      %v395 = vunpack.c.h.b16 %v243
      %v396 = vunpack.c.l.b16 %v244
      %v397 = vunpack.c.h.b16 %v244
      %v398 = vunpack.c.l.b16 %v245
      %v399 = vunpack.c.h.b16 %v245
      %v400 = vunpack.c.l.b16 %v246
      %v401 = vunpack.c.h.b16 %v246
      %v402 = vunpack.c.l.b16 %v247
      %v403 = vunpack.c.h.b16 %v247
      %v404 = vunpack.c.l.b16 %v248
      %v405 = vunpack.c.h.b16 %v248
      %v406 = vunpack.c.l.b16 %v249
      %v407 = vunpack.c.h.b16 %v249
      %v408 = vunpack.c.l.b16 %v250
      %v409 = vunpack.c.h.b16 %v250
      %v410 = vunpack.c.l.b16 %v251
      %v411 = vunpack.c.h.b16 %v251
      %v412 = vunpack.c.l.b16 %v252
      %v413 = vunpack.c.h.b16 %v252
      %v414 = vunpack.c.l.b16 %v253
      %v415 = vunpack.c.h.b16 %v253
      %v416 = vunpack.c.l.b16 %v254
      %v417 = vunpack.c.h.b16 %v254
      %v418 = vunpack.c.l.b16 %v255
      %v419 = vunpack.c.h.b16 %v255
      %v420 = vunpack.c.l.b16 %v256
      %v421 = vunpack.c.h.b16 %v256
      %v422 = vunpack.c.l.b16 %v257
      %v423 = vunpack.c.h.b16 %v257
      %v424 = vunpack.c.l.b16 %v258
      %v425 = vunpack.c.h.b16 %v258
      %v426 = vunpack.c.l.b16 %v259
      %v427 = vunpack.c.h.b16 %v259
      %v428 = vunpack.c.l.b16 %v260
      %v429 = vunpack.c.h.b16 %v260
      %v430 = vunpack.c.l.b16 %v261
      %v431 = vunpack.c.h.b16 %v261
      %v432 = vunpack.c.l.b16 %v262
      %v433 = vunpack.c.h.b16 %v262
      %v434 = vunpack.c.l.b16 %v263
      %v435 = vunpack.c.h.b16 %v263
      %v436 = vunpack.c.l.b16 %v264
      %v437 = vunpack.c.h.b16 %v264
      %v438 = vunpack.c.l.b16 %v265
      %v439 = vunpack.c.h.b16 %v265
      %v440 = vunpack.c.l.b16 %v266
      %v441 = vunpack.c.h.b16 %v266
      %v442 = vunpack.c.l.b16 %v267
      %v443 = vunpack.c.h.b16 %v267
      %v444 = vunpack.c.l.b16 %v268
      %v445 = vunpack.c.h.b16 %v268
      %v446 = vunpack.c.l.b16 %v269
      %v447 = vunpack.c.h.b16 %v269
      %v448 = vunpack.c.l.b16 %v270
      %v449 = vunpack.c.h.b16 %v270
      %v450 = vunpack.c.l.b16 %v271
      %v451 = vunpack.c.h.b16 %v271
      %v452 = vunpack.c.l.b16 %v272
      %v453 = vunpack.c.h.b16 %v272
      %v454 = vunpack.c.l.b16 %v273
      %v455 = vunpack.c.h.b16 %v273
      %v456 = vunpack.c.l.b16 %v274
      %v457 = vunpack.c.h.b16 %v274
      %v458 = vunpack.c.l.b16 %v275
      %v459 = vunpack.c.h.b16 %v275
      %v460 = vunpack.c.l.b16 %v276
      %v461 = vunpack.c.h.b16 %v276
      %v462 = vunpack.c.l.b16 %v277
      %v463 = vunpack.c.h.b16 %v277
      %v464 = vunpack.c.l.b16 %v278
      %v465 = vunpack.c.h.b16 %v278
      %v466 = vunpack.c.l.b16 %v279
      %v467 = vunpack.c.h.b16 %v279
      %v468 = vunpack.c.l.b16 %v280
      %v469 = vunpack.c.h.b16 %v280
      %v470 = vunpack.c.l.b16 %v281
      %v471 = vunpack.c.h.b16 %v281
      %v472 = vunpack.c.l.b16 %v282
      %v473 = vunpack.c.h.b16 %v282
      %v474 = vunpack.c.l.b16 %v283
      %v475 = vunpack.c.h.b16 %v283
      %v476 = vunpack.c.l.b16 %v284
      %v477 = vunpack.c.h.b16 %v284
      %v478 = vunpack.c.l.b16 %v285
      %v479 = vunpack.c.h.b16 %v285
      %v480 = vunpack.c.l.b16 %v286
      %v481 = vunpack.c.h.b16 %v286
      %v482 = vunpack.c.l.b16 %v287
      %v483 = vunpack.c.h.b16 %v287
      %v484 = vunpack.c.l.b16 %v288
      %v485 = vunpack.c.h.b16 %v288
      %v486 = vunpack.c.l.b16 %v289
      %v487 = vunpack.c.h.b16 %v289
      %v488 = vunpack.c.l.b16 %v290
      %v489 = vunpack.c.h.b16 %v290
      %v490 = vunpack.c.l.b16 %v291
      %v491 = vunpack.c.h.b16 %v291
      %v492 = vunpack.c.l.b16 %v292
      %v493 = vunpack.c.h.b16 %v292
      %v494 = vunpack.c.l.b16 %v293
      %v495 = vunpack.c.h.b16 %v293
      %v496 = vunpack.c.l.b16 %v294
      %v497 = vunpack.c.h.b16 %v294
      %v498 = vunpack.c.l.b16 %v295
      %v499 = vunpack.c.h.b16 %v295
      %v500 = vunpack.c.l.b16 %v296
      %v501 = vunpack.c.h.b16 %v296
      %v502 = vunpack.c.l.b16 %v297
      %v503 = vunpack.c.h.b16 %v297
      %v504 = vpack.c.b16 %v378, %v376
      %v505 = vpack.c.b16 %v379, %v377
      %v506 = vpack.c.b16 %v382, %v380
      %v507 = vpack.c.b16 %v383, %v381
      %v508 = vpack.c.b16 %v386, %v384
      %v509 = vpack.c.b16 %v387, %v385
      %v510 = vpack.c.b16 %v390, %v388
      %v511 = vpack.c.b16 %v391, %v389
      %v512 = vpack.c.b16 %v394, %v392
      %v513 = vpack.c.b16 %v395, %v393
      %v514 = vpack.c.b16 %v398, %v396
      %v515 = vpack.c.b16 %v399, %v397
      %v516 = vpack.c.b16 %v402, %v400
      %v517 = vpack.c.b16 %v403, %v401
      %v518 = vpack.c.b16 %v406, %v404
      %v519 = vpack.c.b16 %v407, %v405
      %v520 = vpack.c.b16 %v410, %v408
      %v521 = vpack.c.b16 %v411, %v409
      %v522 = vpack.c.b16 %v414, %v412
      %v523 = vpack.c.b16 %v415, %v413
      %v524 = vpack.c.b16 %v418, %v416
      %v525 = vpack.c.b16 %v419, %v417
      %v526 = vpack.c.b16 %v422, %v420
      %v527 = vpack.c.b16 %v423, %v421
      %v528 = vpack.c.b16 %v426, %v424
      %v529 = vpack.c.b16 %v427, %v425
      %v530 = vpack.c.b16 %v430, %v428
      %v531 = vpack.c.b16 %v431, %v429
      %v532 = vpack.c.b16 %v434, %v432
      %v533 = vpack.c.b16 %v435, %v433
      %v534 = vpack.c.b16 %v438, %v436
      %v535 = vpack.c.b16 %v439, %v437
      %v536 = vpack.c.b16 %v442, %v440
      %v537 = vpack.c.b16 %v443, %v441
      %v538 = vpack.c.b16 %v446, %v444
      %v539 = vpack.c.b16 %v447, %v445
      %v540 = vpack.c.b16 %v450, %v448
      %v541 = vpack.c.b16 %v451, %v449
      %v542 = vpack.c.b16 %v454, %v452
      %v543 = vpack.c.b16 %v455, %v453
      %v544 = vpack.c.b16 %v458, %v456
      %v545 = vpack.c.b16 %v459, %v457
      %v546 = vpack.c.b16 %v462, %v460
      %v547 = vpack.c.b16 %v463, %v461
      %v548 = vpack.c.b16 %v466, %v464
      %v549 = vpack.c.b16 %v467, %v465
      %v550 = vpack.c.b16 %v470, %v468
      %v551 = vpack.c.b16 %v471, %v469
      %v552 = vpack.c.b16 %v474, %v472
      %v553 = vpack.c.b16 %v475, %v473
      %v554 = vpack.c.b16 %v478, %v476
      %v555 = vpack.c.b16 %v479, %v477
      %v556 = vpack.c.b16 %v482, %v480
      %v557 = vpack.c.b16 %v483, %v481
      %v558 = vpack.c.b16 %v486, %v484
      %v559 = vpack.c.b16 %v487, %v485
      %v560 = vpack.c.b16 %v490, %v488
      %v561 = vpack.c.b16 %v491, %v489
      %v562 = vpack.c.b16 %v494, %v492
      %v563 = vpack.c.b16 %v495, %v493
      %v564 = vpack.c.b16 %v498, %v496
      %v565 = vpack.c.b16 %v499, %v497
      %v566 = vpack.c.b16 %v502, %v500
      %v567 = vpack.c.b16 %v503, %v501
      %632 = vmatprep.subr.bf16.mxu0 %v519
      %633 = vmatpush1.bf16.msra.mxu0 %v518
      %634 = vmatprep.subr.bf16.mxu0 %v517
      %635 = vmatpush1.bf16.msra.mxu0 %v516
      %636 = vmatprep.subr.bf16.mxu0 %v515
      %637 = vmatpush1.bf16.msra.mxu0 %v514
      %638 = vmatprep.subr.bf16.mxu0 %v513
      %639 = vmatpush1.bf16.msra.mxu0 %v512
      %640 = vmatprep.subr.bf16.mxu0 %v511
      %641 = vmatpush1.bf16.msra.mxu0 %v510
      %642 = vmatprep.subr.bf16.mxu0 %v509
      %643 = vmatpush1.bf16.msra.mxu0 %v508
      %644 = vmatprep.subr.bf16.mxu0 %v507
      %645 = vmatpush1.bf16.msra.mxu0 %v506
      %646 = vmatprep.subr.bf16.mxu0 %v505
      %647 = vmatpush1.bf16.msra.mxu0 %v504
      %648 = vmatprep.subr.bf16.mxu0 %v535
      %649 = vmatpush2.bf16.msra.mxu0 %v534
      %650 = vmatprep.subr.bf16.mxu0 %v533
      %651 = vmatpush2.bf16.msra.mxu0 %v532
      %652 = vmatprep.subr.bf16.mxu0 %v531
      %653 = vmatpush2.bf16.msra.mxu0 %v530
      %654 = vmatprep.subr.bf16.mxu0 %v529
      %655 = vmatpush2.bf16.msra.mxu0 %v528
      %656 = vmatprep.subr.bf16.mxu0 %v527
      %657 = vmatpush2.bf16.msra.mxu0 %v526
      %658 = vmatprep.subr.bf16.mxu0 %v525
      %659 = vmatpush2.bf16.msra.mxu0 %v524
      %660 = vmatprep.subr.bf16.mxu0 %v523
      %661 = vmatpush2.bf16.msra.mxu0 %v522
      %662 = vmatprep.subr.bf16.mxu0 %v521
      %663 = vmatpush2.bf16.msra.mxu0 %v520
      %664 = vmatprep.mubr.bf16.mxu0 %v305
      %665 = vmatmul.mubr.bf16.gmra.mxu0 %v304
      %v666 = vpop.f32.mrf.mxu0
      %v667 = vadd.f32 0.0, %v666
      %v668 = vpop.f32.mrf.mxu0
      %v669 = vadd.f32 0.0, %v668
      %v670 = vpop.f32.mrf.mxu0
      %v671 = vpop.f32.mrf.mxu0
      %672 = vdwg.mxu0
      %673 = vmatprep.subr.bf16.mxu0 %v551
      %674 = vmatpush1.bf16.msra.mxu0 %v550
      %675 = vmatprep.subr.bf16.mxu0 %v549
      %676 = vmatpush1.bf16.msra.mxu0 %v548
      %677 = vmatprep.subr.bf16.mxu0 %v547
      %678 = vmatpush1.bf16.msra.mxu0 %v546
      %679 = vmatprep.subr.bf16.mxu0 %v545
      %680 = vmatpush1.bf16.msra.mxu0 %v544
      %681 = vmatprep.subr.bf16.mxu0 %v543
      %682 = vmatpush1.bf16.msra.mxu0 %v542
      %683 = vmatprep.subr.bf16.mxu0 %v541
      %684 = vmatpush1.bf16.msra.mxu0 %v540
      %685 = vmatprep.subr.bf16.mxu0 %v539
      %686 = vmatpush1.bf16.msra.mxu0 %v538
      %687 = vmatprep.subr.bf16.mxu0 %v537
      %688 = vmatpush1.bf16.msra.mxu0 %v536
      %689 = vmatprep.subr.bf16.mxu0 %v567
      %690 = vmatpush2.bf16.msra.mxu0 %v566
      %691 = vmatprep.subr.bf16.mxu0 %v565
      %692 = vmatpush2.bf16.msra.mxu0 %v564
      %693 = vmatprep.subr.bf16.mxu0 %v563
      %694 = vmatpush2.bf16.msra.mxu0 %v562
      %695 = vmatprep.subr.bf16.mxu0 %v561
      %696 = vmatpush2.bf16.msra.mxu0 %v560
      %697 = vmatprep.subr.bf16.mxu0 %v559
      %698 = vmatpush2.bf16.msra.mxu0 %v558
      %699 = vmatprep.subr.bf16.mxu0 %v557
      %700 = vmatpush2.bf16.msra.mxu0 %v556
      %701 = vmatprep.subr.bf16.mxu0 %v555
      %702 = vmatpush2.bf16.msra.mxu0 %v554
      %703 = vmatprep.subr.bf16.mxu0 %v553
      %704 = vmatpush2.bf16.msra.mxu0 %v552
      %705 = vmatprep.mubr.bf16.mxu0 %v307
      %706 = vmatmul.mubr.bf16.gmra.mxu0 %v306
      %v707 = vpop.f32.mrf.mxu0
      %v708 = vadd.f32 %v667, %v707
      %v709 = vpop.f32.mrf.mxu0
      %v710 = vadd.f32 %v669, %v709
      %v711 = vpop.f32.mrf.mxu0
      %v712 = vpop.f32.mrf.mxu0
      %713 = vdwg.mxu0
      %v714 = vadd.f32 %v230, %v708
      %v715 = vadd.f32 %v231, %v710
      %716 = vst [vmem:[#allocation2] sm:$0xff] %v714
      %717 = vst [vmem:[#allocation2 + $0x8] sm:$0xff] %v715
      %p718 = scmp.eq.s32.totalorder %s19, 3
      // Predicated region
      $region37: #{encoder_forward.7} parent=31 // pred_check
        %p719 = pneg %p718
      $region38: #{encoder_forward.7} parent=31 // pred_check_branch
        %721 = sbr.rel (%p719) target = $region40
      $region39: #{encoder_forward.7} parent=31 // pred_region
        %v722 = vld [vmem:[#allocation2] sm:$0xff]
        %v723 = vld [vmem:[#allocation2 + $0x8] sm:$0xff]
        %v724 = vld [vmem:[%s2] sm:$0x3]
        %v726 = vlaneseq
        %v727 = vshrl.u32 %v726, 7
        %v728 = vsub.s32 0, %v727
        %v729 = vrot.slane %v724, %v728
        %v730 = vlaneseq
        %v731 = vshrl.u32 %v730, 7
        %v732 = vsub.s32 1, %v731
        %v733 = vrot.slane %v724, %v732
        %v736 = vadd.f32 %v722, %v729
        %v737 = vadd.f32 %v723, %v733
        %v738 = vmax.f32 %v736, 0.0
        %v739 = vmax.f32 %v737, 0.0
        %740 = vst [vmem:[%s223] sm:$0xff] %v738
        %741 = vst [vmem:[%s223 + $0x8] sm:$0xff] %v739
      $region40: #{encoder_forward.7} parent=31 // pred_fallthru
        _
      %p742 = scmp.lt.s32.totalorder %s18, 0
      %s743 = scalar_select %p742, %s18, 0
      %s744 = smul.addr %s743, 2
      %s745 = smul.addr %s744, 8
      %s746 = scalar_lea.vmem %s3, %s745
      // Predicated region
      $region41: #{encoder_forward.7} parent=31 // pred_check
        %p747 = pneg %p119
      $region42: #{encoder_forward.7} parent=31 // pred_check_branch
        %749 = sbr.rel (%p747) target = $region44
      $region43: #{encoder_forward.7} parent=31 // pred_region
        _
      $region44: #{encoder_forward.7} parent=31 // pred_fallthru
        _
      // Predicated region
      $region45: #{encoder_forward.7} parent=31 // pred_check
        %p750 = pneg %p119
      $region46: #{encoder_forward.7} parent=31 // pred_check_branch
        %752 = sbr.rel (%p750) target = $region48
      $region47: #{encoder_forward.7} parent=31 // pred_region
        %p753 = scmp.lt.s32.totalorder %s18, 0
        %s754 = scalar_select %p753, %s18, 0
        %s755 = smul.addr %s754, 2
        %s756 = smul.addr %s755, 8
        %s757 = scalar_lea.vmem %s3, %s756
      $region48: #{encoder_forward.7} parent=31 // pred_fallthru
        _
    $region32: #{encoder_forward.7} parent=5 // pred_fallthru
      _
    %p758 = scmp.le.s32.totalorder 2, %s9
    // Predicated region
    $region49: #{encoder_forward.7} parent=5 // pred_check
      %p759 = pneg %p758
    $region50: #{encoder_forward.7} parent=5 // pred_check_branch
      %761 = sbr.rel (%p759) target = $region52
    $region51: #{encoder_forward.7} parent=5 // pred_region
      %s762 = ssub.s32 %s9, 2
    $region52: #{encoder_forward.7} parent=5 // pred_fallthru
      _
  $region6: #{encoder_forward.7} parent=0 // loop_footer
    %s13 = sadd.s32 1, %s9
  $region7: #{encoder_forward.7} parent=0 // loop_footer_branch
    %8 = sbr.rel target = $region3
  $region8: #{encoder_forward.7} parent=0 // loop_exit
    _

</llo_original>
